<compile_context>
chip_gen: v6e
topology: v6e:2x2x1
jax: 0.10.0
libtpu: 0.0.40
codegen_flags: <defaults>
</compile_context>

<pallas_src>
import numpy as np

import jax
import jax.numpy as jnp
from jax.experimental import pallas as pl
from jax.experimental.pallas import tpu as pltpu


# ----------------------------------------------------------------------------
# In-kernel building blocks (all values stay VMEM / vreg resident)
# ----------------------------------------------------------------------------

def _conv3x3_banded(xp_ref, r_ref, n, h):
    """3x3 'same' conv as 3 row-shifted lane-dense matmuls.

    xp_ref: (N, H+2, Lin) padded, lane-strided input slab.
    r_ref:  (3, Lin, W*Cout) static banded weight matrices (one per dy).
    Returns (N*H, W*Cout) f32, rows in (n, h) order, lanes in (w, cout) order.
    """
    lin = xp_ref.shape[-1]
    acc = None
    for dy in range(3):
        lhs = xp_ref[:, dy:dy + h, :].reshape(n * h, lin)
        part = jnp.dot(lhs, r_ref[dy], preferred_element_type=jnp.float32)
        acc = part if acc is None else acc + part
    return acc


def _bn_relu_dense(a, fold_ref, bcast_ref, g_ref, b_ref, m_count):
    """BatchNorm2d (training-mode batch stats, eps=1e-5) + ReLU, lane-dense.

    a: (rows, W*C); fold: (W*C, C); bcast: (C, W*C); g, b: (1, C).
    """
    inv_m = 1.0 / float(m_count)
    s1 = jnp.sum(a, axis=0, keepdims=True)                    # (1, W*C)
    s2 = jnp.sum(a * a, axis=0, keepdims=True)                # (1, W*C)
    mean = jnp.dot(s1, fold_ref[...], preferred_element_type=jnp.float32) * inv_m
    ex2 = jnp.dot(s2, fold_ref[...], preferred_element_type=jnp.float32) * inv_m
    var = ex2 - mean * mean                                   # biased variance
    scale_c = g_ref[...] * jax.lax.rsqrt(var + 1e-5)          # (1, C)
    shift_c = b_ref[...] - mean * scale_c                     # (1, C)
    scale = jnp.dot(scale_c, bcast_ref[...], preferred_element_type=jnp.float32)
    shift = jnp.dot(shift_c, bcast_ref[...], preferred_element_type=jnp.float32)
    return jnp.maximum(a * scale + shift, 0.0)                # single scale/shift


def _zero_halo(s_ref, c_prev, wc_prev):
    """Zero only the border strips of a strided/padded conv-input scratch."""
    n, hp, lsz = s_ref.shape
    off = 2 * c_prev
    hi = off + wc_prev - c_prev
    s_ref[:, 0:1, :] = jnp.zeros((n, 1, lsz), jnp.float32)
    s_ref[:, hp - 1:hp, :] = jnp.zeros((n, 1, lsz), jnp.float32)
    s_ref[:, :, 0:off] = jnp.zeros((n, hp, off), jnp.float32)
    s_ref[:, :, hi:lsz] = jnp.zeros((n, hp, lsz - hi), jnp.float32)


def _maxpool2_store(y, s_ref, n, h, wc, c):
    """MaxPool2d(2) in lane-dense layout; writes into next stage's scratch.

    y: (N*H, W*C) post-ReLU.  Vertical pair-max via leading reshape, horizontal
    pair-max via a C-lane-shifted slice.  The stride-2 column selection is NOT
    materialised -- the next stage's banded weights read only the even columns.
    """
    hh = h // 2
    pairs = y.reshape(n * hh, 2, wc)
    vmax = jnp.maximum(pairs[:, 0, :], pairs[:, 1, :])        # (N*H/2, W*C)
    hmax = jnp.maximum(vmax[:, :wc - c], vmax[:, c:])         # (N*H/2, (W-1)*C)
    s_ref[:, 1:hh + 1, 2 * c:2 * c + wc - c] = hmax.reshape(n, hh, wc - c)


# ----------------------------------------------------------------------------
# Fused forward kernel
# ----------------------------------------------------------------------------

def _mixednet_kernel(x_ref, r1_ref, r2_ref, r3_ref,
                     f1_ref, t1_ref, f2_ref, t2_ref, f3_ref, t3_ref,
                     g1_ref, b1_ref, g2_ref, b2_ref, g3_ref, b3_ref,
                     fcw_ref, fcb_ref,
                     o_ref,
                     s2_ref, s3_ref):
    n, hp1, _ = x_ref.shape
    h1 = hp1 - 2
    c1 = g1_ref.shape[1]
    wc1 = r1_ref.shape[-1]
    w1 = wc1 // c1
    h2 = s2_ref.shape[1] - 2
    c2 = g2_ref.shape[1]
    wc2 = r2_ref.shape[-1]
    w2 = wc2 // c2
    h3 = s3_ref.shape[1] - 2
    c3 = g3_ref.shape[1]
    wc3 = r3_ref.shape[-1]
    w3 = wc3 // c3

    # --- stage 1: wave1 (3x3-conv stand-in) + BN/ReLU + MaxPool(2) ---
    a1 = _conv3x3_banded(x_ref, r1_ref, n, h1)                # (N*32, 256)
    y1 = _bn_relu_dense(a1, f1_ref, t1_ref, g1_ref, b1_ref, n * h1 * w1)
    _zero_halo(s2_ref, c1, wc1)
    _maxpool2_store(y1, s2_ref, n, h1, wc1, c1)

    # --- stage 2: wave2 + BN/ReLU + MaxPool(2) ---
    a2 = _conv3x3_banded(s2_ref, r2_ref, n, h2)               # (N*16, 256)
    y2 = _bn_relu_dense(a2, f2_ref, t2_ref, g2_ref, b2_ref, n * h2 * w2)
    _zero_halo(s3_ref, c2, wc2)
    _maxpool2_store(y2, s3_ref, n, h2, wc2, c2)

    # --- stage 3: wave3 + BN/ReLU ---
    a3 = _conv3x3_banded(s3_ref, r3_ref, n, h3)               # (N*8, 256)
    y3 = _bn_relu_dense(a3, f3_ref, t3_ref, g3_ref, b3_ref, n * h3 * w3)

    # --- head: AvgPool2d(8) + Linear (128 padded lanes) + log_softmax ---
    y3r = y3.reshape(n, h3, wc3)
    ssum = y3r[:, 0, :]
    for hh in range(1, h3):
        ssum = ssum + y3r[:, hh, :]                           # (N, W3*C3)
    pooled = jnp.dot(ssum, f3_ref[...],
                     preferred_element_type=jnp.float32) * (1.0 / (h3 * w3))
    logits = jnp.dot(pooled, fcw_ref[...],
                     preferred_element_type=jnp.float32) + fcb_ref[...]
    z = logits - jnp.max(logits, axis=-1, keepdims=True)
    lse = jnp.log(jnp.sum(jnp.exp(z), axis=-1, keepdims=True))
    o_ref[...] = (z - lse).astype(o_ref.dtype)                # (N, 128) lane-dense


# ----------------------------------------------------------------------------
# Wrapper-side static matrix construction
# ----------------------------------------------------------------------------

def _full_block(a):
    zeros = (0,) * a.ndim
    return pl.BlockSpec(a.shape, lambda i: zeros)


def _fold_bcast(w_groups, c):
    """fold (W*C, C): sums the W lane-groups per channel; bcast = fold.T."""
    fold = np.zeros((w_groups * c, c), np.float32)
    fold[np.arange(w_groups * c), np.tile(np.arange(c), w_groups)] = 1.0
    return jnp.asarray(fold), jnp.asarray(fold.T)


def _banded_rhs(wconv, lane_stride, lin, w_out):
    """Banded conv weight matrices: R_dy[lane_stride*(w+dx)+ci, w*Cout+co]."""
    _, _, cin, cout = wconv.shape
    wv, dxv, civ, cov = np.meshgrid(np.arange(w_out), np.arange(3),
                                    np.arange(cin), np.arange(cout),
                                    indexing="ij")
    rows = (lane_stride * (wv + dxv) + civ).ravel()
    cols = (wv * cout + cov).ravel()
    assert rows.max() < lin
    mats = []
    for dy in range(3):
        vals = jnp.broadcast_to(wconv[dy][None], (w_out, 3, cin, cout))
        vals = vals.astype(jnp.float32).reshape(-1)
        mats.append(jnp.zeros((lin, w_out * cout), jnp.float32)
                    .at[rows, cols].add(vals))
    return jnp.stack(mats)                                    # (3, lin, W*Cout)


def mixed_net_forward(x_nchw, params):
    x = jnp.transpose(x_nchw, (0, 2, 3, 1)).astype(jnp.float32)   # NCHW -> NHWC
    n, h1, w1, cin = x.shape
    assert h1 % 4 == 0 and w1 % 4 == 0, "two 2x2 max-pools require H, W % 4 == 0"
    c1 = params["w1"].shape[-1]
    c2 = params["w2"].shape[-1]
    c3 = params["w3"].shape[-1]
    num_classes = params["fc_w"].shape[0]
    h2, w2 = h1 // 2, w1 // 2
    h3, w3 = h2 // 2, w2 // 2
    assert h3 == 8 and w3 == 8, "AvgPool2d(8) expects an 8x8 map (32x32 input)"

    # Lane-dense, pre-padded stage-1 input slab: (N, H+2, 128).
    lin1 = pl.cdiv((w1 + 2) * cin, 128) * 128
    xpad = jnp.pad(x, ((0, 0), (1, 1), (1, 1), (0, 0)))
    xin = xpad.reshape(n, h1 + 2, (w1 + 2) * cin)
    xin = jnp.pad(xin, ((0, 0), (0, 0), (0, lin1 - (w1 + 2) * cin)))

    # Strided/padded scratch lane widths for stages 2 and 3 (pool stride folded
    # into the lane map: pooled column j lives at lane 2*C_prev*(j+1)).
    lsz2 = c1 * (2 * w2 + 3)
    lsz3 = c2 * (2 * w3 + 3)

    r1 = _banded_rhs(params["w1"], cin, lin1, w1)
    r2 = _banded_rhs(params["w2"], 2 * c1, lsz2, w2)
    r3 = _banded_rhs(params["w3"], 2 * c2, lsz3, w3)

    f1, t1 = _fold_bcast(w1, c1)
    f2, t2 = _fold_bcast(w2, c2)
    f3, t3 = _fold_bcast(w3, c3)

    # Lane-dense classifier: pad to 128 output lanes; padded columns carry a
    # bias of -1e30 so they contribute exp(.) == 0 to the softmax denominator.
    lanes = 128
    assert num_classes <= lanes
    fcw = jnp.zeros((c3, lanes), jnp.float32).at[:, :num_classes].set(
        params["fc_w"].T.astype(jnp.float32))
    fcb = jnp.full((1, lanes), -1e30, jnp.float32).at[0, :num_classes].set(
        params["fc_b"].astype(jnp.float32))

    args = (
        xin, r1, r2, r3,
        f1, t1, f2, t2, f3, t3,
        params["g1"].reshape(1, c1), params["b1"].reshape(1, c1),
        params["g2"].reshape(1, c2), params["b2"].reshape(1, c2),
        params["g3"].reshape(1, c3), params["b3"].reshape(1, c3),
        fcw, fcb,
    )

    flops = 2 * 3 * (n * h1 * lin1 * w1 * c1
                     + n * h2 * lsz2 * w2 * c2
                     + n * h3 * lsz3 * w3 * c3) + 2 * n * c3 * lanes
    transcendentals = n * (lanes + 1) + c1 + c2 + c3
    bytes_accessed = 4 * (sum(int(a.size) for a in args) + n * lanes)

    out = pl.pallas_call(
        _mixednet_kernel,
        out_shape=jax.ShapeDtypeStruct((n, lanes), jnp.float32),
        grid=(1,),
        in_specs=[_full_block(a) for a in args],
        out_specs=pl.BlockSpec((n, lanes), lambda i: (0, 0)),
        scratch_shapes=[
            pltpu.VMEM((n, h2 + 2, lsz2), jnp.float32),   # stage-2 conv input
            pltpu.VMEM((n, h3 + 2, lsz3), jnp.float32),   # stage-3 conv input
        ],
        compiler_params=pltpu.CompilerParams(
            dimension_semantics=("arbitrary",),
            vmem_limit_bytes=32 * 1024 * 1024,
        ),
        cost_estimate=pl.CostEstimate(
            flops=flops,
            transcendentals=transcendentals,
            bytes_accessed=bytes_accessed,
        ),
    )(*args)
    return out[:, :num_classes]


# ----------------------------------------------------------------------------
# Params + main
# ----------------------------------------------------------------------------

def init_params(key, c_in=3, num_channels=8, num_classes=10):
    C = num_channels
    ks = jax.random.split(key, 5)
    return {
        "w1": 0.1 * jax.random.normal(ks[0], (3, 3, c_in, C), jnp.float32),
        "w2": 0.1 * jax.random.normal(ks[1], (3, 3, C, 2 * C), jnp.float32),
        "w3": 0.1 * jax.random.normal(ks[2], (3, 3, 2 * C, 4 * C), jnp.float32),
        "g1": jnp.ones((C,), jnp.float32), "b1": jnp.zeros((C,), jnp.float32),
        "g2": jnp.ones((2 * C,), jnp.float32), "b2": jnp.zeros((2 * C,), jnp.float32),
        "g3": jnp.ones((4 * C,), jnp.float32), "b3": jnp.zeros((4 * C,), jnp.float32),
        "fc_w": 0.1 * jax.random.normal(ks[3], (num_classes, 4 * C), jnp.float32),
        "fc_b": 0.01 * jax.random.normal(ks[4], (num_classes,), jnp.float32),
    }


if __name__ == "__main__":
    key = jax.random.PRNGKey(0)
    k_x, k_p = jax.random.split(key)

    # cifar10-shaped input: N=2, C_in=3, 32x32 (so AvgPool2d(8) sees 8x8).
    x = jax.random.normal(k_x, (2, 3, 32, 32), jnp.float32)
    params = init_params(k_p, c_in=3, num_channels=8, num_classes=10)

    fwd = jax.jit(mixed_net_forward)
    out = jax.block_until_ready(fwd(x, params))

    assert out.shape == (2, 10), out.shape
    assert bool(jnp.all(jnp.isfinite(out)))
    # log_softmax rows should exponentiate to ~1
    assert bool(jnp.allclose(jnp.sum(jnp.exp(out), axis=-1), 1.0, atol=1e-4))
    print("KERNEL_OK")
</pallas_src>

<mosaic_0001>
module attributes {stable_mosaic.version = 11 : i64} {
  func.func private @main(%arg0: i32) attributes {dimension_semantics = [#tpu.dimension_semantics<core_parallel>], iteration_bounds = array<i64: 2>, tpu.core_type = #tpu.core_type<sc_scalar_subcore>, window_params = []} {
    return
  }
}

module attributes {stable_mosaic.version = 11 : i64} {
  func.func private @main(%arg0: i32) attributes {dimension_semantics = [#tpu.dimension_semantics<core_parallel>], iteration_bounds = array<i64: 2>, tpu.core_type = #tpu.core_type<sc_scalar_subcore>, window_params = []} {
    return
  }
}

module attributes {stable_mosaic.version = 11 : i64} {
  func.func @_mixednet_kernel(%arg0: i32, %arg1: memref<2x34x128xf32, #tpu.memory_space<vmem>>, %arg2: memref<3x128x256xf32, #tpu.memory_space<vmem>>, %arg3: memref<3x280x256xf32, #tpu.memory_space<vmem>>, %arg4: memref<3x304x256xf32, #tpu.memory_space<vmem>>, %arg5: memref<256x8xf32, #tpu.memory_space<vmem>>, %arg6: memref<8x256xf32, #tpu.memory_space<vmem>>, %arg7: memref<256x16xf32, #tpu.memory_space<vmem>>, %arg8: memref<16x256xf32, #tpu.memory_space<vmem>>, %arg9: memref<256x32xf32, #tpu.memory_space<vmem>>, %arg10: memref<32x256xf32, #tpu.memory_space<vmem>>, %arg11: memref<1x8xf32, #tpu.memory_space<vmem>>, %arg12: memref<1x8xf32, #tpu.memory_space<vmem>>, %arg13: memref<1x16xf32, #tpu.memory_space<vmem>>, %arg14: memref<1x16xf32, #tpu.memory_space<vmem>>, %arg15: memref<1x32xf32, #tpu.memory_space<vmem>>, %arg16: memref<1x32xf32, #tpu.memory_space<vmem>>, %arg17: memref<32x128xf32, #tpu.memory_space<vmem>>, %arg18: memref<1x128xf32, #tpu.memory_space<vmem>>, %arg19: memref<2x128xf32, #tpu.memory_space<vmem>>, %arg20: memref<2x18x280xf32, #tpu.memory_space<vmem>>, %arg21: memref<2x10x304xf32, #tpu.memory_space<vmem>>) attributes {dimension_semantics = [#tpu.dimension_semantics<arbitrary>], iteration_bounds = array<i64: 1>, scalar_prefetch = 0 : i64, scratch_operands = 2 : i64, tpu.core_type = #tpu.core_type<tc>, window_params = [{pipeline_mode = #tpu.pipeline_mode<synchronous>, transform_indices = @transform_0, window_bounds = array<i64: 2, 34, 128>}, {pipeline_mode = #tpu.pipeline_mode<synchronous>, transform_indices = @transform_1, window_bounds = array<i64: 3, 128, 256>}, {pipeline_mode = #tpu.pipeline_mode<synchronous>, transform_indices = @transform_2, window_bounds = array<i64: 3, 280, 256>}, {pipeline_mode = #tpu.pipeline_mode<synchronous>, transform_indices = @transform_3, window_bounds = array<i64: 3, 304, 256>}, {pipeline_mode = #tpu.pipeline_mode<synchronous>, transform_indices = @transform_4, window_bounds = array<i64: 256, 8>}, {pipeline_mode = #tpu.pipeline_mode<synchronous>, transform_indices = @transform_5, window_bounds = array<i64: 8, 256>}, {pipeline_mode = #tpu.pipeline_mode<synchronous>, transform_indices = @transform_6, window_bounds = array<i64: 256, 16>}, {pipeline_mode = #tpu.pipeline_mode<synchronous>, transform_indices = @transform_7, window_bounds = array<i64: 16, 256>}, {pipeline_mode = #tpu.pipeline_mode<synchronous>, transform_indices = @transform_8, window_bounds = array<i64: 256, 32>}, {pipeline_mode = #tpu.pipeline_mode<synchronous>, transform_indices = @transform_9, window_bounds = array<i64: 32, 256>}, {pipeline_mode = #tpu.pipeline_mode<synchronous>, transform_indices = @transform_10, window_bounds = array<i64: 1, 8>}, {pipeline_mode = #tpu.pipeline_mode<synchronous>, transform_indices = @transform_11, window_bounds = array<i64: 1, 8>}, {pipeline_mode = #tpu.pipeline_mode<synchronous>, transform_indices = @transform_12, window_bounds = array<i64: 1, 16>}, {pipeline_mode = #tpu.pipeline_mode<synchronous>, transform_indices = @transform_13, window_bounds = array<i64: 1, 16>}, {pipeline_mode = #tpu.pipeline_mode<synchronous>, transform_indices = @transform_14, window_bounds = array<i64: 1, 32>}, {pipeline_mode = #tpu.pipeline_mode<synchronous>, transform_indices = @transform_15, window_bounds = array<i64: 1, 32>}, {pipeline_mode = #tpu.pipeline_mode<synchronous>, transform_indices = @transform_16, window_bounds = array<i64: 32, 128>}, {pipeline_mode = #tpu.pipeline_mode<synchronous>, transform_indices = @transform_17, window_bounds = array<i64: 1, 128>}, {pipeline_mode = #tpu.pipeline_mode<synchronous>, transform_indices = @transform_18, window_bounds = array<i64: 2, 128>}]} {
    %c0 = arith.constant 0 : index
    %c0_0 = arith.constant 0 : index
    %c0_1 = arith.constant 0 : index
    %0 = vector.load %arg1[%c0, %c0_0, %c0_1] : memref<2x34x128xf32, #tpu.memory_space<vmem>>, vector<2x32x128xf32>
    %1 = vector.shape_cast %0 : vector<2x32x128xf32> to vector<64x128xf32>
    %c0_2 = arith.constant 0 : index
    %c0_3 = arith.constant 0 : index
    %c0_4 = arith.constant 0 : index
    %2 = vector.load %arg2[%c0_2, %c0_3, %c0_4] : memref<3x128x256xf32, #tpu.memory_space<vmem>>, vector<1x128x256xf32>
    %3 = vector.shape_cast %2 : vector<1x128x256xf32> to vector<128x256xf32>
    %cst = arith.constant dense<0.000000e+00> : vector<64x256xf32>
    %4 = tpu.matmul %1, %3, %cst {dimension_numbers = #tpu.dot_dimension_numbers<[1], [0], [0], [1], [0, 0, 1, 1], [], []>} : vector<64x128xf32>, vector<128x256xf32>, vector<64x256xf32> -> vector<64x256xf32>
    %c0_5 = arith.constant 0 : index
    %c1 = arith.constant 1 : index
    %c0_6 = arith.constant 0 : index
    %5 = vector.load %arg1[%c0_5, %c1, %c0_6] : memref<2x34x128xf32, #tpu.memory_space<vmem>>, vector<2x32x128xf32>
    %6 = vector.shape_cast %5 : vector<2x32x128xf32> to vector<64x128xf32>
    %c1_7 = arith.constant 1 : index
    %c0_8 = arith.constant 0 : index
    %c0_9 = arith.constant 0 : index
    %7 = vector.load %arg2[%c1_7, %c0_8, %c0_9] : memref<3x128x256xf32, #tpu.memory_space<vmem>>, vector<1x128x256xf32>
    %8 = vector.shape_cast %7 : vector<1x128x256xf32> to vector<128x256xf32>
    %cst_10 = arith.constant dense<0.000000e+00> : vector<64x256xf32>
    %9 = tpu.matmul %6, %8, %cst_10 {dimension_numbers = #tpu.dot_dimension_numbers<[1], [0], [0], [1], [0, 0, 1, 1], [], []>} : vector<64x128xf32>, vector<128x256xf32>, vector<64x256xf32> -> vector<64x256xf32>
    %10 = arith.addf %4, %9 : vector<64x256xf32>
    %c0_11 = arith.constant 0 : index
    %c2 = arith.constant 2 : index
    %c0_12 = arith.constant 0 : index
    %11 = vector.load %arg1[%c0_11, %c2, %c0_12] : memref<2x34x128xf32, #tpu.memory_space<vmem>>, vector<2x32x128xf32>
    %12 = vector.shape_cast %11 : vector<2x32x128xf32> to vector<64x128xf32>
    %c2_13 = arith.constant 2 : index
    %c0_14 = arith.constant 0 : index
    %c0_15 = arith.constant 0 : index
    %13 = vector.load %arg2[%c2_13, %c0_14, %c0_15] : memref<3x128x256xf32, #tpu.memory_space<vmem>>, vector<1x128x256xf32>
    %14 = vector.shape_cast %13 : vector<1x128x256xf32> to vector<128x256xf32>
    %cst_16 = arith.constant dense<0.000000e+00> : vector<64x256xf32>
    %15 = tpu.matmul %12, %14, %cst_16 {dimension_numbers = #tpu.dot_dimension_numbers<[1], [0], [0], [1], [0, 0, 1, 1], [], []>} : vector<64x128xf32>, vector<128x256xf32>, vector<64x256xf32> -> vector<64x256xf32>
    %16 = arith.addf %10, %15 : vector<64x256xf32>
    %cst_17 = arith.constant dense<0.000000e+00> : vector<256xf32>
    %17 = vector.multi_reduction <add>, %16, %cst_17 [0] : vector<64x256xf32> to vector<256xf32>
    %18 = vector.shape_cast %17 : vector<256xf32> to vector<1x256xf32>
    %19 = arith.mulf %16, %16 : vector<64x256xf32>
    %cst_18 = arith.constant dense<0.000000e+00> : vector<256xf32>
    %20 = vector.multi_reduction <add>, %19, %cst_18 [0] : vector<64x256xf32> to vector<256xf32>
    %21 = vector.shape_cast %20 : vector<256xf32> to vector<1x256xf32>
    %c0_19 = arith.constant 0 : index
    %c0_20 = arith.constant 0 : index
    %22 = vector.load %arg5[%c0_19, %c0_20] : memref<256x8xf32, #tpu.memory_space<vmem>>, vector<256x8xf32>
    %cst_21 = arith.constant dense<0.000000e+00> : vector<1x8xf32>
    %23 = tpu.matmul %18, %22, %cst_21 {dimension_numbers = #tpu.dot_dimension_numbers<[1], [0], [0], [1], [0, 0, 1, 1], [], []>} : vector<1x256xf32>, vector<256x8xf32>, vector<1x8xf32> -> vector<1x8xf32>
    %cst_22 = arith.constant 4.8828125E-4 : f32
    %24 = vector.broadcast %cst_22 : f32 to vector<1x8xf32>
    %25 = arith.mulf %23, %24 : vector<1x8xf32>
    %c0_23 = arith.constant 0 : index
    %c0_24 = arith.constant 0 : index
    %26 = vector.load %arg5[%c0_23, %c0_24] : memref<256x8xf32, #tpu.memory_space<vmem>>, vector<256x8xf32>
    %cst_25 = arith.constant dense<0.000000e+00> : vector<1x8xf32>
    %27 = tpu.matmul %21, %26, %cst_25 {dimension_numbers = #tpu.dot_dimension_numbers<[1], [0], [0], [1], [0, 0, 1, 1], [], []>} : vector<1x256xf32>, vector<256x8xf32>, vector<1x8xf32> -> vector<1x8xf32>
    %cst_26 = arith.constant 4.8828125E-4 : f32
    %28 = vector.broadcast %cst_26 : f32 to vector<1x8xf32>
    %29 = arith.mulf %27, %28 : vector<1x8xf32>
    %30 = arith.mulf %25, %25 : vector<1x8xf32>
    %31 = arith.subf %29, %30 : vector<1x8xf32>
    %c0_27 = arith.constant 0 : index
    %c0_28 = arith.constant 0 : index
    %32 = vector.load %arg11[%c0_27, %c0_28] : memref<1x8xf32, #tpu.memory_space<vmem>>, vector<1x8xf32>
    %cst_29 = arith.constant 9.99999974E-6 : f32
    %33 = vector.broadcast %cst_29 : f32 to vector<1x8xf32>
    %34 = arith.addf %31, %33 : vector<1x8xf32>
    %35 = math.rsqrt %34 : vector<1x8xf32>
    %36 = arith.mulf %32, %35 : vector<1x8xf32>
    %c0_30 = arith.constant 0 : index
    %c0_31 = arith.constant 0 : index
    %37 = vector.load %arg12[%c0_30, %c0_31] : memref<1x8xf32, #tpu.memory_space<vmem>>, vector<1x8xf32>
    %38 = arith.mulf %25, %36 : vector<1x8xf32>
    %39 = arith.subf %37, %38 : vector<1x8xf32>
    %c0_32 = arith.constant 0 : index
    %c0_33 = arith.constant 0 : index
    %40 = vector.load %arg6[%c0_32, %c0_33] : memref<8x256xf32, #tpu.memory_space<vmem>>, vector<8x256xf32>
    %cst_34 = arith.constant dense<0.000000e+00> : vector<1x256xf32>
    %41 = tpu.matmul %36, %40, %cst_34 {dimension_numbers = #tpu.dot_dimension_numbers<[1], [0], [0], [1], [0, 0, 1, 1], [], []>} : vector<1x8xf32>, vector<8x256xf32>, vector<1x256xf32> -> vector<1x256xf32>
    %c0_35 = arith.constant 0 : index
    %c0_36 = arith.constant 0 : index
    %42 = vector.load %arg6[%c0_35, %c0_36] : memref<8x256xf32, #tpu.memory_space<vmem>>, vector<8x256xf32>
    %cst_37 = arith.constant dense<0.000000e+00> : vector<1x256xf32>
    %43 = tpu.matmul %39, %42, %cst_37 {dimension_numbers = #tpu.dot_dimension_numbers<[1], [0], [0], [1], [0, 0, 1, 1], [], []>} : vector<1x8xf32>, vector<8x256xf32>, vector<1x256xf32> -> vector<1x256xf32>
    %44 = vector.broadcast %41 : vector<1x256xf32> to vector<64x256xf32>
    %45 = arith.mulf %16, %44 : vector<64x256xf32>
    %46 = vector.broadcast %43 : vector<1x256xf32> to vector<64x256xf32>
    %47 = arith.addf %45, %46 : vector<64x256xf32>
    %cst_38 = arith.constant 0.000000e+00 : f32
    %48 = vector.broadcast %cst_38 : f32 to vector<64x256xf32>
    %49 = arith.maximumf %47, %48 : vector<64x256xf32>
    %cst_39 = arith.constant 0.000000e+00 : f32
    %50 = vector.broadcast %cst_39 : f32 to vector<2x1x280xf32>
    %c0_40 = arith.constant 0 : index
    %c0_41 = arith.constant 0 : index
    %c0_42 = arith.constant 0 : index
    %51 = vector.load %arg20[%c0_40, %c0_41, %c0_42] : memref<2x18x280xf32, #tpu.memory_space<vmem>>, vector<2x1x280xf32>
    tpu.vector_store %arg20[%c0_40, %c0_41, %c0_42], %50 {strides = array<i32>} : memref<2x18x280xf32, #tpu.memory_space<vmem>>, vector<2x1x280xf32>,
    %cst_43 = arith.constant 0.000000e+00 : f32
    %52 = vector.broadcast %cst_43 : f32 to vector<2x1x280xf32>
    %c0_44 = arith.constant 0 : index
    %c17 = arith.constant 17 : index
    %c0_45 = arith.constant 0 : index
    %53 = vector.load %arg20[%c0_44, %c17, %c0_45] : memref<2x18x280xf32, #tpu.memory_space<vmem>>, vector<2x1x280xf32>
    tpu.vector_store %arg20[%c0_44, %c17, %c0_45], %52 {strides = array<i32>} : memref<2x18x280xf32, #tpu.memory_space<vmem>>, vector<2x1x280xf32>,
    %cst_46 = arith.constant 0.000000e+00 : f32
    %54 = vector.broadcast %cst_46 : f32 to vector<2x18x16xf32>
    %c0_47 = arith.constant 0 : index
    %c0_48 = arith.constant 0 : index
    %c0_49 = arith.constant 0 : index
    %55 = vector.load %arg20[%c0_47, %c0_48, %c0_49] : memref<2x18x280xf32, #tpu.memory_space<vmem>>, vector<2x18x16xf32>
    tpu.vector_store %arg20[%c0_47, %c0_48, %c0_49], %54 {strides = array<i32>} : memref<2x18x280xf32, #tpu.memory_space<vmem>>, vector<2x18x16xf32>,
    %cst_50 = arith.constant 0.000000e+00 : f32
    %56 = vector.broadcast %cst_50 : f32 to vector<2x18x16xf32>
    %c0_51 = arith.constant 0 : index
    %c0_52 = arith.constant 0 : index
    %c264 = arith.constant 264 : index
    %57 = vector.load %arg20[%c0_51, %c0_52, %c264] : memref<2x18x280xf32, #tpu.memory_space<vmem>>, vector<2x18x16xf32>
    tpu.vector_store %arg20[%c0_51, %c0_52, %c264], %56 {strides = array<i32>} : memref<2x18x280xf32, #tpu.memory_space<vmem>>, vector<2x18x16xf32>,
    %58 = vector.shape_cast %49 : vector<64x256xf32> to vector<32x2x256xf32>
    %59 = vector.extract_strided_slice %58 {offsets = [0, 0, 0], sizes = [32, 1, 256], strides = [1, 1, 1]} : vector<32x2x256xf32> to vector<32x1x256xf32>
    %60 = vector.shape_cast %59 : vector<32x1x256xf32> to vector<32x256xf32>
    %61 = vector.extract_strided_slice %58 {offsets = [0, 1, 0], sizes = [32, 1, 256], strides = [1, 1, 1]} : vector<32x2x256xf32> to vector<32x1x256xf32>
    %62 = vector.shape_cast %61 : vector<32x1x256xf32> to vector<32x256xf32>
    %63 = arith.maximumf %60, %62 : vector<32x256xf32>
    %64 = vector.extract_strided_slice %63 {offsets = [0, 0], sizes = [32, 248], strides = [1, 1]} : vector<32x256xf32> to vector<32x248xf32>
    %65 = vector.extract_strided_slice %63 {offsets = [0, 8], sizes = [32, 248], strides = [1, 1]} : vector<32x256xf32> to vector<32x248xf32>
    %66 = arith.maximumf %64, %65 : vector<32x248xf32>
    %67 = vector.shape_cast %66 : vector<32x248xf32> to vector<2x16x248xf32>
    %c0_53 = arith.constant 0 : index
    %c1_54 = arith.constant 1 : index
    %c16 = arith.constant 16 : index
    %68 = vector.load %arg20[%c0_53, %c1_54, %c16] : memref<2x18x280xf32, #tpu.memory_space<vmem>>, vector<2x16x248xf32>
    tpu.vector_store %arg20[%c0_53, %c1_54, %c16], %67 {strides = array<i32>} : memref<2x18x280xf32, #tpu.memory_space<vmem>>, vector<2x16x248xf32>,
    %c0_55 = arith.constant 0 : index
    %c0_56 = arith.constant 0 : index
    %c0_57 = arith.constant 0 : index
    %69 = vector.load %arg20[%c0_55, %c0_56, %c0_57] : memref<2x18x280xf32, #tpu.memory_space<vmem>>, vector<2x16x280xf32>
    %70 = vector.shape_cast %69 : vector<2x16x280xf32> to vector<32x280xf32>
    %c0_58 = arith.constant 0 : index
    %c0_59 = arith.constant 0 : index
    %c0_60 = arith.constant 0 : index
    %71 = vector.load %arg3[%c0_58, %c0_59, %c0_60] : memref<3x280x256xf32, #tpu.memory_space<vmem>>, vector<1x280x256xf32>
    %72 = vector.shape_cast %71 : vector<1x280x256xf32> to vector<280x256xf32>
    %cst_61 = arith.constant dense<0.000000e+00> : vector<32x256xf32>
    %73 = tpu.matmul %70, %72, %cst_61 {dimension_numbers = #tpu.dot_dimension_numbers<[1], [0], [0], [1], [0, 0, 1, 1], [], []>} : vector<32x280xf32>, vector<280x256xf32>, vector<32x256xf32> -> vector<32x256xf32>
    %c0_62 = arith.constant 0 : index
    %c1_63 = arith.constant 1 : index
    %c0_64 = arith.constant 0 : index
    %74 = vector.load %arg20[%c0_62, %c1_63, %c0_64] : memref<2x18x280xf32, #tpu.memory_space<vmem>>, vector<2x16x280xf32>
    %75 = vector.shape_cast %74 : vector<2x16x280xf32> to vector<32x280xf32>
    %c1_65 = arith.constant 1 : index
    %c0_66 = arith.constant 0 : index
    %c0_67 = arith.constant 0 : index
    %76 = vector.load %arg3[%c1_65, %c0_66, %c0_67] : memref<3x280x256xf32, #tpu.memory_space<vmem>>, vector<1x280x256xf32>
    %77 = vector.shape_cast %76 : vector<1x280x256xf32> to vector<280x256xf32>
    %cst_68 = arith.constant dense<0.000000e+00> : vector<32x256xf32>
    %78 = tpu.matmul %75, %77, %cst_68 {dimension_numbers = #tpu.dot_dimension_numbers<[1], [0], [0], [1], [0, 0, 1, 1], [], []>} : vector<32x280xf32>, vector<280x256xf32>, vector<32x256xf32> -> vector<32x256xf32>
    %79 = arith.addf %73, %78 : vector<32x256xf32>
    %c0_69 = arith.constant 0 : index
    %c2_70 = arith.constant 2 : index
    %c0_71 = arith.constant 0 : index
    %80 = vector.load %arg20[%c0_69, %c2_70, %c0_71] : memref<2x18x280xf32, #tpu.memory_space<vmem>>, vector<2x16x280xf32>
    %81 = vector.shape_cast %80 : vector<2x16x280xf32> to vector<32x280xf32>
    %c2_72 = arith.constant 2 : index
    %c0_73 = arith.constant 0 : index
    %c0_74 = arith.constant 0 : index
    %82 = vector.load %arg3[%c2_72, %c0_73, %c0_74] : memref<3x280x256xf32, #tpu.memory_space<vmem>>, vector<1x280x256xf32>
    %83 = vector.shape_cast %82 : vector<1x280x256xf32> to vector<280x256xf32>
    %cst_75 = arith.constant dense<0.000000e+00> : vector<32x256xf32>
    %84 = tpu.matmul %81, %83, %cst_75 {dimension_numbers = #tpu.dot_dimension_numbers<[1], [0], [0], [1], [0, 0, 1, 1], [], []>} : vector<32x280xf32>, vector<280x256xf32>, vector<32x256xf32> -> vector<32x256xf32>
    %85 = arith.addf %79, %84 : vector<32x256xf32>
    %cst_76 = arith.constant dense<0.000000e+00> : vector<256xf32>
    %86 = vector.multi_reduction <add>, %85, %cst_76 [0] : vector<32x256xf32> to vector<256xf32>
    %87 = vector.shape_cast %86 : vector<256xf32> to vector<1x256xf32>
    %88 = arith.mulf %85, %85 : vector<32x256xf32>
    %cst_77 = arith.constant dense<0.000000e+00> : vector<256xf32>
    %89 = vector.multi_reduction <add>, %88, %cst_77 [0] : vector<32x256xf32> to vector<256xf32>
    %90 = vector.shape_cast %89 : vector<256xf32> to vector<1x256xf32>
    %c0_78 = arith.constant 0 : index
    %c0_79 = arith.constant 0 : index
    %91 = vector.load %arg7[%c0_78, %c0_79] : memref<256x16xf32, #tpu.memory_space<vmem>>, vector<256x16xf32>
    %cst_80 = arith.constant dense<0.000000e+00> : vector<1x16xf32>
    %92 = tpu.matmul %87, %91, %cst_80 {dimension_numbers = #tpu.dot_dimension_numbers<[1], [0], [0], [1], [0, 0, 1, 1], [], []>} : vector<1x256xf32>, vector<256x16xf32>, vector<1x16xf32> -> vector<1x16xf32>
    %cst_81 = arith.constant 0.001953125 : f32
    %93 = vector.broadcast %cst_81 : f32 to vector<1x16xf32>
    %94 = arith.mulf %92, %93 : vector<1x16xf32>
    %c0_82 = arith.constant 0 : index
    %c0_83 = arith.constant 0 : index
    %95 = vector.load %arg7[%c0_82, %c0_83] : memref<256x16xf32, #tpu.memory_space<vmem>>, vector<256x16xf32>
    %cst_84 = arith.constant dense<0.000000e+00> : vector<1x16xf32>
    %96 = tpu.matmul %90, %95, %cst_84 {dimension_numbers = #tpu.dot_dimension_numbers<[1], [0], [0], [1], [0, 0, 1, 1], [], []>} : vector<1x256xf32>, vector<256x16xf32>, vector<1x16xf32> -> vector<1x16xf32>
    %cst_85 = arith.constant 0.001953125 : f32
    %97 = vector.broadcast %cst_85 : f32 to vector<1x16xf32>
    %98 = arith.mulf %96, %97 : vector<1x16xf32>
    %99 = arith.mulf %94, %94 : vector<1x16xf32>
    %100 = arith.subf %98, %99 : vector<1x16xf32>
    %c0_86 = arith.constant 0 : index
    %c0_87 = arith.constant 0 : index
    %101 = vector.load %arg13[%c0_86, %c0_87] : memref<1x16xf32, #tpu.memory_space<vmem>>, vector<1x16xf32>
    %cst_88 = arith.constant 9.99999974E-6 : f32
    %102 = vector.broadcast %cst_88 : f32 to vector<1x16xf32>
    %103 = arith.addf %100, %102 : vector<1x16xf32>
    %104 = math.rsqrt %103 : vector<1x16xf32>
    %105 = arith.mulf %101, %104 : vector<1x16xf32>
    %c0_89 = arith.constant 0 : index
    %c0_90 = arith.constant 0 : index
    %106 = vector.load %arg14[%c0_89, %c0_90] : memref<1x16xf32, #tpu.memory_space<vmem>>, vector<1x16xf32>
    %107 = arith.mulf %94, %105 : vector<1x16xf32>
    %108 = arith.subf %106, %107 : vector<1x16xf32>
    %c0_91 = arith.constant 0 : index
    %c0_92 = arith.constant 0 : index
    %109 = vector.load %arg8[%c0_91, %c0_92] : memref<16x256xf32, #tpu.memory_space<vmem>>, vector<16x256xf32>
    %cst_93 = arith.constant dense<0.000000e+00> : vector<1x256xf32>
    %110 = tpu.matmul %105, %109, %cst_93 {dimension_numbers = #tpu.dot_dimension_numbers<[1], [0], [0], [1], [0, 0, 1, 1], [], []>} : vector<1x16xf32>, vector<16x256xf32>, vector<1x256xf32> -> vector<1x256xf32>
    %c0_94 = arith.constant 0 : index
    %c0_95 = arith.constant 0 : index
    %111 = vector.load %arg8[%c0_94, %c0_95] : memref<16x256xf32, #tpu.memory_space<vmem>>, vector<16x256xf32>
    %cst_96 = arith.constant dense<0.000000e+00> : vector<1x256xf32>
    %112 = tpu.matmul %108, %111, %cst_96 {dimension_numbers = #tpu.dot_dimension_numbers<[1], [0], [0], [1], [0, 0, 1, 1], [], []>} : vector<1x16xf32>, vector<16x256xf32>, vector<1x256xf32> -> vector<1x256xf32>
    %113 = vector.broadcast %110 : vector<1x256xf32> to vector<32x256xf32>
    %114 = arith.mulf %85, %113 : vector<32x256xf32>
    %115 = vector.broadcast %112 : vector<1x256xf32> to vector<32x256xf32>
    %116 = arith.addf %114, %115 : vector<32x256xf32>
    %cst_97 = arith.constant 0.000000e+00 : f32
    %117 = vector.broadcast %cst_97 : f32 to vector<32x256xf32>
    %118 = arith.maximumf %116, %117 : vector<32x256xf32>
    %cst_98 = arith.constant 0.000000e+00 : f32
    %119 = vector.broadcast %cst_98 : f32 to vector<2x1x304xf32>
    %c0_99 = arith.constant 0 : index
    %c0_100 = arith.constant 0 : index
    %c0_101 = arith.constant 0 : index
    %120 = vector.load %arg21[%c0_99, %c0_100, %c0_101] : memref<2x10x304xf32, #tpu.memory_space<vmem>>, vector<2x1x304xf32>
    tpu.vector_store %arg21[%c0_99, %c0_100, %c0_101], %119 {strides = array<i32>} : memref<2x10x304xf32, #tpu.memory_space<vmem>>, vector<2x1x304xf32>,
    %cst_102 = arith.constant 0.000000e+00 : f32
    %121 = vector.broadcast %cst_102 : f32 to vector<2x1x304xf32>
    %c0_103 = arith.constant 0 : index
    %c9 = arith.constant 9 : index
    %c0_104 = arith.constant 0 : index
    %122 = vector.load %arg21[%c0_103, %c9, %c0_104] : memref<2x10x304xf32, #tpu.memory_space<vmem>>, vector<2x1x304xf32>
    tpu.vector_store %arg21[%c0_103, %c9, %c0_104], %121 {strides = array<i32>} : memref<2x10x304xf32, #tpu.memory_space<vmem>>, vector<2x1x304xf32>,
    %cst_105 = arith.constant 0.000000e+00 : f32
    %123 = vector.broadcast %cst_105 : f32 to vector<2x10x32xf32>
    %c0_106 = arith.constant 0 : index
    %c0_107 = arith.constant 0 : index
    %c0_108 = arith.constant 0 : index
    %124 = vector.load %arg21[%c0_106, %c0_107, %c0_108] : memref<2x10x304xf32, #tpu.memory_space<vmem>>, vector<2x10x32xf32>
    tpu.vector_store %arg21[%c0_106, %c0_107, %c0_108], %123 {strides = array<i32>} : memref<2x10x304xf32, #tpu.memory_space<vmem>>, vector<2x10x32xf32>,
    %cst_109 = arith.constant 0.000000e+00 : f32
    %125 = vector.broadcast %cst_109 : f32 to vector<2x10x32xf32>
    %c0_110 = arith.constant 0 : index
    %c0_111 = arith.constant 0 : index
    %c272 = arith.constant 272 : index
    %126 = vector.load %arg21[%c0_110, %c0_111, %c272] : memref<2x10x304xf32, #tpu.memory_space<vmem>>, vector<2x10x32xf32>
    tpu.vector_store %arg21[%c0_110, %c0_111, %c272], %125 {strides = array<i32>} : memref<2x10x304xf32, #tpu.memory_space<vmem>>, vector<2x10x32xf32>,
    %127 = vector.shape_cast %118 : vector<32x256xf32> to vector<16x2x256xf32>
    %128 = vector.extract_strided_slice %127 {offsets = [0, 0, 0], sizes = [16, 1, 256], strides = [1, 1, 1]} : vector<16x2x256xf32> to vector<16x1x256xf32>
    %129 = vector.shape_cast %128 : vector<16x1x256xf32> to vector<16x256xf32>
    %130 = vector.extract_strided_slice %127 {offsets = [0, 1, 0], sizes = [16, 1, 256], strides = [1, 1, 1]} : vector<16x2x256xf32> to vector<16x1x256xf32>
    %131 = vector.shape_cast %130 : vector<16x1x256xf32> to vector<16x256xf32>
    %132 = arith.maximumf %129, %131 : vector<16x256xf32>
    %133 = vector.extract_strided_slice %132 {offsets = [0, 0], sizes = [16, 240], strides = [1, 1]} : vector<16x256xf32> to vector<16x240xf32>
    %134 = vector.extract_strided_slice %132 {offsets = [0, 16], sizes = [16, 240], strides = [1, 1]} : vector<16x256xf32> to vector<16x240xf32>
    %135 = arith.maximumf %133, %134 : vector<16x240xf32>
    %136 = vector.shape_cast %135 : vector<16x240xf32> to vector<2x8x240xf32>
    %c0_112 = arith.constant 0 : index
    %c1_113 = arith.constant 1 : index
    %c32 = arith.constant 32 : index
    %137 = vector.load %arg21[%c0_112, %c1_113, %c32] : memref<2x10x304xf32, #tpu.memory_space<vmem>>, vector<2x8x240xf32>
    tpu.vector_store %arg21[%c0_112, %c1_113, %c32], %136 {strides = array<i32>} : memref<2x10x304xf32, #tpu.memory_space<vmem>>, vector<2x8x240xf32>,
    %c0_114 = arith.constant 0 : index
    %c0_115 = arith.constant 0 : index
    %c0_116 = arith.constant 0 : index
    %138 = vector.load %arg21[%c0_114, %c0_115, %c0_116] : memref<2x10x304xf32, #tpu.memory_space<vmem>>, vector<2x8x304xf32>
    %139 = vector.shape_cast %138 : vector<2x8x304xf32> to vector<16x304xf32>
    %c0_117 = arith.constant 0 : index
    %c0_118 = arith.constant 0 : index
    %c0_119 = arith.constant 0 : index
    %140 = vector.load %arg4[%c0_117, %c0_118, %c0_119] : memref<3x304x256xf32, #tpu.memory_space<vmem>>, vector<1x304x256xf32>
    %141 = vector.shape_cast %140 : vector<1x304x256xf32> to vector<304x256xf32>
    %cst_120 = arith.constant dense<0.000000e+00> : vector<16x256xf32>
    %142 = tpu.matmul %139, %141, %cst_120 {dimension_numbers = #tpu.dot_dimension_numbers<[1], [0], [0], [1], [0, 0, 1, 1], [], []>} : vector<16x304xf32>, vector<304x256xf32>, vector<16x256xf32> -> vector<16x256xf32>
    %c0_121 = arith.constant 0 : index
    %c1_122 = arith.constant 1 : index
    %c0_123 = arith.constant 0 : index
    %143 = vector.load %arg21[%c0_121, %c1_122, %c0_123] : memref<2x10x304xf32, #tpu.memory_space<vmem>>, vector<2x8x304xf32>
    %144 = vector.shape_cast %143 : vector<2x8x304xf32> to vector<16x304xf32>
    %c1_124 = arith.constant 1 : index
    %c0_125 = arith.constant 0 : index
    %c0_126 = arith.constant 0 : index
    %145 = vector.load %arg4[%c1_124, %c0_125, %c0_126] : memref<3x304x256xf32, #tpu.memory_space<vmem>>, vector<1x304x256xf32>
    %146 = vector.shape_cast %145 : vector<1x304x256xf32> to vector<304x256xf32>
    %cst_127 = arith.constant dense<0.000000e+00> : vector<16x256xf32>
    %147 = tpu.matmul %144, %146, %cst_127 {dimension_numbers = #tpu.dot_dimension_numbers<[1], [0], [0], [1], [0, 0, 1, 1], [], []>} : vector<16x304xf32>, vector<304x256xf32>, vector<16x256xf32> -> vector<16x256xf32>
    %148 = arith.addf %142, %147 : vector<16x256xf32>
    %c0_128 = arith.constant 0 : index
    %c2_129 = arith.constant 2 : index
    %c0_130 = arith.constant 0 : index
    %149 = vector.load %arg21[%c0_128, %c2_129, %c0_130] : memref<2x10x304xf32, #tpu.memory_space<vmem>>, vector<2x8x304xf32>
    %150 = vector.shape_cast %149 : vector<2x8x304xf32> to vector<16x304xf32>
    %c2_131 = arith.constant 2 : index
    %c0_132 = arith.constant 0 : index
    %c0_133 = arith.constant 0 : index
    %151 = vector.load %arg4[%c2_131, %c0_132, %c0_133] : memref<3x304x256xf32, #tpu.memory_space<vmem>>, vector<1x304x256xf32>
    %152 = vector.shape_cast %151 : vector<1x304x256xf32> to vector<304x256xf32>
    %cst_134 = arith.constant dense<0.000000e+00> : vector<16x256xf32>
    %153 = tpu.matmul %150, %152, %cst_134 {dimension_numbers = #tpu.dot_dimension_numbers<[1], [0], [0], [1], [0, 0, 1, 1], [], []>} : vector<16x304xf32>, vector<304x256xf32>, vector<16x256xf32> -> vector<16x256xf32>
    %154 = arith.addf %148, %153 : vector<16x256xf32>
    %cst_135 = arith.constant dense<0.000000e+00> : vector<256xf32>
    %155 = vector.multi_reduction <add>, %154, %cst_135 [0] : vector<16x256xf32> to vector<256xf32>
    %156 = vector.shape_cast %155 : vector<256xf32> to vector<1x256xf32>
    %157 = arith.mulf %154, %154 : vector<16x256xf32>
    %cst_136 = arith.constant dense<0.000000e+00> : vector<256xf32>
    %158 = vector.multi_reduction <add>, %157, %cst_136 [0] : vector<16x256xf32> to vector<256xf32>
    %159 = vector.shape_cast %158 : vector<256xf32> to vector<1x256xf32>
    %c0_137 = arith.constant 0 : index
    %c0_138 = arith.constant 0 : index
    %160 = vector.load %arg9[%c0_137, %c0_138] : memref<256x32xf32, #tpu.memory_space<vmem>>, vector<256x32xf32>
    %cst_139 = arith.constant dense<0.000000e+00> : vector<1x32xf32>
    %161 = tpu.matmul %156, %160, %cst_139 {dimension_numbers = #tpu.dot_dimension_numbers<[1], [0], [0], [1], [0, 0, 1, 1], [], []>} : vector<1x256xf32>, vector<256x32xf32>, vector<1x32xf32> -> vector<1x32xf32>
    %cst_140 = arith.constant 7.812500e-03 : f32
    %162 = vector.broadcast %cst_140 : f32 to vector<1x32xf32>
    %163 = arith.mulf %161, %162 : vector<1x32xf32>
    %c0_141 = arith.constant 0 : index
    %c0_142 = arith.constant 0 : index
    %164 = vector.load %arg9[%c0_141, %c0_142] : memref<256x32xf32, #tpu.memory_space<vmem>>, vector<256x32xf32>
    %cst_143 = arith.constant dense<0.000000e+00> : vector<1x32xf32>
    %165 = tpu.matmul %159, %164, %cst_143 {dimension_numbers = #tpu.dot_dimension_numbers<[1], [0], [0], [1], [0, 0, 1, 1], [], []>} : vector<1x256xf32>, vector<256x32xf32>, vector<1x32xf32> -> vector<1x32xf32>
    %cst_144 = arith.constant 7.812500e-03 : f32
    %166 = vector.broadcast %cst_144 : f32 to vector<1x32xf32>
    %167 = arith.mulf %165, %166 : vector<1x32xf32>
    %168 = arith.mulf %163, %163 : vector<1x32xf32>
    %169 = arith.subf %167, %168 : vector<1x32xf32>
    %c0_145 = arith.constant 0 : index
    %c0_146 = arith.constant 0 : index
    %170 = vector.load %arg15[%c0_145, %c0_146] : memref<1x32xf32, #tpu.memory_space<vmem>>, vector<1x32xf32>
    %cst_147 = arith.constant 9.99999974E-6 : f32
    %171 = vector.broadcast %cst_147 : f32 to vector<1x32xf32>
    %172 = arith.addf %169, %171 : vector<1x32xf32>
    %173 = math.rsqrt %172 : vector<1x32xf32>
    %174 = arith.mulf %170, %173 : vector<1x32xf32>
    %c0_148 = arith.constant 0 : index
    %c0_149 = arith.constant 0 : index
    %175 = vector.load %arg16[%c0_148, %c0_149] : memref<1x32xf32, #tpu.memory_space<vmem>>, vector<1x32xf32>
    %176 = arith.mulf %163, %174 : vector<1x32xf32>
    %177 = arith.subf %175, %176 : vector<1x32xf32>
    %c0_150 = arith.constant 0 : index
    %c0_151 = arith.constant 0 : index
    %178 = vector.load %arg10[%c0_150, %c0_151] : memref<32x256xf32, #tpu.memory_space<vmem>>, vector<32x256xf32>
    %cst_152 = arith.constant dense<0.000000e+00> : vector<1x256xf32>
    %179 = tpu.matmul %174, %178, %cst_152 {dimension_numbers = #tpu.dot_dimension_numbers<[1], [0], [0], [1], [0, 0, 1, 1], [], []>} : vector<1x32xf32>, vector<32x256xf32>, vector<1x256xf32> -> vector<1x256xf32>
    %c0_153 = arith.constant 0 : index
    %c0_154 = arith.constant 0 : index
    %180 = vector.load %arg10[%c0_153, %c0_154] : memref<32x256xf32, #tpu.memory_space<vmem>>, vector<32x256xf32>
    %cst_155 = arith.constant dense<0.000000e+00> : vector<1x256xf32>
    %181 = tpu.matmul %177, %180, %cst_155 {dimension_numbers = #tpu.dot_dimension_numbers<[1], [0], [0], [1], [0, 0, 1, 1], [], []>} : vector<1x32xf32>, vector<32x256xf32>, vector<1x256xf32> -> vector<1x256xf32>
    %182 = vector.broadcast %179 : vector<1x256xf32> to vector<16x256xf32>
    %183 = arith.mulf %154, %182 : vector<16x256xf32>
    %184 = vector.broadcast %181 : vector<1x256xf32> to vector<16x256xf32>
    %185 = arith.addf %183, %184 : vector<16x256xf32>
    %cst_156 = arith.constant 0.000000e+00 : f32
    %186 = vector.broadcast %cst_156 : f32 to vector<16x256xf32>
    %187 = arith.maximumf %185, %186 : vector<16x256xf32>
    %188 = vector.shape_cast %187 : vector<16x256xf32> to vector<2x8x256xf32>
    %189 = vector.extract_strided_slice %188 {offsets = [0, 0, 0], sizes = [2, 1, 256], strides = [1, 1, 1]} : vector<2x8x256xf32> to vector<2x1x256xf32>
    %190 = vector.shape_cast %189 : vector<2x1x256xf32> to vector<2x256xf32>
    %191 = vector.extract_strided_slice %188 {offsets = [0, 1, 0], sizes = [2, 1, 256], strides = [1, 1, 1]} : vector<2x8x256xf32> to vector<2x1x256xf32>
    %192 = vector.shape_cast %191 : vector<2x1x256xf32> to vector<2x256xf32>
    %193 = arith.addf %190, %192 : vector<2x256xf32>
    %194 = vector.extract_strided_slice %188 {offsets = [0, 2, 0], sizes = [2, 1, 256], strides = [1, 1, 1]} : vector<2x8x256xf32> to vector<2x1x256xf32>
    %195 = vector.shape_cast %194 : vector<2x1x256xf32> to vector<2x256xf32>
    %196 = arith.addf %193, %195 : vector<2x256xf32>
    %197 = vector.extract_strided_slice %188 {offsets = [0, 3, 0], sizes = [2, 1, 256], strides = [1, 1, 1]} : vector<2x8x256xf32> to vector<2x1x256xf32>
    %198 = vector.shape_cast %197 : vector<2x1x256xf32> to vector<2x256xf32>
    %199 = arith.addf %196, %198 : vector<2x256xf32>
    %200 = vector.extract_strided_slice %188 {offsets = [0, 4, 0], sizes = [2, 1, 256], strides = [1, 1, 1]} : vector<2x8x256xf32> to vector<2x1x256xf32>
    %201 = vector.shape_cast %200 : vector<2x1x256xf32> to vector<2x256xf32>
    %202 = arith.addf %199, %201 : vector<2x256xf32>
    %203 = vector.extract_strided_slice %188 {offsets = [0, 5, 0], sizes = [2, 1, 256], strides = [1, 1, 1]} : vector<2x8x256xf32> to vector<2x1x256xf32>
    %204 = vector.shape_cast %203 : vector<2x1x256xf32> to vector<2x256xf32>
    %205 = arith.addf %202, %204 : vector<2x256xf32>
    %206 = vector.extract_strided_slice %188 {offsets = [0, 6, 0], sizes = [2, 1, 256], strides = [1, 1, 1]} : vector<2x8x256xf32> to vector<2x1x256xf32>
    %207 = vector.shape_cast %206 : vector<2x1x256xf32> to vector<2x256xf32>
    %208 = arith.addf %205, %207 : vector<2x256xf32>
    %209 = vector.extract_strided_slice %188 {offsets = [0, 7, 0], sizes = [2, 1, 256], strides = [1, 1, 1]} : vector<2x8x256xf32> to vector<2x1x256xf32>
    %210 = vector.shape_cast %209 : vector<2x1x256xf32> to vector<2x256xf32>
    %211 = arith.addf %208, %210 : vector<2x256xf32>
    %c0_157 = arith.constant 0 : index
    %c0_158 = arith.constant 0 : index
    %212 = vector.load %arg9[%c0_157, %c0_158] : memref<256x32xf32, #tpu.memory_space<vmem>>, vector<256x32xf32>
    %cst_159 = arith.constant dense<0.000000e+00> : vector<2x32xf32>
    %213 = tpu.matmul %211, %212, %cst_159 {dimension_numbers = #tpu.dot_dimension_numbers<[1], [0], [0], [1], [0, 0, 1, 1], [], []>} : vector<2x256xf32>, vector<256x32xf32>, vector<2x32xf32> -> vector<2x32xf32>
    %cst_160 = arith.constant 1.562500e-02 : f32
    %214 = vector.broadcast %cst_160 : f32 to vector<2x32xf32>
    %215 = arith.mulf %213, %214 : vector<2x32xf32>
    %c0_161 = arith.constant 0 : index
    %c0_162 = arith.constant 0 : index
    %216 = vector.load %arg17[%c0_161, %c0_162] : memref<32x128xf32, #tpu.memory_space<vmem>>, vector<32x128xf32>
    %cst_163 = arith.constant dense<0.000000e+00> : vector<2x128xf32>
    %217 = tpu.matmul %215, %216, %cst_163 {dimension_numbers = #tpu.dot_dimension_numbers<[1], [0], [0], [1], [0, 0, 1, 1], [], []>} : vector<2x32xf32>, vector<32x128xf32>, vector<2x128xf32> -> vector<2x128xf32>
    %c0_164 = arith.constant 0 : index
    %c0_165 = arith.constant 0 : index
    %218 = vector.load %arg18[%c0_164, %c0_165] : memref<1x128xf32, #tpu.memory_space<vmem>>, vector<1x128xf32>
    %219 = vector.broadcast %218 : vector<1x128xf32> to vector<2x128xf32>
    %220 = arith.addf %217, %219 : vector<2x128xf32>
    %cst_166 = arith.constant dense<0xFF800000> : vector<2xf32>
    %221 = vector.multi_reduction <maximumf>, %220, %cst_166 [1] : vector<2x128xf32> to vector<2xf32>
    %222 = vector.shape_cast %221 : vector<2xf32> to vector<2x1xf32>
    %223 = vector.broadcast %222 : vector<2x1xf32> to vector<2x128xf32>
    %224 = arith.subf %220, %223 : vector<2x128xf32>
    %225 = math.exp %224 : vector<2x128xf32>
    %cst_167 = arith.constant dense<0.000000e+00> : vector<2xf32>
    %226 = vector.multi_reduction <add>, %225, %cst_167 [1] : vector<2x128xf32> to vector<2xf32>
    %227 = vector.shape_cast %226 : vector<2xf32> to vector<2x1xf32>
    %228 = math.log %227 : vector<2x1xf32>
    %229 = vector.broadcast %228 : vector<2x1xf32> to vector<2x128xf32>
    %230 = arith.subf %224, %229 : vector<2x128xf32>
    %c0_168 = arith.constant 0 : index
    %c0_169 = arith.constant 0 : index
    %231 = vector.load %arg19[%c0_168, %c0_169] : memref<2x128xf32, #tpu.memory_space<vmem>>, vector<2x128xf32>
    tpu.vector_store %arg19[%c0_168, %c0_169], %230 {strides = array<i32>} : memref<2x128xf32, #tpu.memory_space<vmem>>, vector<2x128xf32>,
    return
  }
  func.func @transform_0(%arg0: i32) -> (i32, i32, i32) {
    %c0_i32 = arith.constant 0 : i32
    %c0_i32_0 = arith.constant 0 : i32
    %c0_i32_1 = arith.constant 0 : i32
    %c0_i32_2 = arith.constant 0 : i32
    return %c0_i32, %c0_i32_0, %c0_i32_1 : i32, i32, i32
  }
  func.func @transform_1(%arg0: i32) -> (i32, i32, i32) {
    %c0_i32 = arith.constant 0 : i32
    %c0_i32_0 = arith.constant 0 : i32
    %c0_i32_1 = arith.constant 0 : i32
    %c0_i32_2 = arith.constant 0 : i32
    return %c0_i32, %c0_i32_0, %c0_i32_1 : i32, i32, i32
  }
  func.func @transform_2(%arg0: i32) -> (i32, i32, i32) {
    %c0_i32 = arith.constant 0 : i32
    %c0_i32_0 = arith.constant 0 : i32
    %c0_i32_1 = arith.constant 0 : i32
    %c0_i32_2 = arith.constant 0 : i32
    return %c0_i32, %c0_i32_0, %c0_i32_1 : i32, i32, i32
  }
  func.func @transform_3(%arg0: i32) -> (i32, i32, i32) {
    %c0_i32 = arith.constant 0 : i32
    %c0_i32_0 = arith.constant 0 : i32
    %c0_i32_1 = arith.constant 0 : i32
    %c0_i32_2 = arith.constant 0 : i32
    return %c0_i32, %c0_i32_0, %c0_i32_1 : i32, i32, i32
  }
  func.func @transform_4(%arg0: i32) -> (i32, i32) {
    %c0_i32 = arith.constant 0 : i32
    %c0_i32_0 = arith.constant 0 : i32
    %c0_i32_1 = arith.constant 0 : i32
    return %c0_i32, %c0_i32_0 : i32, i32
  }
  func.func @transform_5(%arg0: i32) -> (i32, i32) {
    %c0_i32 = arith.constant 0 : i32
    %c0_i32_0 = arith.constant 0 : i32
    %c0_i32_1 = arith.constant 0 : i32
    return %c0_i32, %c0_i32_0 : i32, i32
  }
  func.func @transform_6(%arg0: i32) -> (i32, i32) {
    %c0_i32 = arith.constant 0 : i32
    %c0_i32_0 = arith.constant 0 : i32
    %c0_i32_1 = arith.constant 0 : i32
    return %c0_i32, %c0_i32_0 : i32, i32
  }
  func.func @transform_7(%arg0: i32) -> (i32, i32) {
    %c0_i32 = arith.constant 0 : i32
    %c0_i32_0 = arith.constant 0 : i32
    %c0_i32_1 = arith.constant 0 : i32
    return %c0_i32, %c0_i32_0 : i32, i32
  }
  func.func @transform_8(%arg0: i32) -> (i32, i32) {
    %c0_i32 = arith.constant 0 : i32
    %c0_i32_0 = arith.constant 0 : i32
    %c0_i32_1 = arith.constant 0 : i32
    return %c0_i32, %c0_i32_0 : i32, i32
  }
  func.func @transform_9(%arg0: i32) -> (i32, i32) {
    %c0_i32 = arith.constant 0 : i32
    %c0_i32_0 = arith.constant 0 : i32
    %c0_i32_1 = arith.constant 0 : i32
    return %c0_i32, %c0_i32_0 : i32, i32
  }
  func.func @transform_10(%arg0: i32) -> (i32, i32) {
    %c0_i32 = arith.constant 0 : i32
    %c0_i32_0 = arith.constant 0 : i32
    %c0_i32_1 = arith.constant 0 : i32
    return %c0_i32, %c0_i32_0 : i32, i32
  }
  func.func @transform_11(%arg0: i32) -> (i32, i32) {
    %c0_i32 = arith.constant 0 : i32
    %c0_i32_0 = arith.constant 0 : i32
    %c0_i32_1 = arith.constant 0 : i32
    return %c0_i32, %c0_i32_0 : i32, i32
  }
  func.func @transform_12(%arg0: i32) -> (i32, i32) {
    %c0_i32 = arith.constant 0 : i32
    %c0_i32_0 = arith.constant 0 : i32
    %c0_i32_1 = arith.constant 0 : i32
    return %c0_i32, %c0_i32_0 : i32, i32
  }
  func.func @transform_13(%arg0: i32) -> (i32, i32) {
    %c0_i32 = arith.constant 0 : i32
    %c0_i32_0 = arith.constant 0 : i32
    %c0_i32_1 = arith.constant 0 : i32
    return %c0_i32, %c0_i32_0 : i32, i32
  }
  func.func @transform_14(%arg0: i32) -> (i32, i32) {
    %c0_i32 = arith.constant 0 : i32
    %c0_i32_0 = arith.constant 0 : i32
    %c0_i32_1 = arith.constant 0 : i32
    return %c0_i32, %c0_i32_0 : i32, i32
  }
  func.func @transform_15(%arg0: i32) -> (i32, i32) {
    %c0_i32 = arith.constant 0 : i32
    %c0_i32_0 = arith.constant 0 : i32
    %c0_i32_1 = arith.constant 0 : i32
    return %c0_i32, %c0_i32_0 : i32, i32
  }
  func.func @transform_16(%arg0: i32) -> (i32, i32) {
    %c0_i32 = arith.constant 0 : i32
    %c0_i32_0 = arith.constant 0 : i32
    %c0_i32_1 = arith.constant 0 : i32
    return %c0_i32, %c0_i32_0 : i32, i32
  }
  func.func @transform_17(%arg0: i32) -> (i32, i32) {
    %c0_i32 = arith.constant 0 : i32
    %c0_i32_0 = arith.constant 0 : i32
    %c0_i32_1 = arith.constant 0 : i32
    return %c0_i32, %c0_i32_0 : i32, i32
  }
  func.func @transform_18(%arg0: i32) -> (i32, i32) {
    %c0_i32 = arith.constant 0 : i32
    %c0_i32_0 = arith.constant 0 : i32
    %c0_i32_1 = arith.constant 0 : i32
    return %c0_i32, %c0_i32_0 : i32, i32
  }
}

</mosaic_0001>

<llo_original>
// kernel: mixed_net_forward.1
$region0: #{mixed_net_forward.1}
  #allocation0 [shape = 'u32[]', space=smem, size = 0x4, offset = 0x4, fixed_abs, tag = 'smem constant byte address 0x4 - core index']
  #allocation1 [shape = 'u32[144,128]{1,0:T(1,128)}', space=vmem, size = 0x12000, scoped, tag = 'internal scratch']
  #allocation2 [shape = 'f32[2,18,280]{2,1,0:T(8,128)}', space=vmem, size = 0x12000, scoped, tag = 'scratch operand']
  #allocation3 [shape = 'f32[2,10,304]{2,1,0:T(8,128)}', space=vmem, size = 0xc000, scoped, tag = 'scratch operand']
  %s0 = inlined_call_operand.vmem [shape: f32[2,34,128], index: 0, kind: input, shape index: {}]
  %s1 = inlined_call_operand.vmem [shape: f32[3,128,256], index: 1, kind: input, shape index: {}]
  %s2 = inlined_call_operand.vmem [shape: f32[3,280,256], index: 2, kind: input, shape index: {}]
  %s3 = inlined_call_operand.vmem [shape: f32[3,304,256], index: 3, kind: input, shape index: {}]
  %s4 = inlined_call_operand.vmem [shape: f32[256,8], index: 4, kind: input, shape index: {}]
  %s5 = inlined_call_operand.vmem [shape: f32[8,256], index: 5, kind: input, shape index: {}]
  %s6 = inlined_call_operand.vmem [shape: f32[256,16], index: 6, kind: input, shape index: {}]
  %s7 = inlined_call_operand.vmem [shape: f32[16,256], index: 7, kind: input, shape index: {}]
  %s8 = inlined_call_operand.vmem [shape: f32[256,32], index: 8, kind: input, shape index: {}]
  %s9 = inlined_call_operand.vmem [shape: f32[32,256], index: 9, kind: input, shape index: {}]
  %s10 = inlined_call_operand.vmem [shape: f32[1,8], index: 10, kind: input, shape index: {}]
  %s11 = inlined_call_operand.vmem [shape: f32[1,8], index: 11, kind: input, shape index: {}]
  %s12 = inlined_call_operand.vmem [shape: f32[1,16], index: 12, kind: input, shape index: {}]
  %s13 = inlined_call_operand.vmem [shape: f32[1,16], index: 13, kind: input, shape index: {}]
  %s14 = inlined_call_operand.vmem [shape: f32[1,32], index: 14, kind: input, shape index: {}]
  %s15 = inlined_call_operand.vmem [shape: f32[1,32], index: 15, kind: input, shape index: {}]
  %s16 = inlined_call_operand.vmem [shape: f32[32,128], index: 16, kind: input, shape index: {}]
  %s17 = inlined_call_operand.vmem [shape: f32[1,128], index: 17, kind: input, shape index: {}]
  %s18 = inlined_call_operand.hbm [shape: f32[2,128], index: 18, kind: output, shape index: {}]
  %s19 = sld [smem:[#allocation0]]
  $region82: #{mixed_net_forward.1} parent=0
    _
  %s21 = ssub.s32 1, %s19
  %s22 = scalar_select 0, %s21, %s19
  $region1: #{mixed_net_forward.1} parent=0
    #allocation4 [shape = 'u8[1024]{0}', space=vmem, size = 0x400, scoped, tag = 'output window, operand 0, single buffered']
    #allocation5 [shape = 's32[1]{0}', space=sflag, size = 0x4, scoped, tag = 'scoped memory for mixed_net_forward.1']
    %23 = vsyncpa [#allocation5], 0
    // Predicated region
    $region2: #{mixed_net_forward.1} parent=1 // pred_check
      _
    $region3: #{mixed_net_forward.1} parent=1 // pred_check_branch
      %25 = sbr.rel (0) target = $region5
    $region4: #{mixed_net_forward.1} parent=1 // pred_region
      _
    $region5: #{mixed_net_forward.1} parent=1 // pred_fallthru
      _
    // Predicated region
    $region6: #{mixed_net_forward.1} parent=1 // pred_check
      _
    $region7: #{mixed_net_forward.1} parent=1 // pred_check_branch
      %27 = sbr.rel (0) target = $region9
    $region8: #{mixed_net_forward.1} parent=1 // pred_region
      _
    $region9: #{mixed_net_forward.1} parent=1 // pred_fallthru
      _
    // Predicated region
    $region10: #{mixed_net_forward.1} parent=1 // pred_check
      _
    $region11: #{mixed_net_forward.1} parent=1 // pred_check_branch
      %29 = sbr.rel (0) target = $region13
    $region12: #{mixed_net_forward.1} parent=1 // pred_region
      _
    $region13: #{mixed_net_forward.1} parent=1 // pred_fallthru
      _
    // Predicated region
    $region14: #{mixed_net_forward.1} parent=1 // pred_check
      _
    $region15: #{mixed_net_forward.1} parent=1 // pred_check_branch
      %31 = sbr.rel (0) target = $region17
    $region16: #{mixed_net_forward.1} parent=1 // pred_region
      _
    $region17: #{mixed_net_forward.1} parent=1 // pred_fallthru
      _
    // Predicated region
    $region18: #{mixed_net_forward.1} parent=1 // pred_check
      _
    $region19: #{mixed_net_forward.1} parent=1 // pred_check_branch
      %33 = sbr.rel (0) target = $region21
    $region20: #{mixed_net_forward.1} parent=1 // pred_region
      _
    $region21: #{mixed_net_forward.1} parent=1 // pred_fallthru
      _
    // Predicated region
    $region22: #{mixed_net_forward.1} parent=1 // pred_check
      _
    $region23: #{mixed_net_forward.1} parent=1 // pred_check_branch
      %35 = sbr.rel (0) target = $region25
    $region24: #{mixed_net_forward.1} parent=1 // pred_region
      _
    $region25: #{mixed_net_forward.1} parent=1 // pred_fallthru
      _
    // Predicated region
    $region26: #{mixed_net_forward.1} parent=1 // pred_check
      _
    $region27: #{mixed_net_forward.1} parent=1 // pred_check_branch
      %37 = sbr.rel (0) target = $region29
    $region28: #{mixed_net_forward.1} parent=1 // pred_region
      _
    $region29: #{mixed_net_forward.1} parent=1 // pred_fallthru
      _
    // Predicated region
    $region30: #{mixed_net_forward.1} parent=1 // pred_check
      _
    $region31: #{mixed_net_forward.1} parent=1 // pred_check_branch
      %39 = sbr.rel (0) target = $region33
    $region32: #{mixed_net_forward.1} parent=1 // pred_region
      _
    $region33: #{mixed_net_forward.1} parent=1 // pred_fallthru
      _
    // Predicated region
    $region34: #{mixed_net_forward.1} parent=1 // pred_check
      _
    $region35: #{mixed_net_forward.1} parent=1 // pred_check_branch
      %41 = sbr.rel (0) target = $region37
    $region36: #{mixed_net_forward.1} parent=1 // pred_region
      _
    $region37: #{mixed_net_forward.1} parent=1 // pred_fallthru
      _
    // Predicated region
    $region38: #{mixed_net_forward.1} parent=1 // pred_check
      _
    $region39: #{mixed_net_forward.1} parent=1 // pred_check_branch
      %43 = sbr.rel (0) target = $region41
    $region40: #{mixed_net_forward.1} parent=1 // pred_region
      _
    $region41: #{mixed_net_forward.1} parent=1 // pred_fallthru
      _
    // Predicated region
    $region42: #{mixed_net_forward.1} parent=1 // pred_check
      _
    $region43: #{mixed_net_forward.1} parent=1 // pred_check_branch
      %45 = sbr.rel (0) target = $region45
    $region44: #{mixed_net_forward.1} parent=1 // pred_region
      _
    $region45: #{mixed_net_forward.1} parent=1 // pred_fallthru
      _
    // Predicated region
    $region46: #{mixed_net_forward.1} parent=1 // pred_check
      _
    $region47: #{mixed_net_forward.1} parent=1 // pred_check_branch
      %47 = sbr.rel (0) target = $region49
    $region48: #{mixed_net_forward.1} parent=1 // pred_region
      _
    $region49: #{mixed_net_forward.1} parent=1 // pred_fallthru
      _
    // Predicated region
    $region50: #{mixed_net_forward.1} parent=1 // pred_check
      _
    $region51: #{mixed_net_forward.1} parent=1 // pred_check_branch
      %49 = sbr.rel (0) target = $region53
    $region52: #{mixed_net_forward.1} parent=1 // pred_region
      _
    $region53: #{mixed_net_forward.1} parent=1 // pred_fallthru
      _
    // Predicated region
    $region54: #{mixed_net_forward.1} parent=1 // pred_check
      _
    $region55: #{mixed_net_forward.1} parent=1 // pred_check_branch
      %51 = sbr.rel (0) target = $region57
    $region56: #{mixed_net_forward.1} parent=1 // pred_region
      _
    $region57: #{mixed_net_forward.1} parent=1 // pred_fallthru
      _
    // Predicated region
    $region58: #{mixed_net_forward.1} parent=1 // pred_check
      _
    $region59: #{mixed_net_forward.1} parent=1 // pred_check_branch
      %53 = sbr.rel (0) target = $region61
    $region60: #{mixed_net_forward.1} parent=1 // pred_region
      _
    $region61: #{mixed_net_forward.1} parent=1 // pred_fallthru
      _
    // Predicated region
    $region62: #{mixed_net_forward.1} parent=1 // pred_check
      _
    $region63: #{mixed_net_forward.1} parent=1 // pred_check_branch
      %55 = sbr.rel (0) target = $region65
    $region64: #{mixed_net_forward.1} parent=1 // pred_region
      _
    $region65: #{mixed_net_forward.1} parent=1 // pred_fallthru
      _
    // Predicated region
    $region66: #{mixed_net_forward.1} parent=1 // pred_check
      _
    $region67: #{mixed_net_forward.1} parent=1 // pred_check_branch
      %57 = sbr.rel (0) target = $region69
    $region68: #{mixed_net_forward.1} parent=1 // pred_region
      _
    $region69: #{mixed_net_forward.1} parent=1 // pred_fallthru
      _
    // Predicated region
    $region70: #{mixed_net_forward.1} parent=1 // pred_check
      _
    $region71: #{mixed_net_forward.1} parent=1 // pred_check_branch
      %59 = sbr.rel (0) target = $region73
    $region72: #{mixed_net_forward.1} parent=1 // pred_region
      _
    $region73: #{mixed_net_forward.1} parent=1 // pred_fallthru
      _
    %v60 = vld [vmem:[%s0] sm:$0xff]
    %v61 = vld [vmem:[%s0 + $0x8] sm:$0xff]
    %v62 = vld [vmem:[%s0 + $0x10] sm:$0xff]
    %v63 = vld [vmem:[%s0 + $0x18] sm:$0xff]
    %v64 = vld [vmem:[%s0 + $0x28] sm:$0xff]
    %v65 = vld [vmem:[%s0 + $0x30] sm:$0xff]
    %v66 = vld [vmem:[%s0 + $0x38] sm:$0xff]
    %v67 = vld [vmem:[%s0 + $0x40] sm:$0xff]
    %v68 = vld [vmem:[%s1] sm:$0xff]
    %v69 = vld [vmem:[%s1 + $0x8] sm:$0xff]
    %v70 = vld [vmem:[%s1 + $0x10] sm:$0xff]
    %v71 = vld [vmem:[%s1 + $0x18] sm:$0xff]
    %v72 = vld [vmem:[%s1 + $0x20] sm:$0xff]
    %v73 = vld [vmem:[%s1 + $0x28] sm:$0xff]
    %v74 = vld [vmem:[%s1 + $0x30] sm:$0xff]
    %v75 = vld [vmem:[%s1 + $0x38] sm:$0xff]
    %v76 = vld [vmem:[%s1 + $0x40] sm:$0xff]
    %v77 = vld [vmem:[%s1 + $0x48] sm:$0xff]
    %v78 = vld [vmem:[%s1 + $0x50] sm:$0xff]
    %v79 = vld [vmem:[%s1 + $0x58] sm:$0xff]
    %v80 = vld [vmem:[%s1 + $0x60] sm:$0xff]
    %v81 = vld [vmem:[%s1 + $0x68] sm:$0xff]
    %v82 = vld [vmem:[%s1 + $0x70] sm:$0xff]
    %v83 = vld [vmem:[%s1 + $0x78] sm:$0xff]
    %v84 = vld [vmem:[%s1 + $0x80] sm:$0xff]
    %v85 = vld [vmem:[%s1 + $0x88] sm:$0xff]
    %v86 = vld [vmem:[%s1 + $0x90] sm:$0xff]
    %v87 = vld [vmem:[%s1 + $0x98] sm:$0xff]
    %v88 = vld [vmem:[%s1 + $0xa0] sm:$0xff]
    %v89 = vld [vmem:[%s1 + $0xa8] sm:$0xff]
    %v90 = vld [vmem:[%s1 + $0xb0] sm:$0xff]
    %v91 = vld [vmem:[%s1 + $0xb8] sm:$0xff]
    %v92 = vld [vmem:[%s1 + $0xc0] sm:$0xff]
    %v93 = vld [vmem:[%s1 + $0xc8] sm:$0xff]
    %v94 = vld [vmem:[%s1 + $0xd0] sm:$0xff]
    %v95 = vld [vmem:[%s1 + $0xd8] sm:$0xff]
    %v96 = vld [vmem:[%s1 + $0xe0] sm:$0xff]
    %v97 = vld [vmem:[%s1 + $0xe8] sm:$0xff]
    %v98 = vld [vmem:[%s1 + $0xf0] sm:$0xff]
    %v99 = vld [vmem:[%s1 + $0xf8] sm:$0xff]
    %v100 = vld [vmem:[%s0 + $0x1] sm:$0xff]
    %v101 = vld [vmem:[%s0 + $0x9] sm:$0xff]
    %v102 = vld [vmem:[%s0 + $0x11] sm:$0xff]
    %v103 = vld [vmem:[%s0 + $0x19] sm:$0xff]
    %v104 = vld [vmem:[%s0 + $0x29] sm:$0xff]
    %v105 = vld [vmem:[%s0 + $0x31] sm:$0xff]
    %v106 = vld [vmem:[%s0 + $0x39] sm:$0xff]
    %v107 = vld [vmem:[%s0 + $0x41] sm:$0xff]
    %s108 = scalar_lea.vmem %s1, 256
    %v109 = vld [vmem:[%s108] sm:$0xff]
    %v110 = vld [vmem:[%s108 + $0x8] sm:$0xff]
    %v111 = vld [vmem:[%s108 + $0x10] sm:$0xff]
    %v112 = vld [vmem:[%s108 + $0x18] sm:$0xff]
    %v113 = vld [vmem:[%s108 + $0x20] sm:$0xff]
    %v114 = vld [vmem:[%s108 + $0x28] sm:$0xff]
    %v115 = vld [vmem:[%s108 + $0x30] sm:$0xff]
    %v116 = vld [vmem:[%s108 + $0x38] sm:$0xff]
    %v117 = vld [vmem:[%s108 + $0x40] sm:$0xff]
    %v118 = vld [vmem:[%s108 + $0x48] sm:$0xff]
    %v119 = vld [vmem:[%s108 + $0x50] sm:$0xff]
    %v120 = vld [vmem:[%s108 + $0x58] sm:$0xff]
    %v121 = vld [vmem:[%s108 + $0x60] sm:$0xff]
    %v122 = vld [vmem:[%s108 + $0x68] sm:$0xff]
    %v123 = vld [vmem:[%s108 + $0x70] sm:$0xff]
    %v124 = vld [vmem:[%s108 + $0x78] sm:$0xff]
    %v125 = vld [vmem:[%s108 + $0x80] sm:$0xff]
    %v126 = vld [vmem:[%s108 + $0x88] sm:$0xff]
    %v127 = vld [vmem:[%s108 + $0x90] sm:$0xff]
    %v128 = vld [vmem:[%s108 + $0x98] sm:$0xff]
    %v129 = vld [vmem:[%s108 + $0xa0] sm:$0xff]
    %v130 = vld [vmem:[%s108 + $0xa8] sm:$0xff]
    %v131 = vld [vmem:[%s108 + $0xb0] sm:$0xff]
    %v132 = vld [vmem:[%s108 + $0xb8] sm:$0xff]
    %v133 = vld [vmem:[%s108 + $0xc0] sm:$0xff]
    %v134 = vld [vmem:[%s108 + $0xc8] sm:$0xff]
    %v135 = vld [vmem:[%s108 + $0xd0] sm:$0xff]
    %v136 = vld [vmem:[%s108 + $0xd8] sm:$0xff]
    %v137 = vld [vmem:[%s108 + $0xe0] sm:$0xff]
    %v138 = vld [vmem:[%s108 + $0xe8] sm:$0xff]
    %v139 = vld [vmem:[%s108 + $0xf0] sm:$0xff]
    %v140 = vld [vmem:[%s108 + $0xf8] sm:$0xff]
    %141 = vmatprep.subr.mxu0 %v140
    %142 = vmatpush1.msra.mxu0 %v139
    %143 = vmatprep.subr.mxu0 %v138
    %144 = vmatpush1.msra.mxu0 %v137
    %145 = vmatprep.subr.mxu0 %v136
    %146 = vmatpush1.msra.mxu0 %v135
    %147 = vmatprep.subr.mxu0 %v134
    %148 = vmatpush1.msra.mxu0 %v133
    %149 = vmatprep.subr.mxu0 %v132
    %150 = vmatpush1.msra.mxu0 %v131
    %151 = vmatprep.subr.mxu0 %v130
    %152 = vmatpush1.msra.mxu0 %v129
    %153 = vmatprep.subr.mxu0 %v128
    %154 = vmatpush1.msra.mxu0 %v127
    %155 = vmatprep.subr.mxu0 %v126
    %156 = vmatpush1.msra.mxu0 %v125
    %157 = vmatprep.subr.mxu0 %v124
    %158 = vmatpush1.msra.mxu0 %v123
    %159 = vmatprep.subr.mxu0 %v122
    %160 = vmatpush1.msra.mxu0 %v121
    %161 = vmatprep.subr.mxu0 %v120
    %162 = vmatpush1.msra.mxu0 %v119
    %163 = vmatprep.subr.mxu0 %v118
    %164 = vmatpush1.msra.mxu0 %v117
    %165 = vmatprep.subr.mxu0 %v116
    %166 = vmatpush1.msra.mxu0 %v115
    %167 = vmatprep.subr.mxu0 %v114
    %168 = vmatpush1.msra.mxu0 %v113
    %169 = vmatprep.subr.mxu0 %v112
    %170 = vmatpush1.msra.mxu0 %v111
    %171 = vmatprep.subr.mxu0 %v110
    %172 = vmatpush1.msra.mxu0 %v109
    %173 = vmatprep.subr.mxu0 0.0
    %174 = vmatpush2.msra.mxu0 0.0
    %175 = vmatprep.subr.mxu0 0.0
    %176 = vmatpush2.msra.mxu0 0.0
    %177 = vmatprep.subr.mxu0 0.0
    %178 = vmatpush2.msra.mxu0 0.0
    %179 = vmatprep.subr.mxu0 0.0
    %180 = vmatpush2.msra.mxu0 0.0
    %181 = vmatprep.subr.mxu0 0.0
    %182 = vmatpush2.msra.mxu0 0.0
    %183 = vmatprep.subr.mxu0 0.0
    %184 = vmatpush2.msra.mxu0 0.0
    %185 = vmatprep.subr.mxu0 0.0
    %186 = vmatpush2.msra.mxu0 0.0
    %187 = vmatprep.subr.mxu0 0.0
    %188 = vmatpush2.msra.mxu0 0.0
    %189 = vmatprep.subr.mxu0 0.0
    %190 = vmatpush2.msra.mxu0 0.0
    %191 = vmatprep.subr.mxu0 0.0
    %192 = vmatpush2.msra.mxu0 0.0
    %193 = vmatprep.subr.mxu0 0.0
    %194 = vmatpush2.msra.mxu0 0.0
    %195 = vmatprep.subr.mxu0 0.0
    %196 = vmatpush2.msra.mxu0 0.0
    %197 = vmatprep.subr.mxu0 0.0
    %198 = vmatpush2.msra.mxu0 0.0
    %199 = vmatprep.subr.mxu0 0.0
    %200 = vmatpush2.msra.mxu0 0.0
    %201 = vmatprep.subr.mxu0 0.0
    %202 = vmatpush2.msra.mxu0 0.0
    %203 = vmatprep.subr.mxu0 0.0
    %204 = vmatpush2.msra.mxu0 0.0
    %205 = vmatprep.mubr.f32.mxu0 0.0
    %206 = vmatmul.mubr.f32.gmra.mxu0 %v100
    %v207 = vpop.f32.mrf.mxu0
    %v208 = vadd.f32 0.0, %v207
    %v209 = vpop.f32.mrf.mxu0
    %v210 = vadd.f32 0.0, %v209
    %211 = vmatprep.mubr.f32.mxu0 0.0
    %212 = vmatmul.mubr.f32.gmra.mxu0 %v101
    %v213 = vpop.f32.mrf.mxu0
    %v214 = vadd.f32 0.0, %v213
    %v215 = vpop.f32.mrf.mxu0
    %v216 = vadd.f32 0.0, %v215
    %217 = vmatprep.mubr.f32.mxu0 0.0
    %218 = vmatmul.mubr.f32.gmra.mxu0 %v102
    %v219 = vpop.f32.mrf.mxu0
    %v220 = vadd.f32 0.0, %v219
    %v221 = vpop.f32.mrf.mxu0
    %v222 = vadd.f32 0.0, %v221
    %223 = vmatprep.mubr.f32.mxu0 0.0
    %224 = vmatmul.mubr.f32.gmra.mxu0 %v103
    %v225 = vpop.f32.mrf.mxu0
    %v226 = vadd.f32 0.0, %v225
    %v227 = vpop.f32.mrf.mxu0
    %v228 = vadd.f32 0.0, %v227
    %229 = vmatprep.mubr.f32.mxu0 0.0
    %230 = vmatmul.mubr.f32.gmra.mxu0 %v104
    %v231 = vpop.f32.mrf.mxu0
    %v232 = vadd.f32 0.0, %v231
    %v233 = vpop.f32.mrf.mxu0
    %v234 = vadd.f32 0.0, %v233
    %235 = vmatprep.mubr.f32.mxu0 0.0
    %236 = vmatmul.mubr.f32.gmra.mxu0 %v105
    %v237 = vpop.f32.mrf.mxu0
    %v238 = vadd.f32 0.0, %v237
    %v239 = vpop.f32.mrf.mxu0
    %v240 = vadd.f32 0.0, %v239
    %241 = vmatprep.mubr.f32.mxu0 0.0
    %242 = vmatmul.mubr.f32.gmra.mxu0 %v106
    %v243 = vpop.f32.mrf.mxu0
    %v244 = vadd.f32 0.0, %v243
    %v245 = vpop.f32.mrf.mxu0
    %v246 = vadd.f32 0.0, %v245
    %247 = vmatprep.mubr.f32.mxu0 0.0
    %248 = vmatmul.mubr.f32.gmra.mxu0 %v107
    %v249 = vpop.f32.mrf.mxu0
    %v250 = vadd.f32 0.0, %v249
    %v251 = vpop.f32.mrf.mxu0
    %v252 = vadd.f32 0.0, %v251
    %253 = vdwg.mxu0
    %254 = vmatprep.subr.mxu0 %v99
    %255 = vmatpush1.msra.mxu0 %v98
    %256 = vmatprep.subr.mxu0 %v97
    %257 = vmatpush1.msra.mxu0 %v96
    %258 = vmatprep.subr.mxu0 %v95
    %259 = vmatpush1.msra.mxu0 %v94
    %260 = vmatprep.subr.mxu0 %v93
    %261 = vmatpush1.msra.mxu0 %v92
    %262 = vmatprep.subr.mxu0 %v91
    %263 = vmatpush1.msra.mxu0 %v90
    %264 = vmatprep.subr.mxu0 %v89
    %265 = vmatpush1.msra.mxu0 %v88
    %266 = vmatprep.subr.mxu0 %v87
    %267 = vmatpush1.msra.mxu0 %v86
    %268 = vmatprep.subr.mxu0 %v85
    %269 = vmatpush1.msra.mxu0 %v84
    %270 = vmatprep.subr.mxu0 %v83
    %271 = vmatpush1.msra.mxu0 %v82
    %272 = vmatprep.subr.mxu0 %v81
    %273 = vmatpush1.msra.mxu0 %v80
    %274 = vmatprep.subr.mxu0 %v79
    %275 = vmatpush1.msra.mxu0 %v78
    %276 = vmatprep.subr.mxu0 %v77
    %277 = vmatpush1.msra.mxu0 %v76
    %278 = vmatprep.subr.mxu0 %v75
    %279 = vmatpush1.msra.mxu0 %v74
    %280 = vmatprep.subr.mxu0 %v73
    %281 = vmatpush1.msra.mxu0 %v72
    %282 = vmatprep.subr.mxu0 %v71
    %283 = vmatpush1.msra.mxu0 %v70
    %284 = vmatprep.subr.mxu0 %v69
    %285 = vmatpush1.msra.mxu0 %v68
    %286 = vmatprep.subr.mxu0 0.0
    %287 = vmatpush2.msra.mxu0 0.0
    %288 = vmatprep.subr.mxu0 0.0
    %289 = vmatpush2.msra.mxu0 0.0
    %290 = vmatprep.subr.mxu0 0.0
    %291 = vmatpush2.msra.mxu0 0.0
    %292 = vmatprep.subr.mxu0 0.0
    %293 = vmatpush2.msra.mxu0 0.0
    %294 = vmatprep.subr.mxu0 0.0
    %295 = vmatpush2.msra.mxu0 0.0
    %296 = vmatprep.subr.mxu0 0.0
    %297 = vmatpush2.msra.mxu0 0.0
    %298 = vmatprep.subr.mxu0 0.0
    %299 = vmatpush2.msra.mxu0 0.0
    %300 = vmatprep.subr.mxu0 0.0
    %301 = vmatpush2.msra.mxu0 0.0
    %302 = vmatprep.subr.mxu0 0.0
    %303 = vmatpush2.msra.mxu0 0.0
    %304 = vmatprep.subr.mxu0 0.0
    %305 = vmatpush2.msra.mxu0 0.0
    %306 = vmatprep.subr.mxu0 0.0
    %307 = vmatpush2.msra.mxu0 0.0
    %308 = vmatprep.subr.mxu0 0.0
    %309 = vmatpush2.msra.mxu0 0.0
    %310 = vmatprep.subr.mxu0 0.0
    %311 = vmatpush2.msra.mxu0 0.0
    %312 = vmatprep.subr.mxu0 0.0
    %313 = vmatpush2.msra.mxu0 0.0
    %314 = vmatprep.subr.mxu0 0.0
    %315 = vmatpush2.msra.mxu0 0.0
    %316 = vmatprep.subr.mxu0 0.0
    %317 = vmatpush2.msra.mxu0 0.0
    %318 = vmatprep.mubr.f32.mxu0 0.0
    %319 = vmatmul.mubr.f32.gmra.mxu0 %v60
    %v320 = vpop.f32.mrf.mxu0
    %v321 = vadd.f32 %v208, %v320
    %v322 = vpop.f32.mrf.mxu0
    %v323 = vadd.f32 %v210, %v322
    %324 = vmatprep.mubr.f32.mxu0 0.0
    %325 = vmatmul.mubr.f32.gmra.mxu0 %v61
    %v326 = vpop.f32.mrf.mxu0
    %v327 = vadd.f32 %v214, %v326
    %v328 = vpop.f32.mrf.mxu0
    %v329 = vadd.f32 %v216, %v328
    %330 = vmatprep.mubr.f32.mxu0 0.0
    %331 = vmatmul.mubr.f32.gmra.mxu0 %v62
    %v332 = vpop.f32.mrf.mxu0
    %v333 = vadd.f32 %v220, %v332
    %v334 = vpop.f32.mrf.mxu0
    %v335 = vadd.f32 %v222, %v334
    %336 = vmatprep.mubr.f32.mxu0 0.0
    %337 = vmatmul.mubr.f32.gmra.mxu0 %v63
    %v338 = vpop.f32.mrf.mxu0
    %v339 = vadd.f32 %v226, %v338
    %v340 = vpop.f32.mrf.mxu0
    %v341 = vadd.f32 %v228, %v340
    %342 = vmatprep.mubr.f32.mxu0 0.0
    %343 = vmatmul.mubr.f32.gmra.mxu0 %v64
    %v344 = vpop.f32.mrf.mxu0
    %v345 = vadd.f32 %v232, %v344
    %v346 = vpop.f32.mrf.mxu0
    %v347 = vadd.f32 %v234, %v346
    %348 = vmatprep.mubr.f32.mxu0 0.0
    %349 = vmatmul.mubr.f32.gmra.mxu0 %v65
    %v350 = vpop.f32.mrf.mxu0
    %v351 = vadd.f32 %v238, %v350
    %v352 = vpop.f32.mrf.mxu0
    %v353 = vadd.f32 %v240, %v352
    %354 = vmatprep.mubr.f32.mxu0 0.0
    %355 = vmatmul.mubr.f32.gmra.mxu0 %v66
    %v356 = vpop.f32.mrf.mxu0
    %v357 = vadd.f32 %v244, %v356
    %v358 = vpop.f32.mrf.mxu0
    %v359 = vadd.f32 %v246, %v358
    %360 = vmatprep.mubr.f32.mxu0 0.0
    %361 = vmatmul.mubr.f32.gmra.mxu0 %v67
    %v362 = vpop.f32.mrf.mxu0
    %v363 = vadd.f32 %v250, %v362
    %v364 = vpop.f32.mrf.mxu0
    %v365 = vadd.f32 %v252, %v364
    %366 = vdwg.mxu0
    %v367 = vld [vmem:[%s0 + $0x2] sm:$0xff]
    %v368 = vld [vmem:[%s0 + $0xa] sm:$0xff]
    %v369 = vld [vmem:[%s0 + $0x12] sm:$0xff]
    %v370 = vld [vmem:[%s0 + $0x1a] sm:$0xff]
    %v371 = vld [vmem:[%s0 + $0x2a] sm:$0xff]
    %v372 = vld [vmem:[%s0 + $0x32] sm:$0xff]
    %v373 = vld [vmem:[%s0 + $0x3a] sm:$0xff]
    %v374 = vld [vmem:[%s0 + $0x42] sm:$0xff]
    %s375 = scalar_lea.vmem %s1, 512
    %v376 = vld [vmem:[%s375] sm:$0xff]
    %v377 = vld [vmem:[%s375 + $0x8] sm:$0xff]
    %v378 = vld [vmem:[%s375 + $0x10] sm:$0xff]
    %v379 = vld [vmem:[%s375 + $0x18] sm:$0xff]
    %v380 = vld [vmem:[%s375 + $0x20] sm:$0xff]
    %v381 = vld [vmem:[%s375 + $0x28] sm:$0xff]
    %v382 = vld [vmem:[%s375 + $0x30] sm:$0xff]
    %v383 = vld [vmem:[%s375 + $0x38] sm:$0xff]
    %v384 = vld [vmem:[%s375 + $0x40] sm:$0xff]
    %v385 = vld [vmem:[%s375 + $0x48] sm:$0xff]
    %v386 = vld [vmem:[%s375 + $0x50] sm:$0xff]
    %v387 = vld [vmem:[%s375 + $0x58] sm:$0xff]
    %v388 = vld [vmem:[%s375 + $0x60] sm:$0xff]
    %v389 = vld [vmem:[%s375 + $0x68] sm:$0xff]
    %v390 = vld [vmem:[%s375 + $0x70] sm:$0xff]
    %v391 = vld [vmem:[%s375 + $0x78] sm:$0xff]
    %v392 = vld [vmem:[%s375 + $0x80] sm:$0xff]
    %v393 = vld [vmem:[%s375 + $0x88] sm:$0xff]
    %v394 = vld [vmem:[%s375 + $0x90] sm:$0xff]
    %v395 = vld [vmem:[%s375 + $0x98] sm:$0xff]
    %v396 = vld [vmem:[%s375 + $0xa0] sm:$0xff]
    %v397 = vld [vmem:[%s375 + $0xa8] sm:$0xff]
    %v398 = vld [vmem:[%s375 + $0xb0] sm:$0xff]
    %v399 = vld [vmem:[%s375 + $0xb8] sm:$0xff]
    %v400 = vld [vmem:[%s375 + $0xc0] sm:$0xff]
    %v401 = vld [vmem:[%s375 + $0xc8] sm:$0xff]
    %v402 = vld [vmem:[%s375 + $0xd0] sm:$0xff]
    %v403 = vld [vmem:[%s375 + $0xd8] sm:$0xff]
    %v404 = vld [vmem:[%s375 + $0xe0] sm:$0xff]
    %v405 = vld [vmem:[%s375 + $0xe8] sm:$0xff]
    %v406 = vld [vmem:[%s375 + $0xf0] sm:$0xff]
    %v407 = vld [vmem:[%s375 + $0xf8] sm:$0xff]
    %408 = vmatprep.subr.mxu0 %v407
    %409 = vmatpush1.msra.mxu0 %v406
    %410 = vmatprep.subr.mxu0 %v405
    %411 = vmatpush1.msra.mxu0 %v404
    %412 = vmatprep.subr.mxu0 %v403
    %413 = vmatpush1.msra.mxu0 %v402
    %414 = vmatprep.subr.mxu0 %v401
    %415 = vmatpush1.msra.mxu0 %v400
    %416 = vmatprep.subr.mxu0 %v399
    %417 = vmatpush1.msra.mxu0 %v398
    %418 = vmatprep.subr.mxu0 %v397
    %419 = vmatpush1.msra.mxu0 %v396
    %420 = vmatprep.subr.mxu0 %v395
    %421 = vmatpush1.msra.mxu0 %v394
    %422 = vmatprep.subr.mxu0 %v393
    %423 = vmatpush1.msra.mxu0 %v392
    %424 = vmatprep.subr.mxu0 %v391
    %425 = vmatpush1.msra.mxu0 %v390
    %426 = vmatprep.subr.mxu0 %v389
    %427 = vmatpush1.msra.mxu0 %v388
    %428 = vmatprep.subr.mxu0 %v387
    %429 = vmatpush1.msra.mxu0 %v386
    %430 = vmatprep.subr.mxu0 %v385
    %431 = vmatpush1.msra.mxu0 %v384
    %432 = vmatprep.subr.mxu0 %v383
    %433 = vmatpush1.msra.mxu0 %v382
    %434 = vmatprep.subr.mxu0 %v381
    %435 = vmatpush1.msra.mxu0 %v380
    %436 = vmatprep.subr.mxu0 %v379
    %437 = vmatpush1.msra.mxu0 %v378
    %438 = vmatprep.subr.mxu0 %v377
    %439 = vmatpush1.msra.mxu0 %v376
    %440 = vmatprep.subr.mxu0 0.0
    %441 = vmatpush2.msra.mxu0 0.0
    %442 = vmatprep.subr.mxu0 0.0
    %443 = vmatpush2.msra.mxu0 0.0
    %444 = vmatprep.subr.mxu0 0.0
    %445 = vmatpush2.msra.mxu0 0.0
    %446 = vmatprep.subr.mxu0 0.0
    %447 = vmatpush2.msra.mxu0 0.0
    %448 = vmatprep.subr.mxu0 0.0
    %449 = vmatpush2.msra.mxu0 0.0
    %450 = vmatprep.subr.mxu0 0.0
    %451 = vmatpush2.msra.mxu0 0.0
    %452 = vmatprep.subr.mxu0 0.0
    %453 = vmatpush2.msra.mxu0 0.0
    %454 = vmatprep.subr.mxu0 0.0
    %455 = vmatpush2.msra.mxu0 0.0
    %456 = vmatprep.subr.mxu0 0.0
    %457 = vmatpush2.msra.mxu0 0.0
    %458 = vmatprep.subr.mxu0 0.0
    %459 = vmatpush2.msra.mxu0 0.0
    %460 = vmatprep.subr.mxu0 0.0
    %461 = vmatpush2.msra.mxu0 0.0
    %462 = vmatprep.subr.mxu0 0.0
    %463 = vmatpush2.msra.mxu0 0.0
    %464 = vmatprep.subr.mxu0 0.0
    %465 = vmatpush2.msra.mxu0 0.0
    %466 = vmatprep.subr.mxu0 0.0
    %467 = vmatpush2.msra.mxu0 0.0
    %468 = vmatprep.subr.mxu0 0.0
    %469 = vmatpush2.msra.mxu0 0.0
    %470 = vmatprep.subr.mxu0 0.0
    %471 = vmatpush2.msra.mxu0 0.0
    %472 = vmatprep.mubr.f32.mxu0 0.0
    %473 = vmatmul.mubr.f32.gmra.mxu0 %v367
    %v474 = vpop.f32.mrf.mxu0
    %v475 = vadd.f32 0.0, %v474
    %v476 = vpop.f32.mrf.mxu0
    %v477 = vadd.f32 0.0, %v476
    %478 = vmatprep.mubr.f32.mxu0 0.0
    %479 = vmatmul.mubr.f32.gmra.mxu0 %v368
    %v480 = vpop.f32.mrf.mxu0
    %v481 = vadd.f32 0.0, %v480
    %v482 = vpop.f32.mrf.mxu0
    %v483 = vadd.f32 0.0, %v482
    %484 = vmatprep.mubr.f32.mxu0 0.0
    %485 = vmatmul.mubr.f32.gmra.mxu0 %v369
    %v486 = vpop.f32.mrf.mxu0
    %v487 = vadd.f32 0.0, %v486
    %v488 = vpop.f32.mrf.mxu0
    %v489 = vadd.f32 0.0, %v488
    %490 = vmatprep.mubr.f32.mxu0 0.0
    %491 = vmatmul.mubr.f32.gmra.mxu0 %v370
    %v492 = vpop.f32.mrf.mxu0
    %v493 = vadd.f32 0.0, %v492
    %v494 = vpop.f32.mrf.mxu0
    %v495 = vadd.f32 0.0, %v494
    %496 = vmatprep.mubr.f32.mxu0 0.0
    %497 = vmatmul.mubr.f32.gmra.mxu0 %v371
    %v498 = vpop.f32.mrf.mxu0
    %v499 = vadd.f32 0.0, %v498
    %v500 = vpop.f32.mrf.mxu0
    %v501 = vadd.f32 0.0, %v500
    %502 = vmatprep.mubr.f32.mxu0 0.0
    %503 = vmatmul.mubr.f32.gmra.mxu0 %v372
    %v504 = vpop.f32.mrf.mxu0
    %v505 = vadd.f32 0.0, %v504
    %v506 = vpop.f32.mrf.mxu0
    %v507 = vadd.f32 0.0, %v506
    %508 = vmatprep.mubr.f32.mxu0 0.0
    %509 = vmatmul.mubr.f32.gmra.mxu0 %v373
    %v510 = vpop.f32.mrf.mxu0
    %v511 = vadd.f32 0.0, %v510
    %v512 = vpop.f32.mrf.mxu0
    %v513 = vadd.f32 0.0, %v512
    %514 = vmatprep.mubr.f32.mxu0 0.0
    %515 = vmatmul.mubr.f32.gmra.mxu0 %v374
    %v516 = vpop.f32.mrf.mxu0
    %v517 = vadd.f32 0.0, %v516
    %v518 = vpop.f32.mrf.mxu0
    %v519 = vadd.f32 0.0, %v518
    %520 = vdwg.mxu0
    %v521 = vadd.f32 %v321, %v475
    %v522 = vadd.f32 %v323, %v477
    %v523 = vadd.f32 %v327, %v481
    %v524 = vadd.f32 %v329, %v483
    %v525 = vadd.f32 %v333, %v487
    %v526 = vadd.f32 %v335, %v489
    %v527 = vadd.f32 %v339, %v493
    %v528 = vadd.f32 %v341, %v495
    %v529 = vadd.f32 %v345, %v499
    %v530 = vadd.f32 %v347, %v501
    %v531 = vadd.f32 %v351, %v505
    %v532 = vadd.f32 %v353, %v507
    %v533 = vadd.f32 %v357, %v511
    %v534 = vadd.f32 %v359, %v513
    %v535 = vadd.f32 %v363, %v517
    %v536 = vadd.f32 %v365, %v519
    %v537 = vadd.f32 %v521, %v523
    %v538 = vadd.f32 %v537, %v525
    %v539 = vadd.f32 %v538, %v527
    %v540 = vadd.f32 %v539, %v529
    %v541 = vadd.f32 %v540, %v531
    %v542 = vadd.f32 %v541, %v533
    %v543 = vadd.f32 %v542, %v535
    %v544 = vrot.slane %v543, 4
    %v545 = vadd.f32 %v543, %v544
    %v546 = vrot.slane %v545, 2
    %v547 = vadd.f32 %v545, %v546
    %v548 = vrot.slane %v547, 1
    %v549 = vadd.f32 %v547, %v548
    %v550 = vadd.f32 %v522, %v524
    %v551 = vadd.f32 %v550, %v526
    %v552 = vadd.f32 %v551, %v528
    %v553 = vadd.f32 %v552, %v530
    %v554 = vadd.f32 %v553, %v532
    %v555 = vadd.f32 %v554, %v534
    %v556 = vadd.f32 %v555, %v536
    %v557 = vrot.slane %v556, 4
    %v558 = vadd.f32 %v556, %v557
    %v559 = vrot.slane %v558, 2
    %v560 = vadd.f32 %v558, %v559
    %v561 = vrot.slane %v560, 1
    %v562 = vadd.f32 %v560, %v561
    %v563 = vmul.f32 %v521, %v521
    %v564 = vmul.f32 %v522, %v522
    %v565 = vmul.f32 %v523, %v523
    %v566 = vmul.f32 %v524, %v524
    %v567 = vmul.f32 %v525, %v525
    %v568 = vmul.f32 %v526, %v526
    %v569 = vmul.f32 %v527, %v527
    %v570 = vmul.f32 %v528, %v528
    %v571 = vmul.f32 %v529, %v529
    %v572 = vmul.f32 %v530, %v530
    %v573 = vmul.f32 %v531, %v531
    %v574 = vmul.f32 %v532, %v532
    %v575 = vmul.f32 %v533, %v533
    %v576 = vmul.f32 %v534, %v534
    %v577 = vmul.f32 %v535, %v535
    %v578 = vmul.f32 %v536, %v536
    %v579 = vadd.f32 %v563, %v565
    %v580 = vadd.f32 %v579, %v567
    %v581 = vadd.f32 %v580, %v569
    %v582 = vadd.f32 %v581, %v571
    %v583 = vadd.f32 %v582, %v573
    %v584 = vadd.f32 %v583, %v575
    %v585 = vadd.f32 %v584, %v577
    %v586 = vrot.slane %v585, 4
    %v587 = vadd.f32 %v585, %v586
    %v588 = vrot.slane %v587, 2
    %v589 = vadd.f32 %v587, %v588
    %v590 = vrot.slane %v589, 1
    %v591 = vadd.f32 %v589, %v590
    %v592 = vadd.f32 %v564, %v566
    %v593 = vadd.f32 %v592, %v568
    %v594 = vadd.f32 %v593, %v570
    %v595 = vadd.f32 %v594, %v572
    %v596 = vadd.f32 %v595, %v574
    %v597 = vadd.f32 %v596, %v576
    %v598 = vadd.f32 %v597, %v578
    %v599 = vrot.slane %v598, 4
    %v600 = vadd.f32 %v598, %v599
    %v601 = vrot.slane %v600, 2
    %v602 = vadd.f32 %v600, %v601
    %v603 = vrot.slane %v602, 1
    %v604 = vadd.f32 %v602, %v603
    %v605 = vld [vmem:[%s4] sm:$0xff]
    %v606 = vld [vmem:[%s4 + $0x8] sm:$0xff]
    %v607 = vld [vmem:[%s4 + $0x10] sm:$0xff]
    %v608 = vld [vmem:[%s4 + $0x18] sm:$0xff]
    %v609 = vld [vmem:[%s4 + $0x20] sm:$0xff]
    %v610 = vld [vmem:[%s4 + $0x28] sm:$0xff]
    %v611 = vld [vmem:[%s4 + $0x30] sm:$0xff]
    %v612 = vld [vmem:[%s4 + $0x38] sm:$0xff]
    %v613 = vld [vmem:[%s4 + $0x40] sm:$0xff]
    %v614 = vld [vmem:[%s4 + $0x48] sm:$0xff]
    %v615 = vld [vmem:[%s4 + $0x50] sm:$0xff]
    %v616 = vld [vmem:[%s4 + $0x58] sm:$0xff]
    %v617 = vld [vmem:[%s4 + $0x60] sm:$0xff]
    %v618 = vld [vmem:[%s4 + $0x68] sm:$0xff]
    %v619 = vld [vmem:[%s4 + $0x70] sm:$0xff]
    %v620 = vld [vmem:[%s4 + $0x78] sm:$0xff]
    %v621 = vld [vmem:[%s4 + $0x80] sm:$0xff]
    %v622 = vld [vmem:[%s4 + $0x88] sm:$0xff]
    %v623 = vld [vmem:[%s4 + $0x90] sm:$0xff]
    %v624 = vld [vmem:[%s4 + $0x98] sm:$0xff]
    %v625 = vld [vmem:[%s4 + $0xa0] sm:$0xff]
    %v626 = vld [vmem:[%s4 + $0xa8] sm:$0xff]
    %v627 = vld [vmem:[%s4 + $0xb0] sm:$0xff]
    %v628 = vld [vmem:[%s4 + $0xb8] sm:$0xff]
    %v629 = vld [vmem:[%s4 + $0xc0] sm:$0xff]
    %v630 = vld [vmem:[%s4 + $0xc8] sm:$0xff]
    %v631 = vld [vmem:[%s4 + $0xd0] sm:$0xff]
    %v632 = vld [vmem:[%s4 + $0xd8] sm:$0xff]
    %v633 = vld [vmem:[%s4 + $0xe0] sm:$0xff]
    %v634 = vld [vmem:[%s4 + $0xe8] sm:$0xff]
    %v635 = vld [vmem:[%s4 + $0xf0] sm:$0xff]
    %v636 = vld [vmem:[%s4 + $0xf8] sm:$0xff]
    %637 = vmatprep.subr.mxu0 0.0
    %638 = vmatpush1.msra.mxu0 %v620
    %639 = vmatprep.subr.mxu0 0.0
    %640 = vmatpush1.msra.mxu0 %v619
    %641 = vmatprep.subr.mxu0 0.0
    %642 = vmatpush1.msra.mxu0 %v618
    %643 = vmatprep.subr.mxu0 0.0
    %644 = vmatpush1.msra.mxu0 %v617
    %645 = vmatprep.subr.mxu0 0.0
    %646 = vmatpush1.msra.mxu0 %v616
    %647 = vmatprep.subr.mxu0 0.0
    %648 = vmatpush1.msra.mxu0 %v615
    %649 = vmatprep.subr.mxu0 0.0
    %650 = vmatpush1.msra.mxu0 %v614
    %651 = vmatprep.subr.mxu0 0.0
    %652 = vmatpush1.msra.mxu0 %v613
    %653 = vmatprep.subr.mxu0 0.0
    %654 = vmatpush1.msra.mxu0 %v612
    %655 = vmatprep.subr.mxu0 0.0
    %656 = vmatpush1.msra.mxu0 %v611
    %657 = vmatprep.subr.mxu0 0.0
    %658 = vmatpush1.msra.mxu0 %v610
    %659 = vmatprep.subr.mxu0 0.0
    %660 = vmatpush1.msra.mxu0 %v609
    %661 = vmatprep.subr.mxu0 0.0
    %662 = vmatpush1.msra.mxu0 %v608
    %663 = vmatprep.subr.mxu0 0.0
    %664 = vmatpush1.msra.mxu0 %v607
    %665 = vmatprep.subr.mxu0 0.0
    %666 = vmatpush1.msra.mxu0 %v606
    %667 = vmatprep.subr.mxu0 0.0
    %668 = vmatpush1.msra.mxu0 %v605
    %669 = vmatprep.subr.mxu0 0.0
    %670 = vmatpush2.msra.mxu0 %v636
    %671 = vmatprep.subr.mxu0 0.0
    %672 = vmatpush2.msra.mxu0 %v635
    %673 = vmatprep.subr.mxu0 0.0
    %674 = vmatpush2.msra.mxu0 %v634
    %675 = vmatprep.subr.mxu0 0.0
    %676 = vmatpush2.msra.mxu0 %v633
    %677 = vmatprep.subr.mxu0 0.0
    %678 = vmatpush2.msra.mxu0 %v632
    %679 = vmatprep.subr.mxu0 0.0
    %680 = vmatpush2.msra.mxu0 %v631
    %681 = vmatprep.subr.mxu0 0.0
    %682 = vmatpush2.msra.mxu0 %v630
    %683 = vmatprep.subr.mxu0 0.0
    %684 = vmatpush2.msra.mxu0 %v629
    %685 = vmatprep.subr.mxu0 0.0
    %686 = vmatpush2.msra.mxu0 %v628
    %687 = vmatprep.subr.mxu0 0.0
    %688 = vmatpush2.msra.mxu0 %v627
    %689 = vmatprep.subr.mxu0 0.0
    %690 = vmatpush2.msra.mxu0 %v626
    %691 = vmatprep.subr.mxu0 0.0
    %692 = vmatpush2.msra.mxu0 %v625
    %693 = vmatprep.subr.mxu0 0.0
    %694 = vmatpush2.msra.mxu0 %v624
    %695 = vmatprep.subr.mxu0 0.0
    %696 = vmatpush2.msra.mxu0 %v623
    %697 = vmatprep.subr.mxu0 0.0
    %698 = vmatpush2.msra.mxu0 %v622
    %699 = vmatprep.subr.mxu0 0.0
    %700 = vmatpush2.msra.mxu0 %v621
    %701 = vmatprep.mubr.f32.mxu0 %v562
    %702 = vmatmul.mubr.f32.gmra.mxu0 %v549
    %v703 = vpop.f32.mrf.mxu0
    %v704 = vadd.f32 0.0, %v703
    %v705 = vpop.f32.mrf.mxu0
    %706 = vdwg.mxu0
    %v707 = vmul.f32 %v704, 0.00048828125
    %708 = vmatprep.subr.mxu0 0.0
    %709 = vmatpush1.msra.mxu0 %v620
    %710 = vmatprep.subr.mxu0 0.0
    %711 = vmatpush1.msra.mxu0 %v619
    %712 = vmatprep.subr.mxu0 0.0
    %713 = vmatpush1.msra.mxu0 %v618
    %714 = vmatprep.subr.mxu0 0.0
    %715 = vmatpush1.msra.mxu0 %v617
    %716 = vmatprep.subr.mxu0 0.0
    %717 = vmatpush1.msra.mxu0 %v616
    %718 = vmatprep.subr.mxu0 0.0
    %719 = vmatpush1.msra.mxu0 %v615
    %720 = vmatprep.subr.mxu0 0.0
    %721 = vmatpush1.msra.mxu0 %v614
    %722 = vmatprep.subr.mxu0 0.0
    %723 = vmatpush1.msra.mxu0 %v613
    %724 = vmatprep.subr.mxu0 0.0
    %725 = vmatpush1.msra.mxu0 %v612
    %726 = vmatprep.subr.mxu0 0.0
    %727 = vmatpush1.msra.mxu0 %v611
    %728 = vmatprep.subr.mxu0 0.0
    %729 = vmatpush1.msra.mxu0 %v610
    %730 = vmatprep.subr.mxu0 0.0
    %731 = vmatpush1.msra.mxu0 %v609
    %732 = vmatprep.subr.mxu0 0.0
    %733 = vmatpush1.msra.mxu0 %v608
    %734 = vmatprep.subr.mxu0 0.0
    %735 = vmatpush1.msra.mxu0 %v607
    %736 = vmatprep.subr.mxu0 0.0
    %737 = vmatpush1.msra.mxu0 %v606
    %738 = vmatprep.subr.mxu0 0.0
    %739 = vmatpush1.msra.mxu0 %v605
    %740 = vmatprep.subr.mxu0 0.0
    %741 = vmatpush2.msra.mxu0 %v636
    %742 = vmatprep.subr.mxu0 0.0
    %743 = vmatpush2.msra.mxu0 %v635
    %744 = vmatprep.subr.mxu0 0.0
    %745 = vmatpush2.msra.mxu0 %v634
    %746 = vmatprep.subr.mxu0 0.0
    %747 = vmatpush2.msra.mxu0 %v633
    %748 = vmatprep.subr.mxu0 0.0
    %749 = vmatpush2.msra.mxu0 %v632
    %750 = vmatprep.subr.mxu0 0.0
    %751 = vmatpush2.msra.mxu0 %v631
    %752 = vmatprep.subr.mxu0 0.0
    %753 = vmatpush2.msra.mxu0 %v630
    %754 = vmatprep.subr.mxu0 0.0
    %755 = vmatpush2.msra.mxu0 %v629
    %756 = vmatprep.subr.mxu0 0.0
    %757 = vmatpush2.msra.mxu0 %v628
    %758 = vmatprep.subr.mxu0 0.0
    %759 = vmatpush2.msra.mxu0 %v627
    %760 = vmatprep.subr.mxu0 0.0
    %761 = vmatpush2.msra.mxu0 %v626
    %762 = vmatprep.subr.mxu0 0.0
    %763 = vmatpush2.msra.mxu0 %v625
    %764 = vmatprep.subr.mxu0 0.0
    %765 = vmatpush2.msra.mxu0 %v624
    %766 = vmatprep.subr.mxu0 0.0
    %767 = vmatpush2.msra.mxu0 %v623
    %768 = vmatprep.subr.mxu0 0.0
    %769 = vmatpush2.msra.mxu0 %v622
    %770 = vmatprep.subr.mxu0 0.0
    %771 = vmatpush2.msra.mxu0 %v621
    %772 = vmatprep.mubr.f32.mxu0 %v604
    %773 = vmatmul.mubr.f32.gmra.mxu0 %v591
    %v774 = vpop.f32.mrf.mxu0
    %v775 = vadd.f32 0.0, %v774
    %v776 = vpop.f32.mrf.mxu0
    %777 = vdwg.mxu0
    %v778 = vmul.f32 %v775, 0.00048828125
    %v779 = vmul.f32 %v707, %v707
    %v780 = vsub.f32 %v778, %v779
    %v781 = vld [vmem:[%s10] sm:$0x1]
    %v782 = vadd.f32 %v780, 1e-05
    %v783 = vrsqrt.pop %v782
    %v784 = vmul.f32 %v781, %v783
    %v785 = vld [vmem:[%s11] sm:$0x1]
    %v786 = vmul.f32 %v707, %v784
    %v787 = vsub.f32 %v785, %v786
    %v788 = vld [vmem:[%s5] sm:$0xff]
    %v789 = vld [vmem:[%s5 + $0x8] sm:$0xff]
    %vm790 = vcmask 64512
    %v792 = vsel %vm790, %v784, 0
    %794 = vmatprep.subr.mxu0 0.0
    %795 = vmatpush1.msra.mxu0 0.0
    %796 = vmatprep.subr.mxu0 0.0
    %797 = vmatpush1.msra.mxu0 0.0
    %798 = vmatprep.subr.mxu0 0.0
    %799 = vmatpush1.msra.mxu0 0.0
    %800 = vmatprep.subr.mxu0 0.0
    %801 = vmatpush1.msra.mxu0 0.0
    %802 = vmatprep.subr.mxu0 0.0
    %803 = vmatpush1.msra.mxu0 0.0
    %804 = vmatprep.subr.mxu0 0.0
    %805 = vmatpush1.msra.mxu0 0.0
    %806 = vmatprep.subr.mxu0 0.0
    %807 = vmatpush1.msra.mxu0 0.0
    %808 = vmatprep.subr.mxu0 0.0
    %809 = vmatpush1.msra.mxu0 0.0
    %810 = vmatprep.subr.mxu0 0.0
    %811 = vmatpush1.msra.mxu0 0.0
    %812 = vmatprep.subr.mxu0 0.0
    %813 = vmatpush1.msra.mxu0 0.0
    %814 = vmatprep.subr.mxu0 0.0
    %815 = vmatpush1.msra.mxu0 0.0
    %816 = vmatprep.subr.mxu0 0.0
    %817 = vmatpush1.msra.mxu0 0.0
    %818 = vmatprep.subr.mxu0 0.0
    %819 = vmatpush1.msra.mxu0 0.0
    %820 = vmatprep.subr.mxu0 0.0
    %821 = vmatpush1.msra.mxu0 0.0
    %822 = vmatprep.subr.mxu0 0.0
    %823 = vmatpush1.msra.mxu0 0.0
    %824 = vmatprep.subr.mxu0 %v789
    %825 = vmatpush1.msra.mxu0 %v788
    %826 = vmatprep.subr.mxu0 0.0
    %827 = vmatpush2.msra.mxu0 0.0
    %828 = vmatprep.subr.mxu0 0.0
    %829 = vmatpush2.msra.mxu0 0.0
    %830 = vmatprep.subr.mxu0 0.0
    %831 = vmatpush2.msra.mxu0 0.0
    %832 = vmatprep.subr.mxu0 0.0
    %833 = vmatpush2.msra.mxu0 0.0
    %834 = vmatprep.subr.mxu0 0.0
    %835 = vmatpush2.msra.mxu0 0.0
    %836 = vmatprep.subr.mxu0 0.0
    %837 = vmatpush2.msra.mxu0 0.0
    %838 = vmatprep.subr.mxu0 0.0
    %839 = vmatpush2.msra.mxu0 0.0
    %840 = vmatprep.subr.mxu0 0.0
    %841 = vmatpush2.msra.mxu0 0.0
    %842 = vmatprep.subr.mxu0 0.0
    %843 = vmatpush2.msra.mxu0 0.0
    %844 = vmatprep.subr.mxu0 0.0
    %845 = vmatpush2.msra.mxu0 0.0
    %846 = vmatprep.subr.mxu0 0.0
    %847 = vmatpush2.msra.mxu0 0.0
    %848 = vmatprep.subr.mxu0 0.0
    %849 = vmatpush2.msra.mxu0 0.0
    %850 = vmatprep.subr.mxu0 0.0
    %851 = vmatpush2.msra.mxu0 0.0
    %852 = vmatprep.subr.mxu0 0.0
    %853 = vmatpush2.msra.mxu0 0.0
    %854 = vmatprep.subr.mxu0 0.0
    %855 = vmatpush2.msra.mxu0 0.0
    %856 = vmatprep.subr.mxu0 0.0
    %857 = vmatpush2.msra.mxu0 0.0
    %858 = vmatprep.mubr.f32.mxu0 0.0
    %859 = vmatmul.mubr.f32.gmra.mxu0 %v792
    %v860 = vpop.f32.mrf.mxu0
    %v861 = vadd.f32 0.0, %v860
    %v862 = vpop.f32.mrf.mxu0
    %v863 = vadd.f32 0.0, %v862
    %864 = vdwg.mxu0
    %v866 = vsel %vm790, %v787, 0
    %868 = vmatprep.subr.mxu0 0.0
    %869 = vmatpush1.msra.mxu0 0.0
    %870 = vmatprep.subr.mxu0 0.0
    %871 = vmatpush1.msra.mxu0 0.0
    %872 = vmatprep.subr.mxu0 0.0
    %873 = vmatpush1.msra.mxu0 0.0
    %874 = vmatprep.subr.mxu0 0.0
    %875 = vmatpush1.msra.mxu0 0.0
    %876 = vmatprep.subr.mxu0 0.0
    %877 = vmatpush1.msra.mxu0 0.0
    %878 = vmatprep.subr.mxu0 0.0
    %879 = vmatpush1.msra.mxu0 0.0
    %880 = vmatprep.subr.mxu0 0.0
    %881 = vmatpush1.msra.mxu0 0.0
    %882 = vmatprep.subr.mxu0 0.0
    %883 = vmatpush1.msra.mxu0 0.0
    %884 = vmatprep.subr.mxu0 0.0
    %885 = vmatpush1.msra.mxu0 0.0
    %886 = vmatprep.subr.mxu0 0.0
    %887 = vmatpush1.msra.mxu0 0.0
    %888 = vmatprep.subr.mxu0 0.0
    %889 = vmatpush1.msra.mxu0 0.0
    %890 = vmatprep.subr.mxu0 0.0
    %891 = vmatpush1.msra.mxu0 0.0
    %892 = vmatprep.subr.mxu0 0.0
    %893 = vmatpush1.msra.mxu0 0.0
    %894 = vmatprep.subr.mxu0 0.0
    %895 = vmatpush1.msra.mxu0 0.0
    %896 = vmatprep.subr.mxu0 0.0
    %897 = vmatpush1.msra.mxu0 0.0
    %898 = vmatprep.subr.mxu0 %v789
    %899 = vmatpush1.msra.mxu0 %v788
    %900 = vmatprep.subr.mxu0 0.0
    %901 = vmatpush2.msra.mxu0 0.0
    %902 = vmatprep.subr.mxu0 0.0
    %903 = vmatpush2.msra.mxu0 0.0
    %904 = vmatprep.subr.mxu0 0.0
    %905 = vmatpush2.msra.mxu0 0.0
    %906 = vmatprep.subr.mxu0 0.0
    %907 = vmatpush2.msra.mxu0 0.0
    %908 = vmatprep.subr.mxu0 0.0
    %909 = vmatpush2.msra.mxu0 0.0
    %910 = vmatprep.subr.mxu0 0.0
    %911 = vmatpush2.msra.mxu0 0.0
    %912 = vmatprep.subr.mxu0 0.0
    %913 = vmatpush2.msra.mxu0 0.0
    %914 = vmatprep.subr.mxu0 0.0
    %915 = vmatpush2.msra.mxu0 0.0
    %916 = vmatprep.subr.mxu0 0.0
    %917 = vmatpush2.msra.mxu0 0.0
    %918 = vmatprep.subr.mxu0 0.0
    %919 = vmatpush2.msra.mxu0 0.0
    %920 = vmatprep.subr.mxu0 0.0
    %921 = vmatpush2.msra.mxu0 0.0
    %922 = vmatprep.subr.mxu0 0.0
    %923 = vmatpush2.msra.mxu0 0.0
    %924 = vmatprep.subr.mxu0 0.0
    %925 = vmatpush2.msra.mxu0 0.0
    %926 = vmatprep.subr.mxu0 0.0
    %927 = vmatpush2.msra.mxu0 0.0
    %928 = vmatprep.subr.mxu0 0.0
    %929 = vmatpush2.msra.mxu0 0.0
    %930 = vmatprep.subr.mxu0 0.0
    %931 = vmatpush2.msra.mxu0 0.0
    %932 = vmatprep.mubr.f32.mxu0 0.0
    %933 = vmatmul.mubr.f32.gmra.mxu0 %v866
    %v934 = vpop.f32.mrf.mxu0
    %v935 = vadd.f32 0.0, %v934
    %v936 = vpop.f32.mrf.mxu0
    %v937 = vadd.f32 0.0, %v936
    %938 = vdwg.mxu0
    %v939 = vlaneseq
    %v940 = vshrl.u32 %v939, 7
    %v941 = vsub.s32 0, %v940
    %v942 = vrot.slane %v861, %v941
    %v943 = vlaneseq
    %v944 = vshrl.u32 %v943, 7
    %v945 = vsub.s32 0, %v944
    %v946 = vrot.slane %v863, %v945
    %v947 = vmul.f32 %v521, %v942
    %v948 = vmul.f32 %v522, %v946
    %v949 = vmul.f32 %v523, %v942
    %v950 = vmul.f32 %v524, %v946
    %v951 = vmul.f32 %v525, %v942
    %v952 = vmul.f32 %v526, %v946
    %v953 = vmul.f32 %v527, %v942
    %v954 = vmul.f32 %v528, %v946
    %v955 = vmul.f32 %v529, %v942
    %v956 = vmul.f32 %v530, %v946
    %v957 = vmul.f32 %v531, %v942
    %v958 = vmul.f32 %v532, %v946
    %v959 = vmul.f32 %v533, %v942
    %v960 = vmul.f32 %v534, %v946
    %v961 = vmul.f32 %v535, %v942
    %v962 = vmul.f32 %v536, %v946
    %v963 = vlaneseq
    %v964 = vshrl.u32 %v963, 7
    %v965 = vsub.s32 0, %v964
    %v966 = vrot.slane %v935, %v965
    %v967 = vlaneseq
    %v968 = vshrl.u32 %v967, 7
    %v969 = vsub.s32 0, %v968
    %v970 = vrot.slane %v937, %v969
    %v971 = vadd.f32 %v947, %v966
    %v972 = vadd.f32 %v948, %v970
    %v973 = vadd.f32 %v949, %v966
    %v974 = vadd.f32 %v950, %v970
    %v975 = vadd.f32 %v951, %v966
    %v976 = vadd.f32 %v952, %v970
    %v977 = vadd.f32 %v953, %v966
    %v978 = vadd.f32 %v954, %v970
    %v979 = vadd.f32 %v955, %v966
    %v980 = vadd.f32 %v956, %v970
    %v981 = vadd.f32 %v957, %v966
    %v982 = vadd.f32 %v958, %v970
    %v983 = vadd.f32 %v959, %v966
    %v984 = vadd.f32 %v960, %v970
    %v985 = vadd.f32 %v961, %v966
    %v986 = vadd.f32 %v962, %v970
    %v987 = vmax.f32 %v971, 0.0
    %v988 = vmax.f32 %v972, 0.0
    %v989 = vmax.f32 %v973, 0.0
    %v990 = vmax.f32 %v974, 0.0
    %v991 = vmax.f32 %v975, 0.0
    %v992 = vmax.f32 %v976, 0.0
    %v993 = vmax.f32 %v977, 0.0
    %v994 = vmax.f32 %v978, 0.0
    %v995 = vmax.f32 %v979, 0.0
    %v996 = vmax.f32 %v980, 0.0
    %v997 = vmax.f32 %v981, 0.0
    %v998 = vmax.f32 %v982, 0.0
    %v999 = vmax.f32 %v983, 0.0
    %v1000 = vmax.f32 %v984, 0.0
    %v1001 = vmax.f32 %v985, 0.0
    %v1002 = vmax.f32 %v986, 0.0
    %v1003 = vlaneseq
    %vm1004 = vcmp.ge.s32.totalorder %v1003, 0
    %vm1005 = vcmp.lt.s32.totalorder %v1003, 280
    %vm1006 = vmand %vm1004, %vm1005
    %1007 = vst.msk [vmem:[#allocation2] ss:$8 sm:$0x7] %vm1006, 0.0
    %1008 = vst.msk [vmem:[#allocation2] ss:$8 sm:$0x0] %vm1006, 0.0
    %s1009 = scalar_lea.vmem [#allocation2], 72
    %1010 = vst.msk [vmem:[%s1009] ss:$8 sm:$0x7] %vm1006, 0.0
    %1011 = vst.msk [vmem:[%s1009] ss:$8 sm:$0x0] %vm1006, 0.0
    %s1012 = scalar_lea.vmem [#allocation2], 49
    %1013 = vst.msk [vmem:[%s1012] ss:$8 sm:$0x7] %vm1006, 0.0
    %1014 = vst.msk [vmem:[%s1012] ss:$8 sm:$0x0] %vm1006, 0.0
    %s1015 = scalar_lea.vmem [#allocation2], 121
    %1016 = vst.msk [vmem:[%s1015] ss:$8 sm:$0x7] %vm1006, 0.0
    %1017 = vst.msk [vmem:[%s1015] ss:$8 sm:$0x0] %vm1006, 0.0
    %vm1018 = vcmask 130048
    %1019 = vst.msk [vmem:[#allocation2] sm:$0xff] %vm1018, 0.0
    %1020 = vst.msk [vmem:[#allocation2 + $0x18] sm:$0xff] %vm1018, 0.0
    %vm1021 = vcmask 123904
    %1022 = vst.msk [vmem:[#allocation2 + $0x30] sm:$0x3] %vm1021, 0.0
    %1023 = vst.msk [vmem:[#allocation2 + $0x48] sm:$0xff] %vm1018, 0.0
    %1024 = vst.msk [vmem:[#allocation2 + $0x60] sm:$0xff] %vm1018, 0.0
    %1025 = vst.msk [vmem:[#allocation2 + $0x78] sm:$0x3] %vm1021, 0.0
    %vm1026 = vcmask 195648
    %1027 = vst.msk [vmem:[#allocation2 + $0x10] sm:$0xff] %vm1026, 0.0
    %1028 = vst.msk [vmem:[#allocation2 + $0x28] sm:$0xff] %vm1026, 0.0
    %vm1029 = vcmask 189504
    %1030 = vst.msk [vmem:[#allocation2 + $0x40] sm:$0x3] %vm1029, 0.0
    %1031 = vst.msk [vmem:[#allocation2 + $0x58] sm:$0xff] %vm1026, 0.0
    %1032 = vst.msk [vmem:[#allocation2 + $0x70] sm:$0xff] %vm1026, 0.0
    %1033 = vst.msk [vmem:[#allocation2 + $0x88] sm:$0x3] %vm1029, 0.0
    %v1050 = vcombine.low %v987, %v988
    %v1051 = vcombine.high %v987, %v988
    %v1053 = vunpack.c.l.s4 1983009808
    %v1054 = vunpack.c.0.s8 %v1053
    %v1055 = vlaneseq
    %v1056 = vshrl.u32 %v1055, 7
    %v1057 = vsub.s32 %v1054, %v1056
    %v1058 = vrot.slane %v1050, %v1057
    %v1060 = vunpack.c.l.s4 1983009808
    %v1061 = vunpack.c.0.s8 %v1060
    %v1062 = vlaneseq
    %v1063 = vshrl.u32 %v1062, 7
    %v1064 = vsub.s32 %v1061, %v1063
    %v1065 = vrot.slane %v1051, %v1064
    %v1066 = vcombine.high %v1058, %v1058
    %v1067 = vcombine.high %v1065, %v1065
    %v1068 = vcombine.low %v989, %v990
    %v1069 = vcombine.high %v989, %v990
    %v1071 = vunpack.c.l.s4 1983009808
    %v1072 = vunpack.c.0.s8 %v1071
    %v1073 = vlaneseq
    %v1074 = vshrl.u32 %v1073, 7
    %v1075 = vsub.s32 %v1072, %v1074
    %v1076 = vrot.slane %v1068, %v1075
    %v1078 = vunpack.c.l.s4 1983009808
    %v1079 = vunpack.c.0.s8 %v1078
    %v1080 = vlaneseq
    %v1081 = vshrl.u32 %v1080, 7
    %v1082 = vsub.s32 %v1079, %v1081
    %v1083 = vrot.slane %v1069, %v1082
    %v1084 = vcombine.high %v1076, %v1076
    %v1085 = vcombine.high %v1083, %v1083
    %v1086 = vcombine.low %v991, %v992
    %v1087 = vcombine.high %v991, %v992
    %v1089 = vunpack.c.l.s4 1983009808
    %v1090 = vunpack.c.0.s8 %v1089
    %v1091 = vlaneseq
    %v1092 = vshrl.u32 %v1091, 7
    %v1093 = vsub.s32 %v1090, %v1092
    %v1094 = vrot.slane %v1086, %v1093
    %v1096 = vunpack.c.l.s4 1983009808
    %v1097 = vunpack.c.0.s8 %v1096
    %v1098 = vlaneseq
    %v1099 = vshrl.u32 %v1098, 7
    %v1100 = vsub.s32 %v1097, %v1099
    %v1101 = vrot.slane %v1087, %v1100
    %v1102 = vcombine.high %v1094, %v1094
    %v1103 = vcombine.high %v1101, %v1101
    %v1104 = vcombine.low %v993, %v994
    %v1105 = vcombine.high %v993, %v994
    %v1107 = vunpack.c.l.s4 1983009808
    %v1108 = vunpack.c.0.s8 %v1107
    %v1109 = vlaneseq
    %v1110 = vshrl.u32 %v1109, 7
    %v1111 = vsub.s32 %v1108, %v1110
    %v1112 = vrot.slane %v1104, %v1111
    %v1114 = vunpack.c.l.s4 1983009808
    %v1115 = vunpack.c.0.s8 %v1114
    %v1116 = vlaneseq
    %v1117 = vshrl.u32 %v1116, 7
    %v1118 = vsub.s32 %v1115, %v1117
    %v1119 = vrot.slane %v1105, %v1118
    %v1120 = vcombine.high %v1112, %v1112
    %v1121 = vcombine.high %v1119, %v1119
    %v1122 = vcombine.low %v995, %v996
    %v1123 = vcombine.high %v995, %v996
    %v1125 = vunpack.c.l.s4 1983009808
    %v1126 = vunpack.c.0.s8 %v1125
    %v1127 = vlaneseq
    %v1128 = vshrl.u32 %v1127, 7
    %v1129 = vsub.s32 %v1126, %v1128
    %v1130 = vrot.slane %v1122, %v1129
    %v1132 = vunpack.c.l.s4 1983009808
    %v1133 = vunpack.c.0.s8 %v1132
    %v1134 = vlaneseq
    %v1135 = vshrl.u32 %v1134, 7
    %v1136 = vsub.s32 %v1133, %v1135
    %v1137 = vrot.slane %v1123, %v1136
    %v1138 = vcombine.high %v1130, %v1130
    %v1139 = vcombine.high %v1137, %v1137
    %v1140 = vcombine.low %v997, %v998
    %v1141 = vcombine.high %v997, %v998
    %v1143 = vunpack.c.l.s4 1983009808
    %v1144 = vunpack.c.0.s8 %v1143
    %v1145 = vlaneseq
    %v1146 = vshrl.u32 %v1145, 7
    %v1147 = vsub.s32 %v1144, %v1146
    %v1148 = vrot.slane %v1140, %v1147
    %v1150 = vunpack.c.l.s4 1983009808
    %v1151 = vunpack.c.0.s8 %v1150
    %v1152 = vlaneseq
    %v1153 = vshrl.u32 %v1152, 7
    %v1154 = vsub.s32 %v1151, %v1153
    %v1155 = vrot.slane %v1141, %v1154
    %v1156 = vcombine.high %v1148, %v1148
    %v1157 = vcombine.high %v1155, %v1155
    %v1158 = vcombine.low %v999, %v1000
    %v1159 = vcombine.high %v999, %v1000
    %v1161 = vunpack.c.l.s4 1983009808
    %v1162 = vunpack.c.0.s8 %v1161
    %v1163 = vlaneseq
    %v1164 = vshrl.u32 %v1163, 7
    %v1165 = vsub.s32 %v1162, %v1164
    %v1166 = vrot.slane %v1158, %v1165
    %v1168 = vunpack.c.l.s4 1983009808
    %v1169 = vunpack.c.0.s8 %v1168
    %v1170 = vlaneseq
    %v1171 = vshrl.u32 %v1170, 7
    %v1172 = vsub.s32 %v1169, %v1171
    %v1173 = vrot.slane %v1159, %v1172
    %v1174 = vcombine.high %v1166, %v1166
    %v1175 = vcombine.high %v1173, %v1173
    %v1176 = vcombine.low %v1001, %v1002
    %v1177 = vcombine.high %v1001, %v1002
    %v1179 = vunpack.c.l.s4 1983009808
    %v1180 = vunpack.c.0.s8 %v1179
    %v1181 = vlaneseq
    %v1182 = vshrl.u32 %v1181, 7
    %v1183 = vsub.s32 %v1180, %v1182
    %v1184 = vrot.slane %v1176, %v1183
    %v1186 = vunpack.c.l.s4 1983009808
    %v1187 = vunpack.c.0.s8 %v1186
    %v1188 = vlaneseq
    %v1189 = vshrl.u32 %v1188, 7
    %v1190 = vsub.s32 %v1187, %v1189
    %v1191 = vrot.slane %v1177, %v1190
    %v1192 = vcombine.high %v1184, %v1184
    %v1193 = vcombine.high %v1191, %v1191
    %v1226 = vrot.slane %v1058, 7
    %v1227 = vrot.slane %v1226, 2
    %v1228 = vrot.slane %v1066, 7
    %v1229 = vrot.slane %v1228, 2
    %v1230 = vrot.slane %v1065, 7
    %v1231 = vrot.slane %v1230, 2
    %v1232 = vrot.slane %v1067, 7
    %v1233 = vrot.slane %v1232, 2
    %v1234 = vrot.slane %v1076, 7
    %v1235 = vrot.slane %v1234, 2
    %v1236 = vrot.slane %v1084, 7
    %v1237 = vrot.slane %v1236, 2
    %v1238 = vrot.slane %v1083, 7
    %v1239 = vrot.slane %v1238, 2
    %v1240 = vrot.slane %v1085, 7
    %v1241 = vrot.slane %v1240, 2
    %v1242 = vrot.slane %v1094, 7
    %v1243 = vrot.slane %v1242, 2
    %v1244 = vrot.slane %v1102, 7
    %v1245 = vrot.slane %v1244, 2
    %v1246 = vrot.slane %v1101, 7
    %v1247 = vrot.slane %v1246, 2
    %v1248 = vrot.slane %v1103, 7
    %v1249 = vrot.slane %v1248, 2
    %v1250 = vrot.slane %v1112, 7
    %v1251 = vrot.slane %v1250, 2
    %v1252 = vrot.slane %v1120, 7
    %v1253 = vrot.slane %v1252, 2
    %v1254 = vrot.slane %v1119, 7
    %v1255 = vrot.slane %v1254, 2
    %v1256 = vrot.slane %v1121, 7
    %v1257 = vrot.slane %v1256, 2
    %v1258 = vrot.slane %v1130, 7
    %v1259 = vrot.slane %v1258, 2
    %v1260 = vrot.slane %v1138, 7
    %v1261 = vrot.slane %v1260, 2
    %v1262 = vrot.slane %v1137, 7
    %v1263 = vrot.slane %v1262, 2
    %v1264 = vrot.slane %v1139, 7
    %v1265 = vrot.slane %v1264, 2
    %v1266 = vrot.slane %v1148, 7
    %v1267 = vrot.slane %v1266, 2
    %v1268 = vrot.slane %v1156, 7
    %v1269 = vrot.slane %v1268, 2
    %v1270 = vrot.slane %v1155, 7
    %v1271 = vrot.slane %v1270, 2
    %v1272 = vrot.slane %v1157, 7
    %v1273 = vrot.slane %v1272, 2
    %v1274 = vrot.slane %v1166, 7
    %v1275 = vrot.slane %v1274, 2
    %v1276 = vrot.slane %v1174, 7
    %v1277 = vrot.slane %v1276, 2
    %v1278 = vrot.slane %v1173, 7
    %v1279 = vrot.slane %v1278, 2
    %v1280 = vrot.slane %v1175, 7
    %v1281 = vrot.slane %v1280, 2
    %v1282 = vrot.slane %v1184, 7
    %v1283 = vrot.slane %v1282, 2
    %v1284 = vrot.slane %v1192, 7
    %v1285 = vrot.slane %v1284, 2
    %v1286 = vrot.slane %v1191, 7
    %v1287 = vrot.slane %v1286, 2
    %v1288 = vrot.slane %v1193, 7
    %v1289 = vrot.slane %v1288, 2
    %v1322 = vmax.f32 %v1058, %v1227
    %v1323 = vmax.f32 %v1066, %v1229
    %v1324 = vmax.f32 %v1065, %v1231
    %v1325 = vmax.f32 %v1067, %v1233
    %v1326 = vmax.f32 %v1076, %v1235
    %v1327 = vmax.f32 %v1084, %v1237
    %v1328 = vmax.f32 %v1083, %v1239
    %v1329 = vmax.f32 %v1085, %v1241
    %v1330 = vmax.f32 %v1094, %v1243
    %v1331 = vmax.f32 %v1102, %v1245
    %v1332 = vmax.f32 %v1101, %v1247
    %v1333 = vmax.f32 %v1103, %v1249
    %v1334 = vmax.f32 %v1112, %v1251
    %v1335 = vmax.f32 %v1120, %v1253
    %v1336 = vmax.f32 %v1119, %v1255
    %v1337 = vmax.f32 %v1121, %v1257
    %v1338 = vmax.f32 %v1130, %v1259
    %v1339 = vmax.f32 %v1138, %v1261
    %v1340 = vmax.f32 %v1137, %v1263
    %v1341 = vmax.f32 %v1139, %v1265
    %v1342 = vmax.f32 %v1148, %v1267
    %v1343 = vmax.f32 %v1156, %v1269
    %v1344 = vmax.f32 %v1155, %v1271
    %v1345 = vmax.f32 %v1157, %v1273
    %v1346 = vmax.f32 %v1166, %v1275
    %v1347 = vmax.f32 %v1174, %v1277
    %v1348 = vmax.f32 %v1173, %v1279
    %v1349 = vmax.f32 %v1175, %v1281
    %v1350 = vmax.f32 %v1184, %v1283
    %v1351 = vmax.f32 %v1192, %v1285
    %v1352 = vmax.f32 %v1191, %v1287
    %v1353 = vmax.f32 %v1193, %v1289
    %1386 = vrot.lane.b32.xlu0 %v1322, 120
    %v1387 = vpop.permute.xlu0 %1386
    %1388 = vrot.lane.b32.xlu0 %v1323, 120
    %v1389 = vpop.permute.xlu0 %1388
    %1390 = vrot.lane.b32.xlu0 %v1324, 120
    %v1391 = vpop.permute.xlu0 %1390
    %1392 = vrot.lane.b32.xlu0 %v1325, 120
    %v1393 = vpop.permute.xlu0 %1392
    %1394 = vrot.lane.b32.xlu0 %v1326, 120
    %v1395 = vpop.permute.xlu0 %1394
    %1396 = vrot.lane.b32.xlu0 %v1327, 120
    %v1397 = vpop.permute.xlu0 %1396
    %1398 = vrot.lane.b32.xlu0 %v1328, 120
    %v1399 = vpop.permute.xlu0 %1398
    %1400 = vrot.lane.b32.xlu0 %v1329, 120
    %v1401 = vpop.permute.xlu0 %1400
    %1402 = vrot.lane.b32.xlu0 %v1330, 120
    %v1403 = vpop.permute.xlu0 %1402
    %1404 = vrot.lane.b32.xlu0 %v1331, 120
    %v1405 = vpop.permute.xlu0 %1404
    %1406 = vrot.lane.b32.xlu0 %v1332, 120
    %v1407 = vpop.permute.xlu0 %1406
    %1408 = vrot.lane.b32.xlu0 %v1333, 120
    %v1409 = vpop.permute.xlu0 %1408
    %1410 = vrot.lane.b32.xlu0 %v1334, 120
    %v1411 = vpop.permute.xlu0 %1410
    %1412 = vrot.lane.b32.xlu0 %v1335, 120
    %v1413 = vpop.permute.xlu0 %1412
    %1414 = vrot.lane.b32.xlu0 %v1336, 120
    %v1415 = vpop.permute.xlu0 %1414
    %1416 = vrot.lane.b32.xlu0 %v1337, 120
    %v1417 = vpop.permute.xlu0 %1416
    %1418 = vrot.lane.b32.xlu0 %v1338, 120
    %v1419 = vpop.permute.xlu0 %1418
    %1420 = vrot.lane.b32.xlu0 %v1339, 120
    %v1421 = vpop.permute.xlu0 %1420
    %1422 = vrot.lane.b32.xlu0 %v1340, 120
    %v1423 = vpop.permute.xlu0 %1422
    %1424 = vrot.lane.b32.xlu0 %v1341, 120
    %v1425 = vpop.permute.xlu0 %1424
    %1426 = vrot.lane.b32.xlu0 %v1342, 120
    %v1427 = vpop.permute.xlu0 %1426
    %1428 = vrot.lane.b32.xlu0 %v1343, 120
    %v1429 = vpop.permute.xlu0 %1428
    %1430 = vrot.lane.b32.xlu0 %v1344, 120
    %v1431 = vpop.permute.xlu0 %1430
    %1432 = vrot.lane.b32.xlu0 %v1345, 120
    %v1433 = vpop.permute.xlu0 %1432
    %1434 = vrot.lane.b32.xlu0 %v1346, 120
    %v1435 = vpop.permute.xlu0 %1434
    %1436 = vrot.lane.b32.xlu0 %v1347, 120
    %v1437 = vpop.permute.xlu0 %1436
    %1438 = vrot.lane.b32.xlu0 %v1348, 120
    %v1439 = vpop.permute.xlu0 %1438
    %1440 = vrot.lane.b32.xlu0 %v1349, 120
    %v1441 = vpop.permute.xlu0 %1440
    %1442 = vrot.lane.b32.xlu0 %v1350, 120
    %v1443 = vpop.permute.xlu0 %1442
    %1444 = vrot.lane.b32.xlu0 %v1351, 120
    %v1445 = vpop.permute.xlu0 %1444
    %1446 = vrot.lane.b32.xlu0 %v1352, 120
    %v1447 = vpop.permute.xlu0 %1446
    %1448 = vrot.lane.b32.xlu0 %v1353, 120
    %v1449 = vpop.permute.xlu0 %1448
    %v1450 = vrot.slane %v1387, 2
    %v1451 = vrot.slane %v1389, 2
    %v1452 = vrot.slane %v1391, 2
    %v1453 = vrot.slane %v1393, 2
    %v1454 = vrot.slane %v1395, 2
    %v1455 = vrot.slane %v1397, 2
    %v1456 = vrot.slane %v1399, 2
    %v1457 = vrot.slane %v1401, 2
    %v1458 = vrot.slane %v1403, 2
    %v1459 = vrot.slane %v1405, 2
    %v1460 = vrot.slane %v1407, 2
    %v1461 = vrot.slane %v1409, 2
    %v1462 = vrot.slane %v1411, 2
    %v1463 = vrot.slane %v1413, 2
    %v1464 = vrot.slane %v1415, 2
    %v1465 = vrot.slane %v1417, 2
    %v1466 = vrot.slane %v1419, 2
    %v1467 = vrot.slane %v1421, 2
    %v1468 = vrot.slane %v1423, 2
    %v1469 = vrot.slane %v1425, 2
    %v1470 = vrot.slane %v1427, 2
    %v1471 = vrot.slane %v1429, 2
    %v1472 = vrot.slane %v1431, 2
    %v1473 = vrot.slane %v1433, 2
    %v1474 = vrot.slane %v1435, 2
    %v1475 = vrot.slane %v1437, 2
    %v1476 = vrot.slane %v1439, 2
    %v1477 = vrot.slane %v1441, 2
    %v1478 = vrot.slane %v1443, 2
    %v1479 = vrot.slane %v1445, 2
    %v1480 = vrot.slane %v1447, 2
    %v1481 = vrot.slane %v1449, 2
    %vm1482 = vcmask 982016
    %v1483 = vsel %vm1482, %v1387, %v1450
    %v1484 = vsel %vm1482, %v1389, %v1451
    %v1485 = vsel %vm1482, %v1391, %v1452
    %v1486 = vsel %vm1482, %v1393, %v1453
    %v1487 = vsel %vm1482, %v1395, %v1454
    %v1488 = vsel %vm1482, %v1397, %v1455
    %v1489 = vsel %vm1482, %v1399, %v1456
    %v1490 = vsel %vm1482, %v1401, %v1457
    %v1491 = vsel %vm1482, %v1403, %v1458
    %v1492 = vsel %vm1482, %v1405, %v1459
    %v1493 = vsel %vm1482, %v1407, %v1460
    %v1494 = vsel %vm1482, %v1409, %v1461
    %v1495 = vsel %vm1482, %v1411, %v1462
    %v1496 = vsel %vm1482, %v1413, %v1463
    %v1497 = vsel %vm1482, %v1415, %v1464
    %v1498 = vsel %vm1482, %v1417, %v1465
    %v1499 = vsel %vm1482, %v1419, %v1466
    %v1500 = vsel %vm1482, %v1421, %v1467
    %v1501 = vsel %vm1482, %v1423, %v1468
    %v1502 = vsel %vm1482, %v1425, %v1469
    %v1503 = vsel %vm1482, %v1427, %v1470
    %v1504 = vsel %vm1482, %v1429, %v1471
    %v1505 = vsel %vm1482, %v1431, %v1472
    %v1506 = vsel %vm1482, %v1433, %v1473
    %v1507 = vsel %vm1482, %v1435, %v1474
    %v1508 = vsel %vm1482, %v1437, %v1475
    %v1509 = vsel %vm1482, %v1439, %v1476
    %v1510 = vsel %vm1482, %v1441, %v1477
    %v1511 = vsel %vm1482, %v1443, %v1478
    %v1512 = vsel %vm1482, %v1445, %v1479
    %v1513 = vsel %vm1482, %v1447, %v1480
    %v1514 = vsel %vm1482, %v1449, %v1481
    %v1547 = vmax.f32 %v1322, %v1483
    %v1548 = vmax.f32 %v1323, %v1484
    %v1549 = vmax.f32 %v1324, %v1485
    %v1550 = vmax.f32 %v1325, %v1486
    %v1551 = vmax.f32 %v1326, %v1487
    %v1552 = vmax.f32 %v1327, %v1488
    %v1553 = vmax.f32 %v1328, %v1489
    %v1554 = vmax.f32 %v1329, %v1490
    %v1555 = vmax.f32 %v1330, %v1491
    %v1556 = vmax.f32 %v1331, %v1492
    %v1557 = vmax.f32 %v1332, %v1493
    %v1558 = vmax.f32 %v1333, %v1494
    %v1559 = vmax.f32 %v1334, %v1495
    %v1560 = vmax.f32 %v1335, %v1496
    %v1561 = vmax.f32 %v1336, %v1497
    %v1562 = vmax.f32 %v1337, %v1498
    %v1563 = vmax.f32 %v1338, %v1499
    %v1564 = vmax.f32 %v1339, %v1500
    %v1565 = vmax.f32 %v1340, %v1501
    %v1566 = vmax.f32 %v1341, %v1502
    %v1567 = vmax.f32 %v1342, %v1503
    %v1568 = vmax.f32 %v1343, %v1504
    %v1569 = vmax.f32 %v1344, %v1505
    %v1570 = vmax.f32 %v1345, %v1506
    %v1571 = vmax.f32 %v1346, %v1507
    %v1572 = vmax.f32 %v1347, %v1508
    %v1573 = vmax.f32 %v1348, %v1509
    %v1574 = vmax.f32 %v1349, %v1510
    %v1575 = vmax.f32 %v1350, %v1511
    %v1576 = vmax.f32 %v1351, %v1512
    %v1577 = vmax.f32 %v1352, %v1513
    %v1578 = vmax.f32 %v1353, %v1514
    %v1611 = vlaneseq
    %v1612 = vshrl.u32 %v1611, 7
    %v1613 = vsub.s32 0, %v1612
    %v1614 = vrot.slane %v1547, %v1613
    %v1615 = vlaneseq
    %v1616 = vshrl.u32 %v1615, 7
    %v1617 = vsub.s32 2, %v1616
    %v1618 = vrot.slane %v1547, %v1617
    %v1619 = vlaneseq
    %v1620 = vshrl.u32 %v1619, 7
    %v1621 = vsub.s32 0, %v1620
    %v1622 = vrot.slane %v1548, %v1621
    %v1623 = vlaneseq
    %v1624 = vshrl.u32 %v1623, 7
    %v1625 = vsub.s32 2, %v1624
    %v1626 = vrot.slane %v1548, %v1625
    %v1627 = vlaneseq
    %v1628 = vshrl.u32 %v1627, 7
    %v1629 = vsub.s32 0, %v1628
    %v1630 = vrot.slane %v1549, %v1629
    %v1631 = vlaneseq
    %v1632 = vshrl.u32 %v1631, 7
    %v1633 = vsub.s32 2, %v1632
    %v1634 = vrot.slane %v1549, %v1633
    %v1635 = vlaneseq
    %v1636 = vshrl.u32 %v1635, 7
    %v1637 = vsub.s32 0, %v1636
    %v1638 = vrot.slane %v1550, %v1637
    %v1639 = vlaneseq
    %v1640 = vshrl.u32 %v1639, 7
    %v1641 = vsub.s32 2, %v1640
    %v1642 = vrot.slane %v1550, %v1641
    %v1643 = vlaneseq
    %v1644 = vshrl.u32 %v1643, 7
    %v1645 = vsub.s32 0, %v1644
    %v1646 = vrot.slane %v1551, %v1645
    %v1647 = vlaneseq
    %v1648 = vshrl.u32 %v1647, 7
    %v1649 = vsub.s32 2, %v1648
    %v1650 = vrot.slane %v1551, %v1649
    %v1651 = vlaneseq
    %v1652 = vshrl.u32 %v1651, 7
    %v1653 = vsub.s32 0, %v1652
    %v1654 = vrot.slane %v1552, %v1653
    %v1655 = vlaneseq
    %v1656 = vshrl.u32 %v1655, 7
    %v1657 = vsub.s32 2, %v1656
    %v1658 = vrot.slane %v1552, %v1657
    %v1659 = vlaneseq
    %v1660 = vshrl.u32 %v1659, 7
    %v1661 = vsub.s32 0, %v1660
    %v1662 = vrot.slane %v1553, %v1661
    %v1663 = vlaneseq
    %v1664 = vshrl.u32 %v1663, 7
    %v1665 = vsub.s32 2, %v1664
    %v1666 = vrot.slane %v1553, %v1665
    %v1667 = vlaneseq
    %v1668 = vshrl.u32 %v1667, 7
    %v1669 = vsub.s32 0, %v1668
    %v1670 = vrot.slane %v1554, %v1669
    %v1671 = vlaneseq
    %v1672 = vshrl.u32 %v1671, 7
    %v1673 = vsub.s32 2, %v1672
    %v1674 = vrot.slane %v1554, %v1673
    %v1675 = vlaneseq
    %v1676 = vshrl.u32 %v1675, 7
    %v1677 = vsub.s32 0, %v1676
    %v1678 = vrot.slane %v1555, %v1677
    %v1679 = vlaneseq
    %v1680 = vshrl.u32 %v1679, 7
    %v1681 = vsub.s32 2, %v1680
    %v1682 = vrot.slane %v1555, %v1681
    %v1683 = vlaneseq
    %v1684 = vshrl.u32 %v1683, 7
    %v1685 = vsub.s32 0, %v1684
    %v1686 = vrot.slane %v1556, %v1685
    %v1687 = vlaneseq
    %v1688 = vshrl.u32 %v1687, 7
    %v1689 = vsub.s32 2, %v1688
    %v1690 = vrot.slane %v1556, %v1689
    %v1691 = vlaneseq
    %v1692 = vshrl.u32 %v1691, 7
    %v1693 = vsub.s32 0, %v1692
    %v1694 = vrot.slane %v1557, %v1693
    %v1695 = vlaneseq
    %v1696 = vshrl.u32 %v1695, 7
    %v1697 = vsub.s32 2, %v1696
    %v1698 = vrot.slane %v1557, %v1697
    %v1699 = vlaneseq
    %v1700 = vshrl.u32 %v1699, 7
    %v1701 = vsub.s32 0, %v1700
    %v1702 = vrot.slane %v1558, %v1701
    %v1703 = vlaneseq
    %v1704 = vshrl.u32 %v1703, 7
    %v1705 = vsub.s32 2, %v1704
    %v1706 = vrot.slane %v1558, %v1705
    %v1707 = vlaneseq
    %v1708 = vshrl.u32 %v1707, 7
    %v1709 = vsub.s32 0, %v1708
    %v1710 = vrot.slane %v1559, %v1709
    %v1711 = vlaneseq
    %v1712 = vshrl.u32 %v1711, 7
    %v1713 = vsub.s32 2, %v1712
    %v1714 = vrot.slane %v1559, %v1713
    %v1715 = vlaneseq
    %v1716 = vshrl.u32 %v1715, 7
    %v1717 = vsub.s32 0, %v1716
    %v1718 = vrot.slane %v1560, %v1717
    %v1719 = vlaneseq
    %v1720 = vshrl.u32 %v1719, 7
    %v1721 = vsub.s32 2, %v1720
    %v1722 = vrot.slane %v1560, %v1721
    %v1723 = vlaneseq
    %v1724 = vshrl.u32 %v1723, 7
    %v1725 = vsub.s32 0, %v1724
    %v1726 = vrot.slane %v1561, %v1725
    %v1727 = vlaneseq
    %v1728 = vshrl.u32 %v1727, 7
    %v1729 = vsub.s32 2, %v1728
    %v1730 = vrot.slane %v1561, %v1729
    %v1731 = vlaneseq
    %v1732 = vshrl.u32 %v1731, 7
    %v1733 = vsub.s32 0, %v1732
    %v1734 = vrot.slane %v1562, %v1733
    %v1735 = vlaneseq
    %v1736 = vshrl.u32 %v1735, 7
    %v1737 = vsub.s32 2, %v1736
    %v1738 = vrot.slane %v1562, %v1737
    %v1739 = vlaneseq
    %v1740 = vshrl.u32 %v1739, 7
    %v1741 = vsub.s32 0, %v1740
    %v1742 = vrot.slane %v1563, %v1741
    %v1743 = vlaneseq
    %v1744 = vshrl.u32 %v1743, 7
    %v1745 = vsub.s32 2, %v1744
    %v1746 = vrot.slane %v1563, %v1745
    %v1747 = vlaneseq
    %v1748 = vshrl.u32 %v1747, 7
    %v1749 = vsub.s32 0, %v1748
    %v1750 = vrot.slane %v1564, %v1749
    %v1751 = vlaneseq
    %v1752 = vshrl.u32 %v1751, 7
    %v1753 = vsub.s32 2, %v1752
    %v1754 = vrot.slane %v1564, %v1753
    %v1755 = vlaneseq
    %v1756 = vshrl.u32 %v1755, 7
    %v1757 = vsub.s32 0, %v1756
    %v1758 = vrot.slane %v1565, %v1757
    %v1759 = vlaneseq
    %v1760 = vshrl.u32 %v1759, 7
    %v1761 = vsub.s32 2, %v1760
    %v1762 = vrot.slane %v1565, %v1761
    %v1763 = vlaneseq
    %v1764 = vshrl.u32 %v1763, 7
    %v1765 = vsub.s32 0, %v1764
    %v1766 = vrot.slane %v1566, %v1765
    %v1767 = vlaneseq
    %v1768 = vshrl.u32 %v1767, 7
    %v1769 = vsub.s32 2, %v1768
    %v1770 = vrot.slane %v1566, %v1769
    %v1771 = vlaneseq
    %v1772 = vshrl.u32 %v1771, 7
    %v1773 = vsub.s32 0, %v1772
    %v1774 = vrot.slane %v1567, %v1773
    %v1775 = vlaneseq
    %v1776 = vshrl.u32 %v1775, 7
    %v1777 = vsub.s32 2, %v1776
    %v1778 = vrot.slane %v1567, %v1777
    %v1779 = vlaneseq
    %v1780 = vshrl.u32 %v1779, 7
    %v1781 = vsub.s32 0, %v1780
    %v1782 = vrot.slane %v1568, %v1781
    %v1783 = vlaneseq
    %v1784 = vshrl.u32 %v1783, 7
    %v1785 = vsub.s32 2, %v1784
    %v1786 = vrot.slane %v1568, %v1785
    %v1787 = vlaneseq
    %v1788 = vshrl.u32 %v1787, 7
    %v1789 = vsub.s32 0, %v1788
    %v1790 = vrot.slane %v1569, %v1789
    %v1791 = vlaneseq
    %v1792 = vshrl.u32 %v1791, 7
    %v1793 = vsub.s32 2, %v1792
    %v1794 = vrot.slane %v1569, %v1793
    %v1795 = vlaneseq
    %v1796 = vshrl.u32 %v1795, 7
    %v1797 = vsub.s32 0, %v1796
    %v1798 = vrot.slane %v1570, %v1797
    %v1799 = vlaneseq
    %v1800 = vshrl.u32 %v1799, 7
    %v1801 = vsub.s32 2, %v1800
    %v1802 = vrot.slane %v1570, %v1801
    %v1803 = vlaneseq
    %v1804 = vshrl.u32 %v1803, 7
    %v1805 = vsub.s32 0, %v1804
    %v1806 = vrot.slane %v1571, %v1805
    %v1807 = vlaneseq
    %v1808 = vshrl.u32 %v1807, 7
    %v1809 = vsub.s32 2, %v1808
    %v1810 = vrot.slane %v1571, %v1809
    %v1811 = vlaneseq
    %v1812 = vshrl.u32 %v1811, 7
    %v1813 = vsub.s32 0, %v1812
    %v1814 = vrot.slane %v1572, %v1813
    %v1815 = vlaneseq
    %v1816 = vshrl.u32 %v1815, 7
    %v1817 = vsub.s32 2, %v1816
    %v1818 = vrot.slane %v1572, %v1817
    %v1819 = vlaneseq
    %v1820 = vshrl.u32 %v1819, 7
    %v1821 = vsub.s32 0, %v1820
    %v1822 = vrot.slane %v1573, %v1821
    %v1823 = vlaneseq
    %v1824 = vshrl.u32 %v1823, 7
    %v1825 = vsub.s32 2, %v1824
    %v1826 = vrot.slane %v1573, %v1825
    %v1827 = vlaneseq
    %v1828 = vshrl.u32 %v1827, 7
    %v1829 = vsub.s32 0, %v1828
    %v1830 = vrot.slane %v1574, %v1829
    %v1831 = vlaneseq
    %v1832 = vshrl.u32 %v1831, 7
    %v1833 = vsub.s32 2, %v1832
    %v1834 = vrot.slane %v1574, %v1833
    %v1835 = vlaneseq
    %v1836 = vshrl.u32 %v1835, 7
    %v1837 = vsub.s32 0, %v1836
    %v1838 = vrot.slane %v1575, %v1837
    %v1839 = vlaneseq
    %v1840 = vshrl.u32 %v1839, 7
    %v1841 = vsub.s32 2, %v1840
    %v1842 = vrot.slane %v1575, %v1841
    %v1843 = vlaneseq
    %v1844 = vshrl.u32 %v1843, 7
    %v1845 = vsub.s32 0, %v1844
    %v1846 = vrot.slane %v1576, %v1845
    %v1847 = vlaneseq
    %v1848 = vshrl.u32 %v1847, 7
    %v1849 = vsub.s32 2, %v1848
    %v1850 = vrot.slane %v1576, %v1849
    %v1851 = vlaneseq
    %v1852 = vshrl.u32 %v1851, 7
    %v1853 = vsub.s32 0, %v1852
    %v1854 = vrot.slane %v1577, %v1853
    %v1855 = vlaneseq
    %v1856 = vshrl.u32 %v1855, 7
    %v1857 = vsub.s32 2, %v1856
    %v1858 = vrot.slane %v1577, %v1857
    %v1859 = vlaneseq
    %v1860 = vshrl.u32 %v1859, 7
    %v1861 = vsub.s32 0, %v1860
    %v1862 = vrot.slane %v1578, %v1861
    %v1863 = vlaneseq
    %v1864 = vshrl.u32 %v1863, 7
    %v1865 = vsub.s32 2, %v1864
    %v1866 = vrot.slane %v1578, %v1865
    %vm1867 = vcmask 1042434
    %v1868 = vsel %vm1867, %v1622, %v1614
    %vm1869 = vcmask 1043459
    %v1870 = vsel %vm1869, %v1630, %v1868
    %vm1871 = vcmask 1044484
    %v1872 = vsel %vm1871, %v1638, %v1870
    %vm1873 = vcmask 1045509
    %v1874 = vsel %vm1873, %v1646, %v1872
    %vm1875 = vcmask 1046534
    %v1876 = vsel %vm1875, %v1654, %v1874
    %vm1877 = vcmask 1047559
    %v1878 = vsel %vm1877, %v1662, %v1876
    %v1879 = vsel %vm1867, %v1626, %v1618
    %v1880 = vsel %vm1869, %v1634, %v1879
    %v1881 = vsel %vm1871, %v1642, %v1880
    %v1882 = vsel %vm1873, %v1650, %v1881
    %v1883 = vsel %vm1875, %v1658, %v1882
    %v1884 = vsel %vm1877, %v1666, %v1883
    %vm1885 = vcmask 1041409
    %v1886 = vsel %vm1885, %v1678, %v1670
    %v1887 = vsel %vm1867, %v1686, %v1886
    %v1888 = vsel %vm1869, %v1694, %v1887
    %v1889 = vsel %vm1871, %v1702, %v1888
    %v1890 = vsel %vm1873, %v1710, %v1889
    %v1891 = vsel %vm1875, %v1718, %v1890
    %v1892 = vsel %vm1877, %v1726, %v1891
    %v1893 = vsel %vm1885, %v1682, %v1674
    %v1894 = vsel %vm1867, %v1690, %v1893
    %v1895 = vsel %vm1869, %v1698, %v1894
    %v1896 = vsel %vm1871, %v1706, %v1895
    %v1897 = vsel %vm1873, %v1714, %v1896
    %v1898 = vsel %vm1875, %v1722, %v1897
    %v1899 = vsel %vm1877, %v1730, %v1898
    %v1900 = vsel %vm1867, %v1750, %v1742
    %v1901 = vsel %vm1869, %v1758, %v1900
    %v1902 = vsel %vm1871, %v1766, %v1901
    %v1903 = vsel %vm1873, %v1774, %v1902
    %v1904 = vsel %vm1875, %v1782, %v1903
    %v1905 = vsel %vm1877, %v1790, %v1904
    %v1906 = vsel %vm1867, %v1754, %v1746
    %v1907 = vsel %vm1869, %v1762, %v1906
    %v1908 = vsel %vm1871, %v1770, %v1907
    %v1909 = vsel %vm1873, %v1778, %v1908
    %v1910 = vsel %vm1875, %v1786, %v1909
    %v1911 = vsel %vm1877, %v1794, %v1910
    %v1912 = vsel %vm1885, %v1806, %v1798
    %v1913 = vsel %vm1867, %v1814, %v1912
    %v1914 = vsel %vm1869, %v1822, %v1913
    %v1915 = vsel %vm1871, %v1830, %v1914
    %v1916 = vsel %vm1873, %v1838, %v1915
    %v1917 = vsel %vm1875, %v1846, %v1916
    %v1918 = vsel %vm1877, %v1854, %v1917
    %v1919 = vsel %vm1885, %v1810, %v1802
    %v1920 = vsel %vm1867, %v1818, %v1919
    %v1921 = vsel %vm1869, %v1826, %v1920
    %v1922 = vsel %vm1871, %v1834, %v1921
    %v1923 = vsel %vm1873, %v1842, %v1922
    %v1924 = vsel %vm1875, %v1850, %v1923
    %v1925 = vsel %vm1877, %v1858, %v1924
    %1926 = vrot.lane.b32.xlu0 %v1878, 16
    %v1927 = vpop.permute.xlu0 %1926
    %1928 = vrot.lane.b32.xlu0 %v1884, 16
    %v1929 = vpop.permute.xlu0 %1928
    %1930 = vrot.lane.b32.xlu0 %v1892, 16
    %v1931 = vpop.permute.xlu0 %1930
    %1932 = vrot.lane.b32.xlu0 %v1899, 16
    %v1933 = vpop.permute.xlu0 %1932
    %1934 = vrot.lane.b32.xlu0 %v1734, 16
    %v1935 = vpop.permute.xlu0 %1934
    %1936 = vrot.lane.b32.xlu0 %v1738, 16
    %v1937 = vpop.permute.xlu0 %1936
    %1938 = vrot.lane.b32.xlu0 %v1905, 16
    %v1939 = vpop.permute.xlu0 %1938
    %1940 = vrot.lane.b32.xlu0 %v1911, 16
    %v1941 = vpop.permute.xlu0 %1940
    %1942 = vrot.lane.b32.xlu0 %v1918, 16
    %v1943 = vpop.permute.xlu0 %1942
    %1944 = vrot.lane.b32.xlu0 %v1925, 16
    %v1945 = vpop.permute.xlu0 %1944
    %1946 = vrot.lane.b32.xlu0 %v1862, 16
    %v1947 = vpop.permute.xlu0 %1946
    %1948 = vrot.lane.b32.xlu0 %v1866, 16
    %v1949 = vpop.permute.xlu0 %1948
    %v1950 = vsel %vm1018, %v1927, %v1929
    %v1951 = vsel %vm1018, %v1931, %v1933
    %v1952 = vsel %vm1018, %v1935, %v1937
    %v1953 = vsel %vm1018, %v1939, %v1941
    %v1954 = vsel %vm1018, %v1943, %v1945
    %v1955 = vsel %vm1018, %v1947, %v1949
    %vm1974 = vcmask 1047681
    %1975 = vst.msk [vmem:[#allocation2] sm:$0xfe] %vm1974, %v1927
    %1976 = vst [vmem:[#allocation2 + $0x8] sm:$0xfe] %v1950
    %vm1977 = vcmask 64513
    %1978 = vst.msk [vmem:[#allocation2 + $0x10] sm:$0xfe] %vm1977, %v1929
    %vm1979 = vcmask 1047680
    %1980 = vst.msk [vmem:[#allocation2 + $0x18] sm:$0xff] %vm1979, %v1931
    %1981 = vst [vmem:[#allocation2 + $0x20] sm:$0xff] %v1951
    %1982 = vst.msk [vmem:[#allocation2 + $0x28] sm:$0xff] %vm790, %v1933
    %vm1983 = vcmask 1040512
    %1984 = vst.msk [vmem:[#allocation2 + $0x30] sm:$0x1] %vm1983, %v1935
    %1985 = vst [vmem:[#allocation2 + $0x38] sm:$0x1] %v1952
    %vm1986 = vcmask 57344
    %1987 = vst.msk [vmem:[#allocation2 + $0x40] sm:$0x1] %vm1986, %v1937
    %1988 = vst.msk [vmem:[#allocation2 + $0x48] sm:$0xfe] %vm1974, %v1939
    %1989 = vst [vmem:[#allocation2 + $0x50] sm:$0xfe] %v1953
    %1990 = vst.msk [vmem:[#allocation2 + $0x58] sm:$0xfe] %vm1977, %v1941
    %1991 = vst.msk [vmem:[#allocation2 + $0x60] sm:$0xff] %vm1979, %v1943
    %1992 = vst [vmem:[#allocation2 + $0x68] sm:$0xff] %v1954
    %1993 = vst.msk [vmem:[#allocation2 + $0x70] sm:$0xff] %vm790, %v1945
    %1994 = vst.msk [vmem:[#allocation2 + $0x78] sm:$0x1] %vm1983, %v1947
    %1995 = vst [vmem:[#allocation2 + $0x80] sm:$0x1] %v1955
    %1996 = vst.msk [vmem:[#allocation2 + $0x88] sm:$0x1] %vm1986, %v1949
    %v1997 = vld [vmem:[#allocation2] sm:$0xff]
    %v1998 = vld [vmem:[#allocation2 + $0x8] sm:$0xff]
    %v1999 = vld [vmem:[#allocation2 + $0x10] sm:$0xff]
    %v2000 = vld [vmem:[#allocation2 + $0x18] sm:$0xff]
    %v2001 = vld [vmem:[#allocation2 + $0x20] sm:$0xff]
    %v2002 = vld [vmem:[#allocation2 + $0x28] sm:$0xff]
    %v2003 = vld [vmem:[#allocation2 + $0x48] sm:$0xff]
    %v2004 = vld [vmem:[#allocation2 + $0x50] sm:$0xff]
    %v2005 = vld [vmem:[#allocation2 + $0x58] sm:$0xff]
    %v2006 = vld [vmem:[#allocation2 + $0x60] sm:$0xff]
    %v2007 = vld [vmem:[#allocation2 + $0x68] sm:$0xff]
    %v2008 = vld [vmem:[#allocation2 + $0x70] sm:$0xff]
    %v2009 = vld [vmem:[%s2] sm:$0xff]
    %v2010 = vld [vmem:[%s2 + $0x8] sm:$0xff]
    %v2011 = vld [vmem:[%s2 + $0x10] sm:$0xff]
    %v2012 = vld [vmem:[%s2 + $0x18] sm:$0xff]
    %v2013 = vld [vmem:[%s2 + $0x20] sm:$0xff]
    %v2014 = vld [vmem:[%s2 + $0x28] sm:$0xff]
    %v2015 = vld [vmem:[%s2 + $0x30] sm:$0xff]
    %v2016 = vld [vmem:[%s2 + $0x38] sm:$0xff]
    %v2017 = vld [vmem:[%s2 + $0x40] sm:$0xff]
    %v2018 = vld [vmem:[%s2 + $0x48] sm:$0xff]
    %v2019 = vld [vmem:[%s2 + $0x50] sm:$0xff]
    %v2020 = vld [vmem:[%s2 + $0x58] sm:$0xff]
    %v2021 = vld [vmem:[%s2 + $0x60] sm:$0xff]
    %v2022 = vld [vmem:[%s2 + $0x68] sm:$0xff]
    %v2023 = vld [vmem:[%s2 + $0x70] sm:$0xff]
    %v2024 = vld [vmem:[%s2 + $0x78] sm:$0xff]
    %v2025 = vld [vmem:[%s2 + $0x80] sm:$0xff]
    %v2026 = vld [vmem:[%s2 + $0x88] sm:$0xff]
    %v2027 = vld [vmem:[%s2 + $0x90] sm:$0xff]
    %v2028 = vld [vmem:[%s2 + $0x98] sm:$0xff]
    %v2029 = vld [vmem:[%s2 + $0xa0] sm:$0xff]
    %v2030 = vld [vmem:[%s2 + $0xa8] sm:$0xff]
    %v2031 = vld [vmem:[%s2 + $0xb0] sm:$0xff]
    %v2032 = vld [vmem:[%s2 + $0xb8] sm:$0xff]
    %v2033 = vld [vmem:[%s2 + $0xc0] sm:$0xff]
    %v2034 = vld [vmem:[%s2 + $0xc8] sm:$0xff]
    %v2035 = vld [vmem:[%s2 + $0xd0] sm:$0xff]
    %v2036 = vld [vmem:[%s2 + $0xd8] sm:$0xff]
    %v2037 = vld [vmem:[%s2 + $0xe0] sm:$0xff]
    %v2038 = vld [vmem:[%s2 + $0xe8] sm:$0xff]
    %v2039 = vld [vmem:[%s2 + $0xf0] sm:$0xff]
    %v2040 = vld [vmem:[%s2 + $0xf8] sm:$0xff]
    %v2041 = vld [vmem:[%s2 + $0x100] sm:$0xff]
    %v2042 = vld [vmem:[%s2 + $0x108] sm:$0xff]
    %v2043 = vld [vmem:[%s2 + $0x110] sm:$0xff]
    %v2044 = vld [vmem:[%s2 + $0x118] sm:$0xff]
    %v2045 = vld [vmem:[%s2 + $0x120] sm:$0xff]
    %v2046 = vld [vmem:[%s2 + $0x128] sm:$0xff]
    %v2047 = vld [vmem:[%s2 + $0x130] sm:$0xff]
    %v2048 = vld [vmem:[%s2 + $0x138] sm:$0xff]
    %v2049 = vld [vmem:[%s2 + $0x140] sm:$0xff]
    %v2050 = vld [vmem:[%s2 + $0x148] sm:$0xff]
    %v2051 = vld [vmem:[%s2 + $0x150] sm:$0xff]
    %v2052 = vld [vmem:[%s2 + $0x158] sm:$0xff]
    %v2053 = vld [vmem:[%s2 + $0x160] sm:$0xff]
    %v2054 = vld [vmem:[%s2 + $0x168] sm:$0xff]
    %v2055 = vld [vmem:[%s2 + $0x170] sm:$0xff]
    %v2056 = vld [vmem:[%s2 + $0x178] sm:$0xff]
    %v2057 = vld [vmem:[%s2 + $0x180] sm:$0xff]
    %v2058 = vld [vmem:[%s2 + $0x188] sm:$0xff]
    %v2059 = vld [vmem:[%s2 + $0x190] sm:$0xff]
    %v2060 = vld [vmem:[%s2 + $0x198] sm:$0xff]
    %v2061 = vld [vmem:[%s2 + $0x1a0] sm:$0xff]
    %v2062 = vld [vmem:[%s2 + $0x1a8] sm:$0xff]
    %v2063 = vld [vmem:[%s2 + $0x1b0] sm:$0xff]
    %v2064 = vld [vmem:[%s2 + $0x1b8] sm:$0xff]
    %v2065 = vld [vmem:[%s2 + $0x1c0] sm:$0xff]
    %v2066 = vld [vmem:[%s2 + $0x1c8] sm:$0xff]
    %v2067 = vld [vmem:[%s2 + $0x1d0] sm:$0xff]
    %v2068 = vld [vmem:[%s2 + $0x1d8] sm:$0xff]
    %v2069 = vld [vmem:[%s2 + $0x1e0] sm:$0xff]
    %v2070 = vld [vmem:[%s2 + $0x1e8] sm:$0xff]
    %v2071 = vld [vmem:[%s2 + $0x1f0] sm:$0xff]
    %v2072 = vld [vmem:[%s2 + $0x1f8] sm:$0xff]
    %v2073 = vld [vmem:[%s2 + $0x200] sm:$0xff]
    %v2074 = vld [vmem:[%s2 + $0x208] sm:$0xff]
    %v2075 = vld [vmem:[%s2 + $0x210] sm:$0xff]
    %v2076 = vld [vmem:[%s2 + $0x218] sm:$0xff]
    %v2077 = vld [vmem:[%s2 + $0x220] sm:$0xff]
    %v2078 = vld [vmem:[%s2 + $0x228] sm:$0xff]
    %v2079 = vld [vmem:[#allocation2] sm:$0xfe]
    %v2080 = vld [vmem:[#allocation2 + $0x8] sm:$0xfe]
    %v2081 = vld [vmem:[#allocation2 + $0x10] sm:$0xfe]
    %v2082 = vld [vmem:[#allocation2 + $0x30] sm:$0x1]
    %v2083 = vld [vmem:[#allocation2 + $0x38] sm:$0x1]
    %v2084 = vld [vmem:[#allocation2 + $0x40] sm:$0x1]
    %v2085 = vld [vmem:[#allocation2 + $0x48] sm:$0xfe]
    %v2086 = vld [vmem:[#allocation2 + $0x50] sm:$0xfe]
    %v2087 = vld [vmem:[#allocation2 + $0x58] sm:$0xfe]
    %v2088 = vld [vmem:[#allocation2 + $0x78] sm:$0x1]
    %v2089 = vld [vmem:[#allocation2 + $0x80] sm:$0x1]
    %v2090 = vld [vmem:[#allocation2 + $0x88] sm:$0x1]
    %vm2109 = vcmask 1046528
    %v2110 = vrot.slane %v2079, 1
    %v2111 = vrot.slane %v2000, 1
    %v2112 = vsel %vm2109, %v2110, %v2111
    %v2113 = vrot.slane %v2080, 1
    %v2114 = vrot.slane %v2001, 1
    %v2115 = vsel %vm2109, %v2113, %v2114
    %v2116 = vrot.slane %v2081, 1
    %v2117 = vrot.slane %v2002, 1
    %v2118 = vsel %vm2109, %v2116, %v2117
    %v2119 = vrot.slane %v2082, 1
    %v2120 = vsel %vm2109, %v2111, %v2119
    %v2121 = vrot.slane %v2083, 1
    %v2122 = vsel %vm2109, %v2114, %v2121
    %v2123 = vrot.slane %v2084, 1
    %v2124 = vsel %vm2109, %v2117, %v2123
    %v2125 = vrot.slane %v2085, 1
    %v2126 = vrot.slane %v2006, 1
    %v2127 = vsel %vm2109, %v2125, %v2126
    %v2128 = vrot.slane %v2086, 1
    %v2129 = vrot.slane %v2007, 1
    %v2130 = vsel %vm2109, %v2128, %v2129
    %v2131 = vrot.slane %v2087, 1
    %v2132 = vrot.slane %v2008, 1
    %v2133 = vsel %vm2109, %v2131, %v2132
    %v2134 = vrot.slane %v2088, 1
    %v2135 = vsel %vm2109, %v2126, %v2134
    %v2136 = vrot.slane %v2089, 1
    %v2137 = vsel %vm2109, %v2129, %v2136
    %v2138 = vrot.slane %v2090, 1
    %v2139 = vsel %vm2109, %v2132, %v2138
    %s2148 = scalar_lea.vmem %s2, 560
    %v2149 = vld [vmem:[%s2148] sm:$0xff]
    %v2150 = vld [vmem:[%s2148 + $0x8] sm:$0xff]
    %v2151 = vld [vmem:[%s2148 + $0x10] sm:$0xff]
    %v2152 = vld [vmem:[%s2148 + $0x18] sm:$0xff]
    %v2153 = vld [vmem:[%s2148 + $0x20] sm:$0xff]
    %v2154 = vld [vmem:[%s2148 + $0x28] sm:$0xff]
    %v2155 = vld [vmem:[%s2148 + $0x30] sm:$0xff]
    %v2156 = vld [vmem:[%s2148 + $0x38] sm:$0xff]
    %v2157 = vld [vmem:[%s2148 + $0x40] sm:$0xff]
    %v2158 = vld [vmem:[%s2148 + $0x48] sm:$0xff]
    %v2159 = vld [vmem:[%s2148 + $0x50] sm:$0xff]
    %v2160 = vld [vmem:[%s2148 + $0x58] sm:$0xff]
    %v2161 = vld [vmem:[%s2148 + $0x60] sm:$0xff]
    %v2162 = vld [vmem:[%s2148 + $0x68] sm:$0xff]
    %v2163 = vld [vmem:[%s2148 + $0x70] sm:$0xff]
    %v2164 = vld [vmem:[%s2148 + $0x78] sm:$0xff]
    %v2165 = vld [vmem:[%s2148 + $0x80] sm:$0xff]
    %v2166 = vld [vmem:[%s2148 + $0x88] sm:$0xff]
    %v2167 = vld [vmem:[%s2148 + $0x90] sm:$0xff]
    %v2168 = vld [vmem:[%s2148 + $0x98] sm:$0xff]
    %v2169 = vld [vmem:[%s2148 + $0xa0] sm:$0xff]
    %v2170 = vld [vmem:[%s2148 + $0xa8] sm:$0xff]
    %v2171 = vld [vmem:[%s2148 + $0xb0] sm:$0xff]
    %v2172 = vld [vmem:[%s2148 + $0xb8] sm:$0xff]
    %v2173 = vld [vmem:[%s2148 + $0xc0] sm:$0xff]
    %v2174 = vld [vmem:[%s2148 + $0xc8] sm:$0xff]
    %v2175 = vld [vmem:[%s2148 + $0xd0] sm:$0xff]
    %v2176 = vld [vmem:[%s2148 + $0xd8] sm:$0xff]
    %v2177 = vld [vmem:[%s2148 + $0xe0] sm:$0xff]
    %v2178 = vld [vmem:[%s2148 + $0xe8] sm:$0xff]
    %v2179 = vld [vmem:[%s2148 + $0xf0] sm:$0xff]
    %v2180 = vld [vmem:[%s2148 + $0xf8] sm:$0xff]
    %v2181 = vld [vmem:[%s2148 + $0x100] sm:$0xff]
    %v2182 = vld [vmem:[%s2148 + $0x108] sm:$0xff]
    %v2183 = vld [vmem:[%s2148 + $0x110] sm:$0xff]
    %v2184 = vld [vmem:[%s2148 + $0x118] sm:$0xff]
    %v2185 = vld [vmem:[%s2148 + $0x120] sm:$0xff]
    %v2186 = vld [vmem:[%s2148 + $0x128] sm:$0xff]
    %v2187 = vld [vmem:[%s2148 + $0x130] sm:$0xff]
    %v2188 = vld [vmem:[%s2148 + $0x138] sm:$0xff]
    %v2189 = vld [vmem:[%s2148 + $0x140] sm:$0xff]
    %v2190 = vld [vmem:[%s2148 + $0x148] sm:$0xff]
    %v2191 = vld [vmem:[%s2148 + $0x150] sm:$0xff]
    %v2192 = vld [vmem:[%s2148 + $0x158] sm:$0xff]
    %v2193 = vld [vmem:[%s2148 + $0x160] sm:$0xff]
    %v2194 = vld [vmem:[%s2148 + $0x168] sm:$0xff]
    %v2195 = vld [vmem:[%s2148 + $0x170] sm:$0xff]
    %v2196 = vld [vmem:[%s2148 + $0x178] sm:$0xff]
    %v2197 = vld [vmem:[%s2148 + $0x180] sm:$0xff]
    %v2198 = vld [vmem:[%s2148 + $0x188] sm:$0xff]
    %v2199 = vld [vmem:[%s2148 + $0x190] sm:$0xff]
    %v2200 = vld [vmem:[%s2148 + $0x198] sm:$0xff]
    %v2201 = vld [vmem:[%s2148 + $0x1a0] sm:$0xff]
    %v2202 = vld [vmem:[%s2148 + $0x1a8] sm:$0xff]
    %v2203 = vld [vmem:[%s2148 + $0x1b0] sm:$0xff]
    %v2204 = vld [vmem:[%s2148 + $0x1b8] sm:$0xff]
    %v2205 = vld [vmem:[%s2148 + $0x1c0] sm:$0xff]
    %v2206 = vld [vmem:[%s2148 + $0x1c8] sm:$0xff]
    %v2207 = vld [vmem:[%s2148 + $0x1d0] sm:$0xff]
    %v2208 = vld [vmem:[%s2148 + $0x1d8] sm:$0xff]
    %v2209 = vld [vmem:[%s2148 + $0x1e0] sm:$0xff]
    %v2210 = vld [vmem:[%s2148 + $0x1e8] sm:$0xff]
    %v2211 = vld [vmem:[%s2148 + $0x1f0] sm:$0xff]
    %v2212 = vld [vmem:[%s2148 + $0x1f8] sm:$0xff]
    %v2213 = vld [vmem:[%s2148 + $0x200] sm:$0xff]
    %v2214 = vld [vmem:[%s2148 + $0x208] sm:$0xff]
    %v2215 = vld [vmem:[%s2148 + $0x210] sm:$0xff]
    %v2216 = vld [vmem:[%s2148 + $0x218] sm:$0xff]
    %v2217 = vld [vmem:[%s2148 + $0x220] sm:$0xff]
    %v2218 = vld [vmem:[%s2148 + $0x228] sm:$0xff]
    %vm2219 = vcmask 195584
    %v2220 = vsel %vm2219, %v2118, 0
    %v2222 = vsel %vm2219, %v2124, 0
    %v2224 = vsel %vm2219, %v2133, 0
    %v2226 = vsel %vm2219, %v2139, 0
    %2228 = vmatprep.subr.mxu0 %v2180
    %2229 = vmatpush1.msra.mxu0 %v2179
    %2230 = vmatprep.subr.mxu0 %v2178
    %2231 = vmatpush1.msra.mxu0 %v2177
    %2232 = vmatprep.subr.mxu0 %v2176
    %2233 = vmatpush1.msra.mxu0 %v2175
    %2234 = vmatprep.subr.mxu0 %v2174
    %2235 = vmatpush1.msra.mxu0 %v2173
    %2236 = vmatprep.subr.mxu0 %v2172
    %2237 = vmatpush1.msra.mxu0 %v2171
    %2238 = vmatprep.subr.mxu0 %v2170
    %2239 = vmatpush1.msra.mxu0 %v2169
    %2240 = vmatprep.subr.mxu0 %v2168
    %2241 = vmatpush1.msra.mxu0 %v2167
    %2242 = vmatprep.subr.mxu0 %v2166
    %2243 = vmatpush1.msra.mxu0 %v2165
    %2244 = vmatprep.subr.mxu0 %v2164
    %2245 = vmatpush1.msra.mxu0 %v2163
    %2246 = vmatprep.subr.mxu0 %v2162
    %2247 = vmatpush1.msra.mxu0 %v2161
    %2248 = vmatprep.subr.mxu0 %v2160
    %2249 = vmatpush1.msra.mxu0 %v2159
    %2250 = vmatprep.subr.mxu0 %v2158
    %2251 = vmatpush1.msra.mxu0 %v2157
    %2252 = vmatprep.subr.mxu0 %v2156
    %2253 = vmatpush1.msra.mxu0 %v2155
    %2254 = vmatprep.subr.mxu0 %v2154
    %2255 = vmatpush1.msra.mxu0 %v2153
    %2256 = vmatprep.subr.mxu0 %v2152
    %2257 = vmatpush1.msra.mxu0 %v2151
    %2258 = vmatprep.subr.mxu0 %v2150
    %2259 = vmatpush1.msra.mxu0 %v2149
    %2260 = vmatprep.subr.mxu0 %v2212
    %2261 = vmatpush2.msra.mxu0 %v2211
    %2262 = vmatprep.subr.mxu0 %v2210
    %2263 = vmatpush2.msra.mxu0 %v2209
    %2264 = vmatprep.subr.mxu0 %v2208
    %2265 = vmatpush2.msra.mxu0 %v2207
    %2266 = vmatprep.subr.mxu0 %v2206
    %2267 = vmatpush2.msra.mxu0 %v2205
    %2268 = vmatprep.subr.mxu0 %v2204
    %2269 = vmatpush2.msra.mxu0 %v2203
    %2270 = vmatprep.subr.mxu0 %v2202
    %2271 = vmatpush2.msra.mxu0 %v2201
    %2272 = vmatprep.subr.mxu0 %v2200
    %2273 = vmatpush2.msra.mxu0 %v2199
    %2274 = vmatprep.subr.mxu0 %v2198
    %2275 = vmatpush2.msra.mxu0 %v2197
    %2276 = vmatprep.subr.mxu0 %v2196
    %2277 = vmatpush2.msra.mxu0 %v2195
    %2278 = vmatprep.subr.mxu0 %v2194
    %2279 = vmatpush2.msra.mxu0 %v2193
    %2280 = vmatprep.subr.mxu0 %v2192
    %2281 = vmatpush2.msra.mxu0 %v2191
    %2282 = vmatprep.subr.mxu0 %v2190
    %2283 = vmatpush2.msra.mxu0 %v2189
    %2284 = vmatprep.subr.mxu0 %v2188
    %2285 = vmatpush2.msra.mxu0 %v2187
    %2286 = vmatprep.subr.mxu0 %v2186
    %2287 = vmatpush2.msra.mxu0 %v2185
    %2288 = vmatprep.subr.mxu0 %v2184
    %2289 = vmatpush2.msra.mxu0 %v2183
    %2290 = vmatprep.subr.mxu0 %v2182
    %2291 = vmatpush2.msra.mxu0 %v2181
    %2292 = vmatprep.mubr.f32.mxu0 %v2115
    %2293 = vmatmul.mubr.f32.gmra.mxu0 %v2112
    %v2294 = vpop.f32.mrf.mxu0
    %v2295 = vadd.f32 0.0, %v2294
    %v2296 = vpop.f32.mrf.mxu0
    %v2297 = vadd.f32 0.0, %v2296
    %2298 = vmatprep.mubr.f32.mxu0 %v2122
    %2299 = vmatmul.mubr.f32.gmra.mxu0 %v2120
    %v2300 = vpop.f32.mrf.mxu0
    %v2301 = vadd.f32 0.0, %v2300
    %v2302 = vpop.f32.mrf.mxu0
    %v2303 = vadd.f32 0.0, %v2302
    %2304 = vmatprep.mubr.f32.mxu0 %v2130
    %2305 = vmatmul.mubr.f32.gmra.mxu0 %v2127
    %v2306 = vpop.f32.mrf.mxu0
    %v2307 = vadd.f32 0.0, %v2306
    %v2308 = vpop.f32.mrf.mxu0
    %v2309 = vadd.f32 0.0, %v2308
    %2310 = vmatprep.mubr.f32.mxu0 %v2137
    %2311 = vmatmul.mubr.f32.gmra.mxu0 %v2135
    %v2312 = vpop.f32.mrf.mxu0
    %v2313 = vadd.f32 0.0, %v2312
    %v2314 = vpop.f32.mrf.mxu0
    %v2315 = vadd.f32 0.0, %v2314
    %2316 = vdwg.mxu0
    %2317 = vmatprep.subr.mxu0 0.0
    %2318 = vmatpush1.msra.mxu0 0.0
    %2319 = vmatprep.subr.mxu0 0.0
    %2320 = vmatpush1.msra.mxu0 0.0
    %2321 = vmatprep.subr.mxu0 0.0
    %2322 = vmatpush1.msra.mxu0 0.0
    %2323 = vmatprep.subr.mxu0 0.0
    %2324 = vmatpush1.msra.mxu0 0.0
    %2325 = vmatprep.subr.mxu0 0.0
    %2326 = vmatpush1.msra.mxu0 0.0
    %2327 = vmatprep.subr.mxu0 0.0
    %2328 = vmatpush1.msra.mxu0 0.0
    %2329 = vmatprep.subr.mxu0 0.0
    %2330 = vmatpush1.msra.mxu0 0.0
    %2331 = vmatprep.subr.mxu0 0.0
    %2332 = vmatpush1.msra.mxu0 0.0
    %2333 = vmatprep.subr.mxu0 0.0
    %2334 = vmatpush1.msra.mxu0 0.0
    %2335 = vmatprep.subr.mxu0 0.0
    %2336 = vmatpush1.msra.mxu0 0.0
    %2337 = vmatprep.subr.mxu0 0.0
    %2338 = vmatpush1.msra.mxu0 0.0
    %2339 = vmatprep.subr.mxu0 0.0
    %2340 = vmatpush1.msra.mxu0 0.0
    %2341 = vmatprep.subr.mxu0 0.0
    %2342 = vmatpush1.msra.mxu0 0.0
    %2343 = vmatprep.subr.mxu0 %v2218
    %2344 = vmatpush1.msra.mxu0 %v2217
    %2345 = vmatprep.subr.mxu0 %v2216
    %2346 = vmatpush1.msra.mxu0 %v2215
    %2347 = vmatprep.subr.mxu0 %v2214
    %2348 = vmatpush1.msra.mxu0 %v2213
    %2349 = vmatprep.subr.mxu0 0.0
    %2350 = vmatpush2.msra.mxu0 0.0
    %2351 = vmatprep.subr.mxu0 0.0
    %2352 = vmatpush2.msra.mxu0 0.0
    %2353 = vmatprep.subr.mxu0 0.0
    %2354 = vmatpush2.msra.mxu0 0.0
    %2355 = vmatprep.subr.mxu0 0.0
    %2356 = vmatpush2.msra.mxu0 0.0
    %2357 = vmatprep.subr.mxu0 0.0
    %2358 = vmatpush2.msra.mxu0 0.0
    %2359 = vmatprep.subr.mxu0 0.0
    %2360 = vmatpush2.msra.mxu0 0.0
    %2361 = vmatprep.subr.mxu0 0.0
    %2362 = vmatpush2.msra.mxu0 0.0
    %2363 = vmatprep.subr.mxu0 0.0
    %2364 = vmatpush2.msra.mxu0 0.0
    %2365 = vmatprep.subr.mxu0 0.0
    %2366 = vmatpush2.msra.mxu0 0.0
    %2367 = vmatprep.subr.mxu0 0.0
    %2368 = vmatpush2.msra.mxu0 0.0
    %2369 = vmatprep.subr.mxu0 0.0
    %2370 = vmatpush2.msra.mxu0 0.0
    %2371 = vmatprep.subr.mxu0 0.0
    %2372 = vmatpush2.msra.mxu0 0.0
    %2373 = vmatprep.subr.mxu0 0.0
    %2374 = vmatpush2.msra.mxu0 0.0
    %2375 = vmatprep.subr.mxu0 0.0
    %2376 = vmatpush2.msra.mxu0 0.0
    %2377 = vmatprep.subr.mxu0 0.0
    %2378 = vmatpush2.msra.mxu0 0.0
    %2379 = vmatprep.subr.mxu0 0.0
    %2380 = vmatpush2.msra.mxu0 0.0
    %2381 = vmatprep.mubr.f32.mxu0 0.0
    %2382 = vmatmul.mubr.f32.gmra.mxu0 %v2220
    %v2383 = vpop.f32.mrf.mxu0
    %v2384 = vadd.f32 %v2295, %v2383
    %v2385 = vpop.f32.mrf.mxu0
    %v2386 = vadd.f32 %v2297, %v2385
    %2387 = vmatprep.mubr.f32.mxu0 0.0
    %2388 = vmatmul.mubr.f32.gmra.mxu0 %v2222
    %v2389 = vpop.f32.mrf.mxu0
    %v2390 = vadd.f32 %v2301, %v2389
    %v2391 = vpop.f32.mrf.mxu0
    %v2392 = vadd.f32 %v2303, %v2391
    %2393 = vmatprep.mubr.f32.mxu0 0.0
    %2394 = vmatmul.mubr.f32.gmra.mxu0 %v2224
    %v2395 = vpop.f32.mrf.mxu0
    %v2396 = vadd.f32 %v2307, %v2395
    %v2397 = vpop.f32.mrf.mxu0
    %v2398 = vadd.f32 %v2309, %v2397
    %2399 = vmatprep.mubr.f32.mxu0 0.0
    %2400 = vmatmul.mubr.f32.gmra.mxu0 %v2226
    %v2401 = vpop.f32.mrf.mxu0
    %v2402 = vadd.f32 %v2313, %v2401
    %v2403 = vpop.f32.mrf.mxu0
    %v2404 = vadd.f32 %v2315, %v2403
    %2405 = vdwg.mxu0
    %v2407 = vsel %vm2219, %v1999, 0
    %v2409 = vsel %vm2219, %v2002, 0
    %v2412 = vsel %vm2219, %v2005, 0
    %v2414 = vsel %vm2219, %v2008, 0
    %2416 = vmatprep.subr.mxu0 %v2040
    %2417 = vmatpush1.msra.mxu0 %v2039
    %2418 = vmatprep.subr.mxu0 %v2038
    %2419 = vmatpush1.msra.mxu0 %v2037
    %2420 = vmatprep.subr.mxu0 %v2036
    %2421 = vmatpush1.msra.mxu0 %v2035
    %2422 = vmatprep.subr.mxu0 %v2034
    %2423 = vmatpush1.msra.mxu0 %v2033
    %2424 = vmatprep.subr.mxu0 %v2032
    %2425 = vmatpush1.msra.mxu0 %v2031
    %2426 = vmatprep.subr.mxu0 %v2030
    %2427 = vmatpush1.msra.mxu0 %v2029
    %2428 = vmatprep.subr.mxu0 %v2028
    %2429 = vmatpush1.msra.mxu0 %v2027
    %2430 = vmatprep.subr.mxu0 %v2026
    %2431 = vmatpush1.msra.mxu0 %v2025
    %2432 = vmatprep.subr.mxu0 %v2024
    %2433 = vmatpush1.msra.mxu0 %v2023
    %2434 = vmatprep.subr.mxu0 %v2022
    %2435 = vmatpush1.msra.mxu0 %v2021
    %2436 = vmatprep.subr.mxu0 %v2020
    %2437 = vmatpush1.msra.mxu0 %v2019
    %2438 = vmatprep.subr.mxu0 %v2018
    %2439 = vmatpush1.msra.mxu0 %v2017
    %2440 = vmatprep.subr.mxu0 %v2016
    %2441 = vmatpush1.msra.mxu0 %v2015
    %2442 = vmatprep.subr.mxu0 %v2014
    %2443 = vmatpush1.msra.mxu0 %v2013
    %2444 = vmatprep.subr.mxu0 %v2012
    %2445 = vmatpush1.msra.mxu0 %v2011
    %2446 = vmatprep.subr.mxu0 %v2010
    %2447 = vmatpush1.msra.mxu0 %v2009
    %2448 = vmatprep.subr.mxu0 %v2072
    %2449 = vmatpush2.msra.mxu0 %v2071
    %2450 = vmatprep.subr.mxu0 %v2070
    %2451 = vmatpush2.msra.mxu0 %v2069
    %2452 = vmatprep.subr.mxu0 %v2068
    %2453 = vmatpush2.msra.mxu0 %v2067
    %2454 = vmatprep.subr.mxu0 %v2066
    %2455 = vmatpush2.msra.mxu0 %v2065
    %2456 = vmatprep.subr.mxu0 %v2064
    %2457 = vmatpush2.msra.mxu0 %v2063
    %2458 = vmatprep.subr.mxu0 %v2062
    %2459 = vmatpush2.msra.mxu0 %v2061
    %2460 = vmatprep.subr.mxu0 %v2060
    %2461 = vmatpush2.msra.mxu0 %v2059
    %2462 = vmatprep.subr.mxu0 %v2058
    %2463 = vmatpush2.msra.mxu0 %v2057
    %2464 = vmatprep.subr.mxu0 %v2056
    %2465 = vmatpush2.msra.mxu0 %v2055
    %2466 = vmatprep.subr.mxu0 %v2054
    %2467 = vmatpush2.msra.mxu0 %v2053
    %2468 = vmatprep.subr.mxu0 %v2052
    %2469 = vmatpush2.msra.mxu0 %v2051
    %2470 = vmatprep.subr.mxu0 %v2050
    %2471 = vmatpush2.msra.mxu0 %v2049
    %2472 = vmatprep.subr.mxu0 %v2048
    %2473 = vmatpush2.msra.mxu0 %v2047
    %2474 = vmatprep.subr.mxu0 %v2046
    %2475 = vmatpush2.msra.mxu0 %v2045
    %2476 = vmatprep.subr.mxu0 %v2044
    %2477 = vmatpush2.msra.mxu0 %v2043
    %2478 = vmatprep.subr.mxu0 %v2042
    %2479 = vmatpush2.msra.mxu0 %v2041
    %2480 = vmatprep.mubr.f32.mxu0 %v1998
    %2481 = vmatmul.mubr.f32.gmra.mxu0 %v1997
    %v2482 = vpop.f32.mrf.mxu0
    %v2483 = vadd.f32 %v2384, %v2482
    %v2484 = vpop.f32.mrf.mxu0
    %v2485 = vadd.f32 %v2386, %v2484
    %2486 = vmatprep.mubr.f32.mxu0 %v2001
    %2487 = vmatmul.mubr.f32.gmra.mxu0 %v2000
    %v2488 = vpop.f32.mrf.mxu0
    %v2489 = vadd.f32 %v2390, %v2488
    %v2490 = vpop.f32.mrf.mxu0
    %v2491 = vadd.f32 %v2392, %v2490
    %2492 = vmatprep.mubr.f32.mxu0 %v2004
    %2493 = vmatmul.mubr.f32.gmra.mxu0 %v2003
    %v2494 = vpop.f32.mrf.mxu0
    %v2495 = vadd.f32 %v2396, %v2494
    %v2496 = vpop.f32.mrf.mxu0
    %v2497 = vadd.f32 %v2398, %v2496
    %2498 = vmatprep.mubr.f32.mxu0 %v2007
    %2499 = vmatmul.mubr.f32.gmra.mxu0 %v2006
    %v2500 = vpop.f32.mrf.mxu0
    %v2501 = vadd.f32 %v2402, %v2500
    %v2502 = vpop.f32.mrf.mxu0
    %v2503 = vadd.f32 %v2404, %v2502
    %2504 = vdwg.mxu0
    %2505 = vmatprep.subr.mxu0 0.0
    %2506 = vmatpush1.msra.mxu0 0.0
    %2507 = vmatprep.subr.mxu0 0.0
    %2508 = vmatpush1.msra.mxu0 0.0
    %2509 = vmatprep.subr.mxu0 0.0
    %2510 = vmatpush1.msra.mxu0 0.0
    %2511 = vmatprep.subr.mxu0 0.0
    %2512 = vmatpush1.msra.mxu0 0.0
    %2513 = vmatprep.subr.mxu0 0.0
    %2514 = vmatpush1.msra.mxu0 0.0
    %2515 = vmatprep.subr.mxu0 0.0
    %2516 = vmatpush1.msra.mxu0 0.0
    %2517 = vmatprep.subr.mxu0 0.0
    %2518 = vmatpush1.msra.mxu0 0.0
    %2519 = vmatprep.subr.mxu0 0.0
    %2520 = vmatpush1.msra.mxu0 0.0
    %2521 = vmatprep.subr.mxu0 0.0
    %2522 = vmatpush1.msra.mxu0 0.0
    %2523 = vmatprep.subr.mxu0 0.0
    %2524 = vmatpush1.msra.mxu0 0.0
    %2525 = vmatprep.subr.mxu0 0.0
    %2526 = vmatpush1.msra.mxu0 0.0
    %2527 = vmatprep.subr.mxu0 0.0
    %2528 = vmatpush1.msra.mxu0 0.0
    %2529 = vmatprep.subr.mxu0 0.0
    %2530 = vmatpush1.msra.mxu0 0.0
    %2531 = vmatprep.subr.mxu0 %v2078
    %2532 = vmatpush1.msra.mxu0 %v2077
    %2533 = vmatprep.subr.mxu0 %v2076
    %2534 = vmatpush1.msra.mxu0 %v2075
    %2535 = vmatprep.subr.mxu0 %v2074
    %2536 = vmatpush1.msra.mxu0 %v2073
    %2537 = vmatprep.subr.mxu0 0.0
    %2538 = vmatpush2.msra.mxu0 0.0
    %2539 = vmatprep.subr.mxu0 0.0
    %2540 = vmatpush2.msra.mxu0 0.0
    %2541 = vmatprep.subr.mxu0 0.0
    %2542 = vmatpush2.msra.mxu0 0.0
    %2543 = vmatprep.subr.mxu0 0.0
    %2544 = vmatpush2.msra.mxu0 0.0
    %2545 = vmatprep.subr.mxu0 0.0
    %2546 = vmatpush2.msra.mxu0 0.0
    %2547 = vmatprep.subr.mxu0 0.0
    %2548 = vmatpush2.msra.mxu0 0.0
    %2549 = vmatprep.subr.mxu0 0.0
    %2550 = vmatpush2.msra.mxu0 0.0
    %2551 = vmatprep.subr.mxu0 0.0
    %2552 = vmatpush2.msra.mxu0 0.0
    %2553 = vmatprep.subr.mxu0 0.0
    %2554 = vmatpush2.msra.mxu0 0.0
    %2555 = vmatprep.subr.mxu0 0.0
    %2556 = vmatpush2.msra.mxu0 0.0
    %2557 = vmatprep.subr.mxu0 0.0
    %2558 = vmatpush2.msra.mxu0 0.0
    %2559 = vmatprep.subr.mxu0 0.0
    %2560 = vmatpush2.msra.mxu0 0.0
    %2561 = vmatprep.subr.mxu0 0.0
    %2562 = vmatpush2.msra.mxu0 0.0
    %2563 = vmatprep.subr.mxu0 0.0
    %2564 = vmatpush2.msra.mxu0 0.0
    %2565 = vmatprep.subr.mxu0 0.0
    %2566 = vmatpush2.msra.mxu0 0.0
    %2567 = vmatprep.subr.mxu0 0.0
    %2568 = vmatpush2.msra.mxu0 0.0
    %2569 = vmatprep.mubr.f32.mxu0 0.0
    %2570 = vmatmul.mubr.f32.gmra.mxu0 %v2407
    %v2571 = vpop.f32.mrf.mxu0
    %v2572 = vadd.f32 %v2483, %v2571
    %v2573 = vpop.f32.mrf.mxu0
    %v2574 = vadd.f32 %v2485, %v2573
    %2575 = vmatprep.mubr.f32.mxu0 0.0
    %2576 = vmatmul.mubr.f32.gmra.mxu0 %v2409
    %v2577 = vpop.f32.mrf.mxu0
    %v2578 = vadd.f32 %v2489, %v2577
    %v2579 = vpop.f32.mrf.mxu0
    %v2580 = vadd.f32 %v2491, %v2579
    %2581 = vmatprep.mubr.f32.mxu0 0.0
    %2582 = vmatmul.mubr.f32.gmra.mxu0 %v2412
    %v2583 = vpop.f32.mrf.mxu0
    %v2584 = vadd.f32 %v2495, %v2583
    %v2585 = vpop.f32.mrf.mxu0
    %v2586 = vadd.f32 %v2497, %v2585
    %2587 = vmatprep.mubr.f32.mxu0 0.0
    %2588 = vmatmul.mubr.f32.gmra.mxu0 %v2414
    %v2589 = vpop.f32.mrf.mxu0
    %v2590 = vadd.f32 %v2501, %v2589
    %v2591 = vpop.f32.mrf.mxu0
    %v2592 = vadd.f32 %v2503, %v2591
    %2593 = vdwg.mxu0
    %v2594 = vld [vmem:[#allocation2] sm:$0xfc]
    %v2595 = vld [vmem:[#allocation2 + $0x8] sm:$0xfc]
    %v2596 = vld [vmem:[#allocation2 + $0x10] sm:$0xfc]
    %v2597 = vld [vmem:[#allocation2 + $0x30] sm:$0x3]
    %v2598 = vld [vmem:[#allocation2 + $0x38] sm:$0x3]
    %v2599 = vld [vmem:[#allocation2 + $0x40] sm:$0x3]
    %v2600 = vld [vmem:[#allocation2 + $0x48] sm:$0xfc]
    %v2601 = vld [vmem:[#allocation2 + $0x50] sm:$0xfc]
    %v2602 = vld [vmem:[#allocation2 + $0x58] sm:$0xfc]
    %v2603 = vld [vmem:[#allocation2 + $0x78] sm:$0x3]
    %v2604 = vld [vmem:[#allocation2 + $0x80] sm:$0x3]
    %v2605 = vld [vmem:[#allocation2 + $0x88] sm:$0x3]
    %vm2618 = vcmask 1045504
    %v2619 = vrot.slane %v2594, 2
    %v2620 = vrot.slane %v2000, 2
    %v2621 = vsel %vm2618, %v2619, %v2620
    %v2622 = vrot.slane %v2595, 2
    %v2623 = vrot.slane %v2001, 2
    %v2624 = vsel %vm2618, %v2622, %v2623
    %v2625 = vrot.slane %v2596, 2
    %v2626 = vrot.slane %v2002, 2
    %v2627 = vsel %vm2618, %v2625, %v2626
    %v2628 = vrot.slane %v2597, 2
    %v2629 = vsel %vm2618, %v2620, %v2628
    %v2630 = vrot.slane %v2598, 2
    %v2631 = vsel %vm2618, %v2623, %v2630
    %v2632 = vrot.slane %v2599, 2
    %v2633 = vsel %vm2618, %v2626, %v2632
    %v2634 = vrot.slane %v2600, 2
    %v2635 = vrot.slane %v2006, 2
    %v2636 = vsel %vm2618, %v2634, %v2635
    %v2637 = vrot.slane %v2601, 2
    %v2638 = vrot.slane %v2007, 2
    %v2639 = vsel %vm2618, %v2637, %v2638
    %v2640 = vrot.slane %v2602, 2
    %v2641 = vrot.slane %v2008, 2
    %v2642 = vsel %vm2618, %v2640, %v2641
    %v2643 = vrot.slane %v2603, 2
    %v2644 = vsel %vm2618, %v2635, %v2643
    %v2645 = vrot.slane %v2604, 2
    %v2646 = vsel %vm2618, %v2638, %v2645
    %v2647 = vrot.slane %v2605, 2
    %v2648 = vsel %vm2618, %v2641, %v2647
    %s2657 = scalar_lea.vmem %s2, 1120
    %v2658 = vld [vmem:[%s2657] sm:$0xff]
    %v2659 = vld [vmem:[%s2657 + $0x8] sm:$0xff]
    %v2660 = vld [vmem:[%s2657 + $0x10] sm:$0xff]
    %v2661 = vld [vmem:[%s2657 + $0x18] sm:$0xff]
    %v2662 = vld [vmem:[%s2657 + $0x20] sm:$0xff]
    %v2663 = vld [vmem:[%s2657 + $0x28] sm:$0xff]
    %v2664 = vld [vmem:[%s2657 + $0x30] sm:$0xff]
    %v2665 = vld [vmem:[%s2657 + $0x38] sm:$0xff]
    %v2666 = vld [vmem:[%s2657 + $0x40] sm:$0xff]
    %v2667 = vld [vmem:[%s2657 + $0x48] sm:$0xff]
    %v2668 = vld [vmem:[%s2657 + $0x50] sm:$0xff]
    %v2669 = vld [vmem:[%s2657 + $0x58] sm:$0xff]
    %v2670 = vld [vmem:[%s2657 + $0x60] sm:$0xff]
    %v2671 = vld [vmem:[%s2657 + $0x68] sm:$0xff]
    %v2672 = vld [vmem:[%s2657 + $0x70] sm:$0xff]
    %v2673 = vld [vmem:[%s2657 + $0x78] sm:$0xff]
    %v2674 = vld [vmem:[%s2657 + $0x80] sm:$0xff]
    %v2675 = vld [vmem:[%s2657 + $0x88] sm:$0xff]
    %v2676 = vld [vmem:[%s2657 + $0x90] sm:$0xff]
    %v2677 = vld [vmem:[%s2657 + $0x98] sm:$0xff]
    %v2678 = vld [vmem:[%s2657 + $0xa0] sm:$0xff]
    %v2679 = vld [vmem:[%s2657 + $0xa8] sm:$0xff]
    %v2680 = vld [vmem:[%s2657 + $0xb0] sm:$0xff]
    %v2681 = vld [vmem:[%s2657 + $0xb8] sm:$0xff]
    %v2682 = vld [vmem:[%s2657 + $0xc0] sm:$0xff]
    %v2683 = vld [vmem:[%s2657 + $0xc8] sm:$0xff]
    %v2684 = vld [vmem:[%s2657 + $0xd0] sm:$0xff]
    %v2685 = vld [vmem:[%s2657 + $0xd8] sm:$0xff]
    %v2686 = vld [vmem:[%s2657 + $0xe0] sm:$0xff]
    %v2687 = vld [vmem:[%s2657 + $0xe8] sm:$0xff]
    %v2688 = vld [vmem:[%s2657 + $0xf0] sm:$0xff]
    %v2689 = vld [vmem:[%s2657 + $0xf8] sm:$0xff]
    %v2690 = vld [vmem:[%s2657 + $0x100] sm:$0xff]
    %v2691 = vld [vmem:[%s2657 + $0x108] sm:$0xff]
    %v2692 = vld [vmem:[%s2657 + $0x110] sm:$0xff]
    %v2693 = vld [vmem:[%s2657 + $0x118] sm:$0xff]
    %v2694 = vld [vmem:[%s2657 + $0x120] sm:$0xff]
    %v2695 = vld [vmem:[%s2657 + $0x128] sm:$0xff]
    %v2696 = vld [vmem:[%s2657 + $0x130] sm:$0xff]
    %v2697 = vld [vmem:[%s2657 + $0x138] sm:$0xff]
    %v2698 = vld [vmem:[%s2657 + $0x140] sm:$0xff]
    %v2699 = vld [vmem:[%s2657 + $0x148] sm:$0xff]
    %v2700 = vld [vmem:[%s2657 + $0x150] sm:$0xff]
    %v2701 = vld [vmem:[%s2657 + $0x158] sm:$0xff]
    %v2702 = vld [vmem:[%s2657 + $0x160] sm:$0xff]
    %v2703 = vld [vmem:[%s2657 + $0x168] sm:$0xff]
    %v2704 = vld [vmem:[%s2657 + $0x170] sm:$0xff]
    %v2705 = vld [vmem:[%s2657 + $0x178] sm:$0xff]
    %v2706 = vld [vmem:[%s2657 + $0x180] sm:$0xff]
    %v2707 = vld [vmem:[%s2657 + $0x188] sm:$0xff]
    %v2708 = vld [vmem:[%s2657 + $0x190] sm:$0xff]
    %v2709 = vld [vmem:[%s2657 + $0x198] sm:$0xff]
    %v2710 = vld [vmem:[%s2657 + $0x1a0] sm:$0xff]
    %v2711 = vld [vmem:[%s2657 + $0x1a8] sm:$0xff]
    %v2712 = vld [vmem:[%s2657 + $0x1b0] sm:$0xff]
    %v2713 = vld [vmem:[%s2657 + $0x1b8] sm:$0xff]
    %v2714 = vld [vmem:[%s2657 + $0x1c0] sm:$0xff]
    %v2715 = vld [vmem:[%s2657 + $0x1c8] sm:$0xff]
    %v2716 = vld [vmem:[%s2657 + $0x1d0] sm:$0xff]
    %v2717 = vld [vmem:[%s2657 + $0x1d8] sm:$0xff]
    %v2718 = vld [vmem:[%s2657 + $0x1e0] sm:$0xff]
    %v2719 = vld [vmem:[%s2657 + $0x1e8] sm:$0xff]
    %v2720 = vld [vmem:[%s2657 + $0x1f0] sm:$0xff]
    %v2721 = vld [vmem:[%s2657 + $0x1f8] sm:$0xff]
    %v2722 = vld [vmem:[%s2657 + $0x200] sm:$0xff]
    %v2723 = vld [vmem:[%s2657 + $0x208] sm:$0xff]
    %v2724 = vld [vmem:[%s2657 + $0x210] sm:$0xff]
    %v2725 = vld [vmem:[%s2657 + $0x218] sm:$0xff]
    %v2726 = vld [vmem:[%s2657 + $0x220] sm:$0xff]
    %v2727 = vld [vmem:[%s2657 + $0x228] sm:$0xff]
    %v2728 = vsel %vm2219, %v2627, 0
    %v2730 = vsel %vm2219, %v2633, 0
    %v2732 = vsel %vm2219, %v2642, 0
    %v2734 = vsel %vm2219, %v2648, 0
    %2736 = vmatprep.subr.mxu0 %v2689
    %2737 = vmatpush1.msra.mxu0 %v2688
    %2738 = vmatprep.subr.mxu0 %v2687
    %2739 = vmatpush1.msra.mxu0 %v2686
    %2740 = vmatprep.subr.mxu0 %v2685
    %2741 = vmatpush1.msra.mxu0 %v2684
    %2742 = vmatprep.subr.mxu0 %v2683
    %2743 = vmatpush1.msra.mxu0 %v2682
    %2744 = vmatprep.subr.mxu0 %v2681
    %2745 = vmatpush1.msra.mxu0 %v2680
    %2746 = vmatprep.subr.mxu0 %v2679
    %2747 = vmatpush1.msra.mxu0 %v2678
    %2748 = vmatprep.subr.mxu0 %v2677
    %2749 = vmatpush1.msra.mxu0 %v2676
    %2750 = vmatprep.subr.mxu0 %v2675
    %2751 = vmatpush1.msra.mxu0 %v2674
    %2752 = vmatprep.subr.mxu0 %v2673
    %2753 = vmatpush1.msra.mxu0 %v2672
    %2754 = vmatprep.subr.mxu0 %v2671
    %2755 = vmatpush1.msra.mxu0 %v2670
    %2756 = vmatprep.subr.mxu0 %v2669
    %2757 = vmatpush1.msra.mxu0 %v2668
    %2758 = vmatprep.subr.mxu0 %v2667
    %2759 = vmatpush1.msra.mxu0 %v2666
    %2760 = vmatprep.subr.mxu0 %v2665
    %2761 = vmatpush1.msra.mxu0 %v2664
    %2762 = vmatprep.subr.mxu0 %v2663
    %2763 = vmatpush1.msra.mxu0 %v2662
    %2764 = vmatprep.subr.mxu0 %v2661
    %2765 = vmatpush1.msra.mxu0 %v2660
    %2766 = vmatprep.subr.mxu0 %v2659
    %2767 = vmatpush1.msra.mxu0 %v2658
    %2768 = vmatprep.subr.mxu0 %v2721
    %2769 = vmatpush2.msra.mxu0 %v2720
    %2770 = vmatprep.subr.mxu0 %v2719
    %2771 = vmatpush2.msra.mxu0 %v2718
    %2772 = vmatprep.subr.mxu0 %v2717
    %2773 = vmatpush2.msra.mxu0 %v2716
    %2774 = vmatprep.subr.mxu0 %v2715
    %2775 = vmatpush2.msra.mxu0 %v2714
    %2776 = vmatprep.subr.mxu0 %v2713
    %2777 = vmatpush2.msra.mxu0 %v2712
    %2778 = vmatprep.subr.mxu0 %v2711
    %2779 = vmatpush2.msra.mxu0 %v2710
    %2780 = vmatprep.subr.mxu0 %v2709
    %2781 = vmatpush2.msra.mxu0 %v2708
    %2782 = vmatprep.subr.mxu0 %v2707
    %2783 = vmatpush2.msra.mxu0 %v2706
    %2784 = vmatprep.subr.mxu0 %v2705
    %2785 = vmatpush2.msra.mxu0 %v2704
    %2786 = vmatprep.subr.mxu0 %v2703
    %2787 = vmatpush2.msra.mxu0 %v2702
    %2788 = vmatprep.subr.mxu0 %v2701
    %2789 = vmatpush2.msra.mxu0 %v2700
    %2790 = vmatprep.subr.mxu0 %v2699
    %2791 = vmatpush2.msra.mxu0 %v2698
    %2792 = vmatprep.subr.mxu0 %v2697
    %2793 = vmatpush2.msra.mxu0 %v2696
    %2794 = vmatprep.subr.mxu0 %v2695
    %2795 = vmatpush2.msra.mxu0 %v2694
    %2796 = vmatprep.subr.mxu0 %v2693
    %2797 = vmatpush2.msra.mxu0 %v2692
    %2798 = vmatprep.subr.mxu0 %v2691
    %2799 = vmatpush2.msra.mxu0 %v2690
    %2800 = vmatprep.mubr.f32.mxu0 %v2624
    %2801 = vmatmul.mubr.f32.gmra.mxu0 %v2621
    %v2802 = vpop.f32.mrf.mxu0
    %v2803 = vadd.f32 0.0, %v2802
    %v2804 = vpop.f32.mrf.mxu0
    %v2805 = vadd.f32 0.0, %v2804
    %2806 = vmatprep.mubr.f32.mxu0 %v2631
    %2807 = vmatmul.mubr.f32.gmra.mxu0 %v2629
    %v2808 = vpop.f32.mrf.mxu0
    %v2809 = vadd.f32 0.0, %v2808
    %v2810 = vpop.f32.mrf.mxu0
    %v2811 = vadd.f32 0.0, %v2810
    %2812 = vmatprep.mubr.f32.mxu0 %v2639
    %2813 = vmatmul.mubr.f32.gmra.mxu0 %v2636
    %v2814 = vpop.f32.mrf.mxu0
    %v2815 = vadd.f32 0.0, %v2814
    %v2816 = vpop.f32.mrf.mxu0
    %v2817 = vadd.f32 0.0, %v2816
    %2818 = vmatprep.mubr.f32.mxu0 %v2646
    %2819 = vmatmul.mubr.f32.gmra.mxu0 %v2644
    %v2820 = vpop.f32.mrf.mxu0
    %v2821 = vadd.f32 0.0, %v2820
    %v2822 = vpop.f32.mrf.mxu0
    %v2823 = vadd.f32 0.0, %v2822
    %2824 = vdwg.mxu0
    %2825 = vmatprep.subr.mxu0 0.0
    %2826 = vmatpush1.msra.mxu0 0.0
    %2827 = vmatprep.subr.mxu0 0.0
    %2828 = vmatpush1.msra.mxu0 0.0
    %2829 = vmatprep.subr.mxu0 0.0
    %2830 = vmatpush1.msra.mxu0 0.0
    %2831 = vmatprep.subr.mxu0 0.0
    %2832 = vmatpush1.msra.mxu0 0.0
    %2833 = vmatprep.subr.mxu0 0.0
    %2834 = vmatpush1.msra.mxu0 0.0
    %2835 = vmatprep.subr.mxu0 0.0
    %2836 = vmatpush1.msra.mxu0 0.0
    %2837 = vmatprep.subr.mxu0 0.0
    %2838 = vmatpush1.msra.mxu0 0.0
    %2839 = vmatprep.subr.mxu0 0.0
    %2840 = vmatpush1.msra.mxu0 0.0
    %2841 = vmatprep.subr.mxu0 0.0
    %2842 = vmatpush1.msra.mxu0 0.0
    %2843 = vmatprep.subr.mxu0 0.0
    %2844 = vmatpush1.msra.mxu0 0.0
    %2845 = vmatprep.subr.mxu0 0.0
    %2846 = vmatpush1.msra.mxu0 0.0
    %2847 = vmatprep.subr.mxu0 0.0
    %2848 = vmatpush1.msra.mxu0 0.0
    %2849 = vmatprep.subr.mxu0 0.0
    %2850 = vmatpush1.msra.mxu0 0.0
    %2851 = vmatprep.subr.mxu0 %v2727
    %2852 = vmatpush1.msra.mxu0 %v2726
    %2853 = vmatprep.subr.mxu0 %v2725
    %2854 = vmatpush1.msra.mxu0 %v2724
    %2855 = vmatprep.subr.mxu0 %v2723
    %2856 = vmatpush1.msra.mxu0 %v2722
    %2857 = vmatprep.subr.mxu0 0.0
    %2858 = vmatpush2.msra.mxu0 0.0
    %2859 = vmatprep.subr.mxu0 0.0
    %2860 = vmatpush2.msra.mxu0 0.0
    %2861 = vmatprep.subr.mxu0 0.0
    %2862 = vmatpush2.msra.mxu0 0.0
    %2863 = vmatprep.subr.mxu0 0.0
    %2864 = vmatpush2.msra.mxu0 0.0
    %2865 = vmatprep.subr.mxu0 0.0
    %2866 = vmatpush2.msra.mxu0 0.0
    %2867 = vmatprep.subr.mxu0 0.0
    %2868 = vmatpush2.msra.mxu0 0.0
    %2869 = vmatprep.subr.mxu0 0.0
    %2870 = vmatpush2.msra.mxu0 0.0
    %2871 = vmatprep.subr.mxu0 0.0
    %2872 = vmatpush2.msra.mxu0 0.0
    %2873 = vmatprep.subr.mxu0 0.0
    %2874 = vmatpush2.msra.mxu0 0.0
    %2875 = vmatprep.subr.mxu0 0.0
    %2876 = vmatpush2.msra.mxu0 0.0
    %2877 = vmatprep.subr.mxu0 0.0
    %2878 = vmatpush2.msra.mxu0 0.0
    %2879 = vmatprep.subr.mxu0 0.0
    %2880 = vmatpush2.msra.mxu0 0.0
    %2881 = vmatprep.subr.mxu0 0.0
    %2882 = vmatpush2.msra.mxu0 0.0
    %2883 = vmatprep.subr.mxu0 0.0
    %2884 = vmatpush2.msra.mxu0 0.0
    %2885 = vmatprep.subr.mxu0 0.0
    %2886 = vmatpush2.msra.mxu0 0.0
    %2887 = vmatprep.subr.mxu0 0.0
    %2888 = vmatpush2.msra.mxu0 0.0
    %2889 = vmatprep.mubr.f32.mxu0 0.0
    %2890 = vmatmul.mubr.f32.gmra.mxu0 %v2728
    %v2891 = vpop.f32.mrf.mxu0
    %v2892 = vadd.f32 %v2803, %v2891
    %v2893 = vpop.f32.mrf.mxu0
    %v2894 = vadd.f32 %v2805, %v2893
    %2895 = vmatprep.mubr.f32.mxu0 0.0
    %2896 = vmatmul.mubr.f32.gmra.mxu0 %v2730
    %v2897 = vpop.f32.mrf.mxu0
    %v2898 = vadd.f32 %v2809, %v2897
    %v2899 = vpop.f32.mrf.mxu0
    %v2900 = vadd.f32 %v2811, %v2899
    %2901 = vmatprep.mubr.f32.mxu0 0.0
    %2902 = vmatmul.mubr.f32.gmra.mxu0 %v2732
    %v2903 = vpop.f32.mrf.mxu0
    %v2904 = vadd.f32 %v2815, %v2903
    %v2905 = vpop.f32.mrf.mxu0
    %v2906 = vadd.f32 %v2817, %v2905
    %2907 = vmatprep.mubr.f32.mxu0 0.0
    %2908 = vmatmul.mubr.f32.gmra.mxu0 %v2734
    %v2909 = vpop.f32.mrf.mxu0
    %v2910 = vadd.f32 %v2821, %v2909
    %v2911 = vpop.f32.mrf.mxu0
    %v2912 = vadd.f32 %v2823, %v2911
    %2913 = vdwg.mxu0
    %v2914 = vadd.f32 %v2572, %v2892
    %v2915 = vadd.f32 %v2574, %v2894
    %v2916 = vadd.f32 %v2578, %v2898
    %v2917 = vadd.f32 %v2580, %v2900
    %v2918 = vadd.f32 %v2584, %v2904
    %v2919 = vadd.f32 %v2586, %v2906
    %v2920 = vadd.f32 %v2590, %v2910
    %v2921 = vadd.f32 %v2592, %v2912
    %v2922 = vadd.f32 %v2914, %v2916
    %v2923 = vadd.f32 %v2922, %v2918
    %v2924 = vadd.f32 %v2923, %v2920
    %v2925 = vrot.slane %v2924, 4
    %v2926 = vadd.f32 %v2924, %v2925
    %v2927 = vrot.slane %v2926, 2
    %v2928 = vadd.f32 %v2926, %v2927
    %v2929 = vrot.slane %v2928, 1
    %v2930 = vadd.f32 %v2928, %v2929
    %v2931 = vadd.f32 %v2915, %v2917
    %v2932 = vadd.f32 %v2931, %v2919
    %v2933 = vadd.f32 %v2932, %v2921
    %v2934 = vrot.slane %v2933, 4
    %v2935 = vadd.f32 %v2933, %v2934
    %v2936 = vrot.slane %v2935, 2
    %v2937 = vadd.f32 %v2935, %v2936
    %v2938 = vrot.slane %v2937, 1
    %v2939 = vadd.f32 %v2937, %v2938
    %v2940 = vmul.f32 %v2914, %v2914
    %v2941 = vmul.f32 %v2915, %v2915
    %v2942 = vmul.f32 %v2916, %v2916
    %v2943 = vmul.f32 %v2917, %v2917
    %v2944 = vmul.f32 %v2918, %v2918
    %v2945 = vmul.f32 %v2919, %v2919
    %v2946 = vmul.f32 %v2920, %v2920
    %v2947 = vmul.f32 %v2921, %v2921
    %v2948 = vadd.f32 %v2940, %v2942
    %v2949 = vadd.f32 %v2948, %v2944
    %v2950 = vadd.f32 %v2949, %v2946
    %v2951 = vrot.slane %v2950, 4
    %v2952 = vadd.f32 %v2950, %v2951
    %v2953 = vrot.slane %v2952, 2
    %v2954 = vadd.f32 %v2952, %v2953
    %v2955 = vrot.slane %v2954, 1
    %v2956 = vadd.f32 %v2954, %v2955
    %v2957 = vadd.f32 %v2941, %v2943
    %v2958 = vadd.f32 %v2957, %v2945
    %v2959 = vadd.f32 %v2958, %v2947
    %v2960 = vrot.slane %v2959, 4
    %v2961 = vadd.f32 %v2959, %v2960
    %v2962 = vrot.slane %v2961, 2
    %v2963 = vadd.f32 %v2961, %v2962
    %v2964 = vrot.slane %v2963, 1
    %v2965 = vadd.f32 %v2963, %v2964
    %v2966 = vld [vmem:[%s6] sm:$0xff]
    %v2967 = vld [vmem:[%s6 + $0x8] sm:$0xff]
    %v2968 = vld [vmem:[%s6 + $0x10] sm:$0xff]
    %v2969 = vld [vmem:[%s6 + $0x18] sm:$0xff]
    %v2970 = vld [vmem:[%s6 + $0x20] sm:$0xff]
    %v2971 = vld [vmem:[%s6 + $0x28] sm:$0xff]
    %v2972 = vld [vmem:[%s6 + $0x30] sm:$0xff]
    %v2973 = vld [vmem:[%s6 + $0x38] sm:$0xff]
    %v2974 = vld [vmem:[%s6 + $0x40] sm:$0xff]
    %v2975 = vld [vmem:[%s6 + $0x48] sm:$0xff]
    %v2976 = vld [vmem:[%s6 + $0x50] sm:$0xff]
    %v2977 = vld [vmem:[%s6 + $0x58] sm:$0xff]
    %v2978 = vld [vmem:[%s6 + $0x60] sm:$0xff]
    %v2979 = vld [vmem:[%s6 + $0x68] sm:$0xff]
    %v2980 = vld [vmem:[%s6 + $0x70] sm:$0xff]
    %v2981 = vld [vmem:[%s6 + $0x78] sm:$0xff]
    %v2982 = vld [vmem:[%s6 + $0x80] sm:$0xff]
    %v2983 = vld [vmem:[%s6 + $0x88] sm:$0xff]
    %v2984 = vld [vmem:[%s6 + $0x90] sm:$0xff]
    %v2985 = vld [vmem:[%s6 + $0x98] sm:$0xff]
    %v2986 = vld [vmem:[%s6 + $0xa0] sm:$0xff]
    %v2987 = vld [vmem:[%s6 + $0xa8] sm:$0xff]
    %v2988 = vld [vmem:[%s6 + $0xb0] sm:$0xff]
    %v2989 = vld [vmem:[%s6 + $0xb8] sm:$0xff]
    %v2990 = vld [vmem:[%s6 + $0xc0] sm:$0xff]
    %v2991 = vld [vmem:[%s6 + $0xc8] sm:$0xff]
    %v2992 = vld [vmem:[%s6 + $0xd0] sm:$0xff]
    %v2993 = vld [vmem:[%s6 + $0xd8] sm:$0xff]
    %v2994 = vld [vmem:[%s6 + $0xe0] sm:$0xff]
    %v2995 = vld [vmem:[%s6 + $0xe8] sm:$0xff]
    %v2996 = vld [vmem:[%s6 + $0xf0] sm:$0xff]
    %v2997 = vld [vmem:[%s6 + $0xf8] sm:$0xff]
    %2998 = vmatprep.subr.mxu0 0.0
    %2999 = vmatpush1.msra.mxu0 %v2981
    %3000 = vmatprep.subr.mxu0 0.0
    %3001 = vmatpush1.msra.mxu0 %v2980
    %3002 = vmatprep.subr.mxu0 0.0
    %3003 = vmatpush1.msra.mxu0 %v2979
    %3004 = vmatprep.subr.mxu0 0.0
    %3005 = vmatpush1.msra.mxu0 %v2978
    %3006 = vmatprep.subr.mxu0 0.0
    %3007 = vmatpush1.msra.mxu0 %v2977
    %3008 = vmatprep.subr.mxu0 0.0
    %3009 = vmatpush1.msra.mxu0 %v2976
    %3010 = vmatprep.subr.mxu0 0.0
    %3011 = vmatpush1.msra.mxu0 %v2975
    %3012 = vmatprep.subr.mxu0 0.0
    %3013 = vmatpush1.msra.mxu0 %v2974
    %3014 = vmatprep.subr.mxu0 0.0
    %3015 = vmatpush1.msra.mxu0 %v2973
    %3016 = vmatprep.subr.mxu0 0.0
    %3017 = vmatpush1.msra.mxu0 %v2972
    %3018 = vmatprep.subr.mxu0 0.0
    %3019 = vmatpush1.msra.mxu0 %v2971
    %3020 = vmatprep.subr.mxu0 0.0
    %3021 = vmatpush1.msra.mxu0 %v2970
    %3022 = vmatprep.subr.mxu0 0.0
    %3023 = vmatpush1.msra.mxu0 %v2969
    %3024 = vmatprep.subr.mxu0 0.0
    %3025 = vmatpush1.msra.mxu0 %v2968
    %3026 = vmatprep.subr.mxu0 0.0
    %3027 = vmatpush1.msra.mxu0 %v2967
    %3028 = vmatprep.subr.mxu0 0.0
    %3029 = vmatpush1.msra.mxu0 %v2966
    %3030 = vmatprep.subr.mxu0 0.0
    %3031 = vmatpush2.msra.mxu0 %v2997
    %3032 = vmatprep.subr.mxu0 0.0
    %3033 = vmatpush2.msra.mxu0 %v2996
    %3034 = vmatprep.subr.mxu0 0.0
    %3035 = vmatpush2.msra.mxu0 %v2995
    %3036 = vmatprep.subr.mxu0 0.0
    %3037 = vmatpush2.msra.mxu0 %v2994
    %3038 = vmatprep.subr.mxu0 0.0
    %3039 = vmatpush2.msra.mxu0 %v2993
    %3040 = vmatprep.subr.mxu0 0.0
    %3041 = vmatpush2.msra.mxu0 %v2992
    %3042 = vmatprep.subr.mxu0 0.0
    %3043 = vmatpush2.msra.mxu0 %v2991
    %3044 = vmatprep.subr.mxu0 0.0
    %3045 = vmatpush2.msra.mxu0 %v2990
    %3046 = vmatprep.subr.mxu0 0.0
    %3047 = vmatpush2.msra.mxu0 %v2989
    %3048 = vmatprep.subr.mxu0 0.0
    %3049 = vmatpush2.msra.mxu0 %v2988
    %3050 = vmatprep.subr.mxu0 0.0
    %3051 = vmatpush2.msra.mxu0 %v2987
    %3052 = vmatprep.subr.mxu0 0.0
    %3053 = vmatpush2.msra.mxu0 %v2986
    %3054 = vmatprep.subr.mxu0 0.0
    %3055 = vmatpush2.msra.mxu0 %v2985
    %3056 = vmatprep.subr.mxu0 0.0
    %3057 = vmatpush2.msra.mxu0 %v2984
    %3058 = vmatprep.subr.mxu0 0.0
    %3059 = vmatpush2.msra.mxu0 %v2983
    %3060 = vmatprep.subr.mxu0 0.0
    %3061 = vmatpush2.msra.mxu0 %v2982
    %3062 = vmatprep.mubr.f32.mxu0 %v2939
    %3063 = vmatmul.mubr.f32.gmra.mxu0 %v2930
    %v3064 = vpop.f32.mrf.mxu0
    %v3065 = vadd.f32 0.0, %v3064
    %v3066 = vpop.f32.mrf.mxu0
    %3067 = vdwg.mxu0
    %v3068 = vmul.f32 %v3065, 0.001953125
    %3069 = vmatprep.subr.mxu0 0.0
    %3070 = vmatpush1.msra.mxu0 %v2981
    %3071 = vmatprep.subr.mxu0 0.0
    %3072 = vmatpush1.msra.mxu0 %v2980
    %3073 = vmatprep.subr.mxu0 0.0
    %3074 = vmatpush1.msra.mxu0 %v2979
    %3075 = vmatprep.subr.mxu0 0.0
    %3076 = vmatpush1.msra.mxu0 %v2978
    %3077 = vmatprep.subr.mxu0 0.0
    %3078 = vmatpush1.msra.mxu0 %v2977
    %3079 = vmatprep.subr.mxu0 0.0
    %3080 = vmatpush1.msra.mxu0 %v2976
    %3081 = vmatprep.subr.mxu0 0.0
    %3082 = vmatpush1.msra.mxu0 %v2975
    %3083 = vmatprep.subr.mxu0 0.0
    %3084 = vmatpush1.msra.mxu0 %v2974
    %3085 = vmatprep.subr.mxu0 0.0
    %3086 = vmatpush1.msra.mxu0 %v2973
    %3087 = vmatprep.subr.mxu0 0.0
    %3088 = vmatpush1.msra.mxu0 %v2972
    %3089 = vmatprep.subr.mxu0 0.0
    %3090 = vmatpush1.msra.mxu0 %v2971
    %3091 = vmatprep.subr.mxu0 0.0
    %3092 = vmatpush1.msra.mxu0 %v2970
    %3093 = vmatprep.subr.mxu0 0.0
    %3094 = vmatpush1.msra.mxu0 %v2969
    %3095 = vmatprep.subr.mxu0 0.0
    %3096 = vmatpush1.msra.mxu0 %v2968
    %3097 = vmatprep.subr.mxu0 0.0
    %3098 = vmatpush1.msra.mxu0 %v2967
    %3099 = vmatprep.subr.mxu0 0.0
    %3100 = vmatpush1.msra.mxu0 %v2966
    %3101 = vmatprep.subr.mxu0 0.0
    %3102 = vmatpush2.msra.mxu0 %v2997
    %3103 = vmatprep.subr.mxu0 0.0
    %3104 = vmatpush2.msra.mxu0 %v2996
    %3105 = vmatprep.subr.mxu0 0.0
    %3106 = vmatpush2.msra.mxu0 %v2995
    %3107 = vmatprep.subr.mxu0 0.0
    %3108 = vmatpush2.msra.mxu0 %v2994
    %3109 = vmatprep.subr.mxu0 0.0
    %3110 = vmatpush2.msra.mxu0 %v2993
    %3111 = vmatprep.subr.mxu0 0.0
    %3112 = vmatpush2.msra.mxu0 %v2992
    %3113 = vmatprep.subr.mxu0 0.0
    %3114 = vmatpush2.msra.mxu0 %v2991
    %3115 = vmatprep.subr.mxu0 0.0
    %3116 = vmatpush2.msra.mxu0 %v2990
    %3117 = vmatprep.subr.mxu0 0.0
    %3118 = vmatpush2.msra.mxu0 %v2989
    %3119 = vmatprep.subr.mxu0 0.0
    %3120 = vmatpush2.msra.mxu0 %v2988
    %3121 = vmatprep.subr.mxu0 0.0
    %3122 = vmatpush2.msra.mxu0 %v2987
    %3123 = vmatprep.subr.mxu0 0.0
    %3124 = vmatpush2.msra.mxu0 %v2986
    %3125 = vmatprep.subr.mxu0 0.0
    %3126 = vmatpush2.msra.mxu0 %v2985
    %3127 = vmatprep.subr.mxu0 0.0
    %3128 = vmatpush2.msra.mxu0 %v2984
    %3129 = vmatprep.subr.mxu0 0.0
    %3130 = vmatpush2.msra.mxu0 %v2983
    %3131 = vmatprep.subr.mxu0 0.0
    %3132 = vmatpush2.msra.mxu0 %v2982
    %3133 = vmatprep.mubr.f32.mxu0 %v2965
    %3134 = vmatmul.mubr.f32.gmra.mxu0 %v2956
    %v3135 = vpop.f32.mrf.mxu0
    %v3136 = vadd.f32 0.0, %v3135
    %v3137 = vpop.f32.mrf.mxu0
    %3138 = vdwg.mxu0
    %v3139 = vmul.f32 %v3136, 0.001953125
    %v3140 = vmul.f32 %v3068, %v3068
    %v3141 = vsub.f32 %v3139, %v3140
    %v3142 = vld [vmem:[%s12] sm:$0x1]
    %v3143 = vadd.f32 %v3141, 1e-05
    %v3144 = vrsqrt.pop %v3143
    %v3145 = vmul.f32 %v3142, %v3144
    %v3146 = vld [vmem:[%s13] sm:$0x1]
    %v3147 = vmul.f32 %v3068, %v3145
    %v3148 = vsub.f32 %v3146, %v3147
    %v3149 = vld [vmem:[%s7] sm:$0xff]
    %v3150 = vld [vmem:[%s7 + $0x8] sm:$0xff]
    %v3151 = vld [vmem:[%s7 + $0x10] sm:$0xff]
    %v3152 = vld [vmem:[%s7 + $0x18] sm:$0xff]
    %v3154 = vsel %vm1018, %v3145, 0
    %3156 = vmatprep.subr.mxu0 0.0
    %3157 = vmatpush1.msra.mxu0 0.0
    %3158 = vmatprep.subr.mxu0 0.0
    %3159 = vmatpush1.msra.mxu0 0.0
    %3160 = vmatprep.subr.mxu0 0.0
    %3161 = vmatpush1.msra.mxu0 0.0
    %3162 = vmatprep.subr.mxu0 0.0
    %3163 = vmatpush1.msra.mxu0 0.0
    %3164 = vmatprep.subr.mxu0 0.0
    %3165 = vmatpush1.msra.mxu0 0.0
    %3166 = vmatprep.subr.mxu0 0.0
    %3167 = vmatpush1.msra.mxu0 0.0
    %3168 = vmatprep.subr.mxu0 0.0
    %3169 = vmatpush1.msra.mxu0 0.0
    %3170 = vmatprep.subr.mxu0 0.0
    %3171 = vmatpush1.msra.mxu0 0.0
    %3172 = vmatprep.subr.mxu0 0.0
    %3173 = vmatpush1.msra.mxu0 0.0
    %3174 = vmatprep.subr.mxu0 0.0
    %3175 = vmatpush1.msra.mxu0 0.0
    %3176 = vmatprep.subr.mxu0 0.0
    %3177 = vmatpush1.msra.mxu0 0.0
    %3178 = vmatprep.subr.mxu0 0.0
    %3179 = vmatpush1.msra.mxu0 0.0
    %3180 = vmatprep.subr.mxu0 0.0
    %3181 = vmatpush1.msra.mxu0 0.0
    %3182 = vmatprep.subr.mxu0 0.0
    %3183 = vmatpush1.msra.mxu0 0.0
    %3184 = vmatprep.subr.mxu0 %v3152
    %3185 = vmatpush1.msra.mxu0 %v3151
    %3186 = vmatprep.subr.mxu0 %v3150
    %3187 = vmatpush1.msra.mxu0 %v3149
    %3188 = vmatprep.subr.mxu0 0.0
    %3189 = vmatpush2.msra.mxu0 0.0
    %3190 = vmatprep.subr.mxu0 0.0
    %3191 = vmatpush2.msra.mxu0 0.0
    %3192 = vmatprep.subr.mxu0 0.0
    %3193 = vmatpush2.msra.mxu0 0.0
    %3194 = vmatprep.subr.mxu0 0.0
    %3195 = vmatpush2.msra.mxu0 0.0
    %3196 = vmatprep.subr.mxu0 0.0
    %3197 = vmatpush2.msra.mxu0 0.0
    %3198 = vmatprep.subr.mxu0 0.0
    %3199 = vmatpush2.msra.mxu0 0.0
    %3200 = vmatprep.subr.mxu0 0.0
    %3201 = vmatpush2.msra.mxu0 0.0
    %3202 = vmatprep.subr.mxu0 0.0
    %3203 = vmatpush2.msra.mxu0 0.0
    %3204 = vmatprep.subr.mxu0 0.0
    %3205 = vmatpush2.msra.mxu0 0.0
    %3206 = vmatprep.subr.mxu0 0.0
    %3207 = vmatpush2.msra.mxu0 0.0
    %3208 = vmatprep.subr.mxu0 0.0
    %3209 = vmatpush2.msra.mxu0 0.0
    %3210 = vmatprep.subr.mxu0 0.0
    %3211 = vmatpush2.msra.mxu0 0.0
    %3212 = vmatprep.subr.mxu0 0.0
    %3213 = vmatpush2.msra.mxu0 0.0
    %3214 = vmatprep.subr.mxu0 0.0
    %3215 = vmatpush2.msra.mxu0 0.0
    %3216 = vmatprep.subr.mxu0 0.0
    %3217 = vmatpush2.msra.mxu0 0.0
    %3218 = vmatprep.subr.mxu0 0.0
    %3219 = vmatpush2.msra.mxu0 0.0
    %3220 = vmatprep.mubr.f32.mxu0 0.0
    %3221 = vmatmul.mubr.f32.gmra.mxu0 %v3154
    %v3222 = vpop.f32.mrf.mxu0
    %v3223 = vadd.f32 0.0, %v3222
    %v3224 = vpop.f32.mrf.mxu0
    %v3225 = vadd.f32 0.0, %v3224
    %3226 = vdwg.mxu0
    %v3228 = vsel %vm1018, %v3148, 0
    %3230 = vmatprep.subr.mxu0 0.0
    %3231 = vmatpush1.msra.mxu0 0.0
    %3232 = vmatprep.subr.mxu0 0.0
    %3233 = vmatpush1.msra.mxu0 0.0
    %3234 = vmatprep.subr.mxu0 0.0
    %3235 = vmatpush1.msra.mxu0 0.0
    %3236 = vmatprep.subr.mxu0 0.0
    %3237 = vmatpush1.msra.mxu0 0.0
    %3238 = vmatprep.subr.mxu0 0.0
    %3239 = vmatpush1.msra.mxu0 0.0
    %3240 = vmatprep.subr.mxu0 0.0
    %3241 = vmatpush1.msra.mxu0 0.0
    %3242 = vmatprep.subr.mxu0 0.0
    %3243 = vmatpush1.msra.mxu0 0.0
    %3244 = vmatprep.subr.mxu0 0.0
    %3245 = vmatpush1.msra.mxu0 0.0
    %3246 = vmatprep.subr.mxu0 0.0
    %3247 = vmatpush1.msra.mxu0 0.0
    %3248 = vmatprep.subr.mxu0 0.0
    %3249 = vmatpush1.msra.mxu0 0.0
    %3250 = vmatprep.subr.mxu0 0.0
    %3251 = vmatpush1.msra.mxu0 0.0
    %3252 = vmatprep.subr.mxu0 0.0
    %3253 = vmatpush1.msra.mxu0 0.0
    %3254 = vmatprep.subr.mxu0 0.0
    %3255 = vmatpush1.msra.mxu0 0.0
    %3256 = vmatprep.subr.mxu0 0.0
    %3257 = vmatpush1.msra.mxu0 0.0
    %3258 = vmatprep.subr.mxu0 %v3152
    %3259 = vmatpush1.msra.mxu0 %v3151
    %3260 = vmatprep.subr.mxu0 %v3150
    %3261 = vmatpush1.msra.mxu0 %v3149
    %3262 = vmatprep.subr.mxu0 0.0
    %3263 = vmatpush2.msra.mxu0 0.0
    %3264 = vmatprep.subr.mxu0 0.0
    %3265 = vmatpush2.msra.mxu0 0.0
    %3266 = vmatprep.subr.mxu0 0.0
    %3267 = vmatpush2.msra.mxu0 0.0
    %3268 = vmatprep.subr.mxu0 0.0
    %3269 = vmatpush2.msra.mxu0 0.0
    %3270 = vmatprep.subr.mxu0 0.0
    %3271 = vmatpush2.msra.mxu0 0.0
    %3272 = vmatprep.subr.mxu0 0.0
    %3273 = vmatpush2.msra.mxu0 0.0
    %3274 = vmatprep.subr.mxu0 0.0
    %3275 = vmatpush2.msra.mxu0 0.0
    %3276 = vmatprep.subr.mxu0 0.0
    %3277 = vmatpush2.msra.mxu0 0.0
    %3278 = vmatprep.subr.mxu0 0.0
    %3279 = vmatpush2.msra.mxu0 0.0
    %3280 = vmatprep.subr.mxu0 0.0
    %3281 = vmatpush2.msra.mxu0 0.0
    %3282 = vmatprep.subr.mxu0 0.0
    %3283 = vmatpush2.msra.mxu0 0.0
    %3284 = vmatprep.subr.mxu0 0.0
    %3285 = vmatpush2.msra.mxu0 0.0
    %3286 = vmatprep.subr.mxu0 0.0
    %3287 = vmatpush2.msra.mxu0 0.0
    %3288 = vmatprep.subr.mxu0 0.0
    %3289 = vmatpush2.msra.mxu0 0.0
    %3290 = vmatprep.subr.mxu0 0.0
    %3291 = vmatpush2.msra.mxu0 0.0
    %3292 = vmatprep.subr.mxu0 0.0
    %3293 = vmatpush2.msra.mxu0 0.0
    %3294 = vmatprep.mubr.f32.mxu0 0.0
    %3295 = vmatmul.mubr.f32.gmra.mxu0 %v3228
    %v3296 = vpop.f32.mrf.mxu0
    %v3297 = vadd.f32 0.0, %v3296
    %v3298 = vpop.f32.mrf.mxu0
    %v3299 = vadd.f32 0.0, %v3298
    %3300 = vdwg.mxu0
    %v3301 = vlaneseq
    %v3302 = vshrl.u32 %v3301, 7
    %v3303 = vsub.s32 0, %v3302
    %v3304 = vrot.slane %v3223, %v3303
    %v3305 = vlaneseq
    %v3306 = vshrl.u32 %v3305, 7
    %v3307 = vsub.s32 0, %v3306
    %v3308 = vrot.slane %v3225, %v3307
    %v3309 = vmul.f32 %v2914, %v3304
    %v3310 = vmul.f32 %v2915, %v3308
    %v3311 = vmul.f32 %v2916, %v3304
    %v3312 = vmul.f32 %v2917, %v3308
    %v3313 = vmul.f32 %v2918, %v3304
    %v3314 = vmul.f32 %v2919, %v3308
    %v3315 = vmul.f32 %v2920, %v3304
    %v3316 = vmul.f32 %v2921, %v3308
    %v3317 = vlaneseq
    %v3318 = vshrl.u32 %v3317, 7
    %v3319 = vsub.s32 0, %v3318
    %v3320 = vrot.slane %v3297, %v3319
    %v3321 = vlaneseq
    %v3322 = vshrl.u32 %v3321, 7
    %v3323 = vsub.s32 0, %v3322
    %v3324 = vrot.slane %v3299, %v3323
    %v3325 = vadd.f32 %v3309, %v3320
    %v3326 = vadd.f32 %v3310, %v3324
    %v3327 = vadd.f32 %v3311, %v3320
    %v3328 = vadd.f32 %v3312, %v3324
    %v3329 = vadd.f32 %v3313, %v3320
    %v3330 = vadd.f32 %v3314, %v3324
    %v3331 = vadd.f32 %v3315, %v3320
    %v3332 = vadd.f32 %v3316, %v3324
    %v3333 = vmax.f32 %v3325, 0.0
    %v3334 = vmax.f32 %v3326, 0.0
    %v3335 = vmax.f32 %v3327, 0.0
    %v3336 = vmax.f32 %v3328, 0.0
    %v3337 = vmax.f32 %v3329, 0.0
    %v3338 = vmax.f32 %v3330, 0.0
    %v3339 = vmax.f32 %v3331, 0.0
    %v3340 = vmax.f32 %v3332, 0.0
    %vm3341 = vcmp.lt.s32.totalorder %v1003, 304
    %vm3342 = vmand %vm1004, %vm3341
    %3343 = vst.msk [vmem:[#allocation3] ss:$8 sm:$0x7] %vm3342, 0.0
    %3344 = vst.msk [vmem:[#allocation3] ss:$8 sm:$0x0] %vm3342, 0.0
    %s3345 = scalar_lea.vmem [#allocation3], 48
    %3346 = vst.msk [vmem:[%s3345] ss:$8 sm:$0x7] %vm3342, 0.0
    %3347 = vst.msk [vmem:[%s3345] ss:$8 sm:$0x0] %vm3342, 0.0
    %s3348 = scalar_lea.vmem [#allocation3], 25
    %3349 = vst.msk [vmem:[%s3348] ss:$8 sm:$0x7] %vm3342, 0.0
    %3350 = vst.msk [vmem:[%s3348] ss:$8 sm:$0x0] %vm3342, 0.0
    %s3351 = scalar_lea.vmem [#allocation3], 73
    %3352 = vst.msk [vmem:[%s3351] ss:$8 sm:$0x7] %vm3342, 0.0
    %3353 = vst.msk [vmem:[%s3351] ss:$8 sm:$0x0] %vm3342, 0.0
    %vm3354 = vcmask 261120
    %3355 = vst.msk [vmem:[#allocation3] sm:$0xff] %vm3354, 0.0
    %vm3356 = vcmask 254976
    %3357 = vst.msk [vmem:[#allocation3 + $0x18] sm:$0x3] %vm3356, 0.0
    %3358 = vst.msk [vmem:[#allocation3 + $0x30] sm:$0xff] %vm3354, 0.0
    %3359 = vst.msk [vmem:[#allocation3 + $0x48] sm:$0x3] %vm3356, 0.0
    %vm3360 = vcmask 392320
    %3361 = vst.msk [vmem:[#allocation3 + $0x10] sm:$0xff] %vm3360, 0.0
    %vm3362 = vcmask 386176
    %3363 = vst.msk [vmem:[#allocation3 + $0x28] sm:$0x3] %vm3362, 0.0
    %3364 = vst.msk [vmem:[#allocation3 + $0x40] sm:$0xff] %vm3360, 0.0
    %3365 = vst.msk [vmem:[#allocation3 + $0x58] sm:$0x3] %vm3362, 0.0
    %v3374 = vcombine.low %v3333, %v3334
    %v3375 = vcombine.high %v3333, %v3334
    %v3377 = vunpack.c.l.s4 1983009808
    %v3378 = vunpack.c.0.s8 %v3377
    %v3379 = vlaneseq
    %v3380 = vshrl.u32 %v3379, 7
    %v3381 = vsub.s32 %v3378, %v3380
    %v3382 = vrot.slane %v3374, %v3381
    %v3384 = vunpack.c.l.s4 1983009808
    %v3385 = vunpack.c.0.s8 %v3384
    %v3386 = vlaneseq
    %v3387 = vshrl.u32 %v3386, 7
    %v3388 = vsub.s32 %v3385, %v3387
    %v3389 = vrot.slane %v3375, %v3388
    %v3390 = vcombine.high %v3382, %v3382
    %v3391 = vcombine.high %v3389, %v3389
    %v3392 = vcombine.low %v3335, %v3336
    %v3393 = vcombine.high %v3335, %v3336
    %v3395 = vunpack.c.l.s4 1983009808
    %v3396 = vunpack.c.0.s8 %v3395
    %v3397 = vlaneseq
    %v3398 = vshrl.u32 %v3397, 7
    %v3399 = vsub.s32 %v3396, %v3398
    %v3400 = vrot.slane %v3392, %v3399
    %v3402 = vunpack.c.l.s4 1983009808
    %v3403 = vunpack.c.0.s8 %v3402
    %v3404 = vlaneseq
    %v3405 = vshrl.u32 %v3404, 7
    %v3406 = vsub.s32 %v3403, %v3405
    %v3407 = vrot.slane %v3393, %v3406
    %v3408 = vcombine.high %v3400, %v3400
    %v3409 = vcombine.high %v3407, %v3407
    %v3410 = vcombine.low %v3337, %v3338
    %v3411 = vcombine.high %v3337, %v3338
    %v3413 = vunpack.c.l.s4 1983009808
    %v3414 = vunpack.c.0.s8 %v3413
    %v3415 = vlaneseq
    %v3416 = vshrl.u32 %v3415, 7
    %v3417 = vsub.s32 %v3414, %v3416
    %v3418 = vrot.slane %v3410, %v3417
    %v3420 = vunpack.c.l.s4 1983009808
    %v3421 = vunpack.c.0.s8 %v3420
    %v3422 = vlaneseq
    %v3423 = vshrl.u32 %v3422, 7
    %v3424 = vsub.s32 %v3421, %v3423
    %v3425 = vrot.slane %v3411, %v3424
    %v3426 = vcombine.high %v3418, %v3418
    %v3427 = vcombine.high %v3425, %v3425
    %v3428 = vcombine.low %v3339, %v3340
    %v3429 = vcombine.high %v3339, %v3340
    %v3431 = vunpack.c.l.s4 1983009808
    %v3432 = vunpack.c.0.s8 %v3431
    %v3433 = vlaneseq
    %v3434 = vshrl.u32 %v3433, 7
    %v3435 = vsub.s32 %v3432, %v3434
    %v3436 = vrot.slane %v3428, %v3435
    %v3438 = vunpack.c.l.s4 1983009808
    %v3439 = vunpack.c.0.s8 %v3438
    %v3440 = vlaneseq
    %v3441 = vshrl.u32 %v3440, 7
    %v3442 = vsub.s32 %v3439, %v3441
    %v3443 = vrot.slane %v3429, %v3442
    %v3444 = vcombine.high %v3436, %v3436
    %v3445 = vcombine.high %v3443, %v3443
    %v3462 = vrot.slane %v3382, 7
    %v3463 = vrot.slane %v3462, 2
    %v3464 = vrot.slane %v3390, 7
    %v3465 = vrot.slane %v3464, 2
    %v3466 = vrot.slane %v3389, 7
    %v3467 = vrot.slane %v3466, 2
    %v3468 = vrot.slane %v3391, 7
    %v3469 = vrot.slane %v3468, 2
    %v3470 = vrot.slane %v3400, 7
    %v3471 = vrot.slane %v3470, 2
    %v3472 = vrot.slane %v3408, 7
    %v3473 = vrot.slane %v3472, 2
    %v3474 = vrot.slane %v3407, 7
    %v3475 = vrot.slane %v3474, 2
    %v3476 = vrot.slane %v3409, 7
    %v3477 = vrot.slane %v3476, 2
    %v3478 = vrot.slane %v3418, 7
    %v3479 = vrot.slane %v3478, 2
    %v3480 = vrot.slane %v3426, 7
    %v3481 = vrot.slane %v3480, 2
    %v3482 = vrot.slane %v3425, 7
    %v3483 = vrot.slane %v3482, 2
    %v3484 = vrot.slane %v3427, 7
    %v3485 = vrot.slane %v3484, 2
    %v3486 = vrot.slane %v3436, 7
    %v3487 = vrot.slane %v3486, 2
    %v3488 = vrot.slane %v3444, 7
    %v3489 = vrot.slane %v3488, 2
    %v3490 = vrot.slane %v3443, 7
    %v3491 = vrot.slane %v3490, 2
    %v3492 = vrot.slane %v3445, 7
    %v3493 = vrot.slane %v3492, 2
    %v3510 = vmax.f32 %v3382, %v3463
    %v3511 = vmax.f32 %v3390, %v3465
    %v3512 = vmax.f32 %v3389, %v3467
    %v3513 = vmax.f32 %v3391, %v3469
    %v3514 = vmax.f32 %v3400, %v3471
    %v3515 = vmax.f32 %v3408, %v3473
    %v3516 = vmax.f32 %v3407, %v3475
    %v3517 = vmax.f32 %v3409, %v3477
    %v3518 = vmax.f32 %v3418, %v3479
    %v3519 = vmax.f32 %v3426, %v3481
    %v3520 = vmax.f32 %v3425, %v3483
    %v3521 = vmax.f32 %v3427, %v3485
    %v3522 = vmax.f32 %v3436, %v3487
    %v3523 = vmax.f32 %v3444, %v3489
    %v3524 = vmax.f32 %v3443, %v3491
    %v3525 = vmax.f32 %v3445, %v3493
    %3542 = vrot.lane.b32.xlu0 %v3510, 112
    %v3543 = vpop.permute.xlu0 %3542
    %3544 = vrot.lane.b32.xlu0 %v3511, 112
    %v3545 = vpop.permute.xlu0 %3544
    %3546 = vrot.lane.b32.xlu0 %v3512, 112
    %v3547 = vpop.permute.xlu0 %3546
    %3548 = vrot.lane.b32.xlu0 %v3513, 112
    %v3549 = vpop.permute.xlu0 %3548
    %3550 = vrot.lane.b32.xlu0 %v3514, 112
    %v3551 = vpop.permute.xlu0 %3550
    %3552 = vrot.lane.b32.xlu0 %v3515, 112
    %v3553 = vpop.permute.xlu0 %3552
    %3554 = vrot.lane.b32.xlu0 %v3516, 112
    %v3555 = vpop.permute.xlu0 %3554
    %3556 = vrot.lane.b32.xlu0 %v3517, 112
    %v3557 = vpop.permute.xlu0 %3556
    %3558 = vrot.lane.b32.xlu0 %v3518, 112
    %v3559 = vpop.permute.xlu0 %3558
    %3560 = vrot.lane.b32.xlu0 %v3519, 112
    %v3561 = vpop.permute.xlu0 %3560
    %3562 = vrot.lane.b32.xlu0 %v3520, 112
    %v3563 = vpop.permute.xlu0 %3562
    %3564 = vrot.lane.b32.xlu0 %v3521, 112
    %v3565 = vpop.permute.xlu0 %3564
    %3566 = vrot.lane.b32.xlu0 %v3522, 112
    %v3567 = vpop.permute.xlu0 %3566
    %3568 = vrot.lane.b32.xlu0 %v3523, 112
    %v3569 = vpop.permute.xlu0 %3568
    %3570 = vrot.lane.b32.xlu0 %v3524, 112
    %v3571 = vpop.permute.xlu0 %3570
    %3572 = vrot.lane.b32.xlu0 %v3525, 112
    %v3573 = vpop.permute.xlu0 %3572
    %v3574 = vrot.slane %v3543, 2
    %v3575 = vrot.slane %v3545, 2
    %v3576 = vrot.slane %v3547, 2
    %v3577 = vrot.slane %v3549, 2
    %v3578 = vrot.slane %v3551, 2
    %v3579 = vrot.slane %v3553, 2
    %v3580 = vrot.slane %v3555, 2
    %v3581 = vrot.slane %v3557, 2
    %v3582 = vrot.slane %v3559, 2
    %v3583 = vrot.slane %v3561, 2
    %v3584 = vrot.slane %v3563, 2
    %v3585 = vrot.slane %v3565, 2
    %v3586 = vrot.slane %v3567, 2
    %v3587 = vrot.slane %v3569, 2
    %v3588 = vrot.slane %v3571, 2
    %v3589 = vrot.slane %v3573, 2
    %vm3590 = vcmask 916480
    %v3591 = vsel %vm3590, %v3543, %v3574
    %v3592 = vsel %vm3590, %v3545, %v3575
    %v3593 = vsel %vm3590, %v3547, %v3576
    %v3594 = vsel %vm3590, %v3549, %v3577
    %v3595 = vsel %vm3590, %v3551, %v3578
    %v3596 = vsel %vm3590, %v3553, %v3579
    %v3597 = vsel %vm3590, %v3555, %v3580
    %v3598 = vsel %vm3590, %v3557, %v3581
    %v3599 = vsel %vm3590, %v3559, %v3582
    %v3600 = vsel %vm3590, %v3561, %v3583
    %v3601 = vsel %vm3590, %v3563, %v3584
    %v3602 = vsel %vm3590, %v3565, %v3585
    %v3603 = vsel %vm3590, %v3567, %v3586
    %v3604 = vsel %vm3590, %v3569, %v3587
    %v3605 = vsel %vm3590, %v3571, %v3588
    %v3606 = vsel %vm3590, %v3573, %v3589
    %v3623 = vmax.f32 %v3510, %v3591
    %v3624 = vmax.f32 %v3511, %v3592
    %v3625 = vmax.f32 %v3512, %v3593
    %v3626 = vmax.f32 %v3513, %v3594
    %v3627 = vmax.f32 %v3514, %v3595
    %v3628 = vmax.f32 %v3515, %v3596
    %v3629 = vmax.f32 %v3516, %v3597
    %v3630 = vmax.f32 %v3517, %v3598
    %v3631 = vmax.f32 %v3518, %v3599
    %v3632 = vmax.f32 %v3519, %v3600
    %v3633 = vmax.f32 %v3520, %v3601
    %v3634 = vmax.f32 %v3521, %v3602
    %v3635 = vmax.f32 %v3522, %v3603
    %v3636 = vmax.f32 %v3523, %v3604
    %v3637 = vmax.f32 %v3524, %v3605
    %v3638 = vmax.f32 %v3525, %v3606
    %v3655 = vlaneseq
    %v3656 = vshrl.u32 %v3655, 7
    %v3657 = vsub.s32 0, %v3656
    %v3658 = vrot.slane %v3623, %v3657
    %v3659 = vlaneseq
    %v3660 = vshrl.u32 %v3659, 7
    %v3661 = vsub.s32 2, %v3660
    %v3662 = vrot.slane %v3623, %v3661
    %v3663 = vlaneseq
    %v3664 = vshrl.u32 %v3663, 7
    %v3665 = vsub.s32 0, %v3664
    %v3666 = vrot.slane %v3624, %v3665
    %v3667 = vlaneseq
    %v3668 = vshrl.u32 %v3667, 7
    %v3669 = vsub.s32 2, %v3668
    %v3670 = vrot.slane %v3624, %v3669
    %v3671 = vlaneseq
    %v3672 = vshrl.u32 %v3671, 7
    %v3673 = vsub.s32 0, %v3672
    %v3674 = vrot.slane %v3625, %v3673
    %v3675 = vlaneseq
    %v3676 = vshrl.u32 %v3675, 7
    %v3677 = vsub.s32 2, %v3676
    %v3678 = vrot.slane %v3625, %v3677
    %v3679 = vlaneseq
    %v3680 = vshrl.u32 %v3679, 7
    %v3681 = vsub.s32 0, %v3680
    %v3682 = vrot.slane %v3626, %v3681
    %v3683 = vlaneseq
    %v3684 = vshrl.u32 %v3683, 7
    %v3685 = vsub.s32 2, %v3684
    %v3686 = vrot.slane %v3626, %v3685
    %v3687 = vlaneseq
    %v3688 = vshrl.u32 %v3687, 7
    %v3689 = vsub.s32 0, %v3688
    %v3690 = vrot.slane %v3627, %v3689
    %v3691 = vlaneseq
    %v3692 = vshrl.u32 %v3691, 7
    %v3693 = vsub.s32 2, %v3692
    %v3694 = vrot.slane %v3627, %v3693
    %v3695 = vlaneseq
    %v3696 = vshrl.u32 %v3695, 7
    %v3697 = vsub.s32 0, %v3696
    %v3698 = vrot.slane %v3628, %v3697
    %v3699 = vlaneseq
    %v3700 = vshrl.u32 %v3699, 7
    %v3701 = vsub.s32 2, %v3700
    %v3702 = vrot.slane %v3628, %v3701
    %v3703 = vlaneseq
    %v3704 = vshrl.u32 %v3703, 7
    %v3705 = vsub.s32 0, %v3704
    %v3706 = vrot.slane %v3629, %v3705
    %v3707 = vlaneseq
    %v3708 = vshrl.u32 %v3707, 7
    %v3709 = vsub.s32 2, %v3708
    %v3710 = vrot.slane %v3629, %v3709
    %v3711 = vlaneseq
    %v3712 = vshrl.u32 %v3711, 7
    %v3713 = vsub.s32 0, %v3712
    %v3714 = vrot.slane %v3630, %v3713
    %v3715 = vlaneseq
    %v3716 = vshrl.u32 %v3715, 7
    %v3717 = vsub.s32 2, %v3716
    %v3718 = vrot.slane %v3630, %v3717
    %v3719 = vlaneseq
    %v3720 = vshrl.u32 %v3719, 7
    %v3721 = vsub.s32 0, %v3720
    %v3722 = vrot.slane %v3631, %v3721
    %v3723 = vlaneseq
    %v3724 = vshrl.u32 %v3723, 7
    %v3725 = vsub.s32 2, %v3724
    %v3726 = vrot.slane %v3631, %v3725
    %v3727 = vlaneseq
    %v3728 = vshrl.u32 %v3727, 7
    %v3729 = vsub.s32 0, %v3728
    %v3730 = vrot.slane %v3632, %v3729
    %v3731 = vlaneseq
    %v3732 = vshrl.u32 %v3731, 7
    %v3733 = vsub.s32 2, %v3732
    %v3734 = vrot.slane %v3632, %v3733
    %v3735 = vlaneseq
    %v3736 = vshrl.u32 %v3735, 7
    %v3737 = vsub.s32 0, %v3736
    %v3738 = vrot.slane %v3633, %v3737
    %v3739 = vlaneseq
    %v3740 = vshrl.u32 %v3739, 7
    %v3741 = vsub.s32 2, %v3740
    %v3742 = vrot.slane %v3633, %v3741
    %v3743 = vlaneseq
    %v3744 = vshrl.u32 %v3743, 7
    %v3745 = vsub.s32 0, %v3744
    %v3746 = vrot.slane %v3634, %v3745
    %v3747 = vlaneseq
    %v3748 = vshrl.u32 %v3747, 7
    %v3749 = vsub.s32 2, %v3748
    %v3750 = vrot.slane %v3634, %v3749
    %v3751 = vlaneseq
    %v3752 = vshrl.u32 %v3751, 7
    %v3753 = vsub.s32 0, %v3752
    %v3754 = vrot.slane %v3635, %v3753
    %v3755 = vlaneseq
    %v3756 = vshrl.u32 %v3755, 7
    %v3757 = vsub.s32 2, %v3756
    %v3758 = vrot.slane %v3635, %v3757
    %v3759 = vlaneseq
    %v3760 = vshrl.u32 %v3759, 7
    %v3761 = vsub.s32 0, %v3760
    %v3762 = vrot.slane %v3636, %v3761
    %v3763 = vlaneseq
    %v3764 = vshrl.u32 %v3763, 7
    %v3765 = vsub.s32 2, %v3764
    %v3766 = vrot.slane %v3636, %v3765
    %v3767 = vlaneseq
    %v3768 = vshrl.u32 %v3767, 7
    %v3769 = vsub.s32 0, %v3768
    %v3770 = vrot.slane %v3637, %v3769
    %v3771 = vlaneseq
    %v3772 = vshrl.u32 %v3771, 7
    %v3773 = vsub.s32 2, %v3772
    %v3774 = vrot.slane %v3637, %v3773
    %v3775 = vlaneseq
    %v3776 = vshrl.u32 %v3775, 7
    %v3777 = vsub.s32 0, %v3776
    %v3778 = vrot.slane %v3638, %v3777
    %v3779 = vlaneseq
    %v3780 = vshrl.u32 %v3779, 7
    %v3781 = vsub.s32 2, %v3780
    %v3782 = vrot.slane %v3638, %v3781
    %v3783 = vsel %vm1867, %v3666, %v3658
    %v3784 = vsel %vm1869, %v3674, %v3783
    %v3785 = vsel %vm1871, %v3682, %v3784
    %v3786 = vsel %vm1873, %v3690, %v3785
    %v3787 = vsel %vm1875, %v3698, %v3786
    %v3788 = vsel %vm1877, %v3706, %v3787
    %v3789 = vsel %vm1867, %v3670, %v3662
    %v3790 = vsel %vm1869, %v3678, %v3789
    %v3791 = vsel %vm1871, %v3686, %v3790
    %v3792 = vsel %vm1873, %v3694, %v3791
    %v3793 = vsel %vm1875, %v3702, %v3792
    %v3794 = vsel %vm1877, %v3710, %v3793
    %v3795 = vsel %vm1867, %v3730, %v3722
    %v3796 = vsel %vm1869, %v3738, %v3795
    %v3797 = vsel %vm1871, %v3746, %v3796
    %v3798 = vsel %vm1873, %v3754, %v3797
    %v3799 = vsel %vm1875, %v3762, %v3798
    %v3800 = vsel %vm1877, %v3770, %v3799
    %v3801 = vsel %vm1867, %v3734, %v3726
    %v3802 = vsel %vm1869, %v3742, %v3801
    %v3803 = vsel %vm1871, %v3750, %v3802
    %v3804 = vsel %vm1873, %v3758, %v3803
    %v3805 = vsel %vm1875, %v3766, %v3804
    %v3806 = vsel %vm1877, %v3774, %v3805
    %3807 = vrot.lane.b32.xlu0 %v3788, 32
    %v3808 = vpop.permute.xlu0 %3807
    %3809 = vrot.lane.b32.xlu0 %v3794, 32
    %v3810 = vpop.permute.xlu0 %3809
    %3811 = vrot.lane.b32.xlu0 %v3714, 32
    %v3812 = vpop.permute.xlu0 %3811
    %3813 = vrot.lane.b32.xlu0 %v3718, 32
    %v3814 = vpop.permute.xlu0 %3813
    %3815 = vrot.lane.b32.xlu0 %v3800, 32
    %v3816 = vpop.permute.xlu0 %3815
    %3817 = vrot.lane.b32.xlu0 %v3806, 32
    %v3818 = vpop.permute.xlu0 %3817
    %3819 = vrot.lane.b32.xlu0 %v3778, 32
    %v3820 = vpop.permute.xlu0 %3819
    %3821 = vrot.lane.b32.xlu0 %v3782, 32
    %v3822 = vpop.permute.xlu0 %3821
    %v3823 = vsel %vm3354, %v3808, %v3810
    %v3824 = vsel %vm3354, %v3812, %v3814
    %v3825 = vsel %vm3354, %v3816, %v3818
    %v3826 = vsel %vm3354, %v3820, %v3822
    %vm3839 = vcmask 1047809
    %3840 = vst.msk [vmem:[#allocation3] sm:$0xfe] %vm3839, %v3808
    %3841 = vst [vmem:[#allocation3 + $0x8] sm:$0xfe] %v3823
    %vm3842 = vcmask 130049
    %3843 = vst.msk [vmem:[#allocation3 + $0x10] sm:$0xfe] %vm3842, %v3810
    %vm3844 = vcmask 1040640
    %3845 = vst.msk [vmem:[#allocation3 + $0x18] sm:$0x1] %vm3844, %v3812
    %3846 = vst [vmem:[#allocation3 + $0x20] sm:$0x1] %v3824
    %vm3847 = vcmask 122880
    %3848 = vst.msk [vmem:[#allocation3 + $0x28] sm:$0x1] %vm3847, %v3814
    %3849 = vst.msk [vmem:[#allocation3 + $0x30] sm:$0xfe] %vm3839, %v3816
    %3850 = vst [vmem:[#allocation3 + $0x38] sm:$0xfe] %v3825
    %3851 = vst.msk [vmem:[#allocation3 + $0x40] sm:$0xfe] %vm3842, %v3818
    %3852 = vst.msk [vmem:[#allocation3 + $0x48] sm:$0x1] %vm3844, %v3820
    %3853 = vst [vmem:[#allocation3 + $0x50] sm:$0x1] %v3826
    %3854 = vst.msk [vmem:[#allocation3 + $0x58] sm:$0x1] %vm3847, %v3822
    %v3855 = vld [vmem:[#allocation3] sm:$0xff]
    %v3856 = vld [vmem:[#allocation3 + $0x8] sm:$0xff]
    %v3857 = vld [vmem:[#allocation3 + $0x10] sm:$0xff]
    %v3858 = vld [vmem:[#allocation3 + $0x30] sm:$0xff]
    %v3859 = vld [vmem:[#allocation3 + $0x38] sm:$0xff]
    %v3860 = vld [vmem:[#allocation3 + $0x40] sm:$0xff]
    %v3861 = vld [vmem:[%s3] sm:$0xff]
    %v3862 = vld [vmem:[%s3 + $0x8] sm:$0xff]
    %v3863 = vld [vmem:[%s3 + $0x10] sm:$0xff]
    %v3864 = vld [vmem:[%s3 + $0x18] sm:$0xff]
    %v3865 = vld [vmem:[%s3 + $0x20] sm:$0xff]
    %v3866 = vld [vmem:[%s3 + $0x28] sm:$0xff]
    %v3867 = vld [vmem:[%s3 + $0x30] sm:$0xff]
    %v3868 = vld [vmem:[%s3 + $0x38] sm:$0xff]
    %v3869 = vld [vmem:[%s3 + $0x40] sm:$0xff]
    %v3870 = vld [vmem:[%s3 + $0x48] sm:$0xff]
    %v3871 = vld [vmem:[%s3 + $0x50] sm:$0xff]
    %v3872 = vld [vmem:[%s3 + $0x58] sm:$0xff]
    %v3873 = vld [vmem:[%s3 + $0x60] sm:$0xff]
    %v3874 = vld [vmem:[%s3 + $0x68] sm:$0xff]
    %v3875 = vld [vmem:[%s3 + $0x70] sm:$0xff]
    %v3876 = vld [vmem:[%s3 + $0x78] sm:$0xff]
    %v3877 = vld [vmem:[%s3 + $0x80] sm:$0xff]
    %v3878 = vld [vmem:[%s3 + $0x88] sm:$0xff]
    %v3879 = vld [vmem:[%s3 + $0x90] sm:$0xff]
    %v3880 = vld [vmem:[%s3 + $0x98] sm:$0xff]
    %v3881 = vld [vmem:[%s3 + $0xa0] sm:$0xff]
    %v3882 = vld [vmem:[%s3 + $0xa8] sm:$0xff]
    %v3883 = vld [vmem:[%s3 + $0xb0] sm:$0xff]
    %v3884 = vld [vmem:[%s3 + $0xb8] sm:$0xff]
    %v3885 = vld [vmem:[%s3 + $0xc0] sm:$0xff]
    %v3886 = vld [vmem:[%s3 + $0xc8] sm:$0xff]
    %v3887 = vld [vmem:[%s3 + $0xd0] sm:$0xff]
    %v3888 = vld [vmem:[%s3 + $0xd8] sm:$0xff]
    %v3889 = vld [vmem:[%s3 + $0xe0] sm:$0xff]
    %v3890 = vld [vmem:[%s3 + $0xe8] sm:$0xff]
    %v3891 = vld [vmem:[%s3 + $0xf0] sm:$0xff]
    %v3892 = vld [vmem:[%s3 + $0xf8] sm:$0xff]
    %v3893 = vld [vmem:[%s3 + $0x100] sm:$0xff]
    %v3894 = vld [vmem:[%s3 + $0x108] sm:$0xff]
    %v3895 = vld [vmem:[%s3 + $0x110] sm:$0xff]
    %v3896 = vld [vmem:[%s3 + $0x118] sm:$0xff]
    %v3897 = vld [vmem:[%s3 + $0x120] sm:$0xff]
    %v3898 = vld [vmem:[%s3 + $0x128] sm:$0xff]
    %v3899 = vld [vmem:[%s3 + $0x130] sm:$0xff]
    %v3900 = vld [vmem:[%s3 + $0x138] sm:$0xff]
    %v3901 = vld [vmem:[%s3 + $0x140] sm:$0xff]
    %v3902 = vld [vmem:[%s3 + $0x148] sm:$0xff]
    %v3903 = vld [vmem:[%s3 + $0x150] sm:$0xff]
    %v3904 = vld [vmem:[%s3 + $0x158] sm:$0xff]
    %v3905 = vld [vmem:[%s3 + $0x160] sm:$0xff]
    %v3906 = vld [vmem:[%s3 + $0x168] sm:$0xff]
    %v3907 = vld [vmem:[%s3 + $0x170] sm:$0xff]
    %v3908 = vld [vmem:[%s3 + $0x178] sm:$0xff]
    %v3909 = vld [vmem:[%s3 + $0x180] sm:$0xff]
    %v3910 = vld [vmem:[%s3 + $0x188] sm:$0xff]
    %v3911 = vld [vmem:[%s3 + $0x190] sm:$0xff]
    %v3912 = vld [vmem:[%s3 + $0x198] sm:$0xff]
    %v3913 = vld [vmem:[%s3 + $0x1a0] sm:$0xff]
    %v3914 = vld [vmem:[%s3 + $0x1a8] sm:$0xff]
    %v3915 = vld [vmem:[%s3 + $0x1b0] sm:$0xff]
    %v3916 = vld [vmem:[%s3 + $0x1b8] sm:$0xff]
    %v3917 = vld [vmem:[%s3 + $0x1c0] sm:$0xff]
    %v3918 = vld [vmem:[%s3 + $0x1c8] sm:$0xff]
    %v3919 = vld [vmem:[%s3 + $0x1d0] sm:$0xff]
    %v3920 = vld [vmem:[%s3 + $0x1d8] sm:$0xff]
    %v3921 = vld [vmem:[%s3 + $0x1e0] sm:$0xff]
    %v3922 = vld [vmem:[%s3 + $0x1e8] sm:$0xff]
    %v3923 = vld [vmem:[%s3 + $0x1f0] sm:$0xff]
    %v3924 = vld [vmem:[%s3 + $0x1f8] sm:$0xff]
    %v3925 = vld [vmem:[%s3 + $0x200] sm:$0xff]
    %v3926 = vld [vmem:[%s3 + $0x208] sm:$0xff]
    %v3927 = vld [vmem:[%s3 + $0x210] sm:$0xff]
    %v3928 = vld [vmem:[%s3 + $0x218] sm:$0xff]
    %v3929 = vld [vmem:[%s3 + $0x220] sm:$0xff]
    %v3930 = vld [vmem:[%s3 + $0x228] sm:$0xff]
    %v3931 = vld [vmem:[%s3 + $0x230] sm:$0xff]
    %v3932 = vld [vmem:[%s3 + $0x238] sm:$0xff]
    %v3933 = vld [vmem:[%s3 + $0x240] sm:$0xff]
    %v3934 = vld [vmem:[%s3 + $0x248] sm:$0xff]
    %v3935 = vld [vmem:[%s3 + $0x250] sm:$0xff]
    %v3936 = vld [vmem:[%s3 + $0x258] sm:$0xff]
    %v3937 = vld [vmem:[#allocation3] sm:$0xfe]
    %v3938 = vld [vmem:[#allocation3 + $0x8] sm:$0xfe]
    %v3939 = vld [vmem:[#allocation3 + $0x10] sm:$0xfe]
    %v3940 = vld [vmem:[#allocation3 + $0x18] sm:$0x1]
    %v3941 = vld [vmem:[#allocation3 + $0x20] sm:$0x1]
    %v3942 = vld [vmem:[#allocation3 + $0x28] sm:$0x1]
    %v3943 = vld [vmem:[#allocation3 + $0x30] sm:$0xfe]
    %v3944 = vld [vmem:[#allocation3 + $0x38] sm:$0xfe]
    %v3945 = vld [vmem:[#allocation3 + $0x40] sm:$0xfe]
    %v3946 = vld [vmem:[#allocation3 + $0x48] sm:$0x1]
    %v3947 = vld [vmem:[#allocation3 + $0x50] sm:$0x1]
    %v3948 = vld [vmem:[#allocation3 + $0x58] sm:$0x1]
    %v3961 = vrot.slane %v3937, 1
    %v3962 = vrot.slane %v3940, 1
    %v3963 = vsel %vm2109, %v3961, %v3962
    %v3964 = vrot.slane %v3938, 1
    %v3965 = vrot.slane %v3941, 1
    %v3966 = vsel %vm2109, %v3964, %v3965
    %v3967 = vrot.slane %v3939, 1
    %v3968 = vrot.slane %v3942, 1
    %v3969 = vsel %vm2109, %v3967, %v3968
    %v3970 = vrot.slane %v3943, 1
    %v3971 = vrot.slane %v3946, 1
    %v3972 = vsel %vm2109, %v3970, %v3971
    %v3973 = vrot.slane %v3944, 1
    %v3974 = vrot.slane %v3947, 1
    %v3975 = vsel %vm2109, %v3973, %v3974
    %v3976 = vrot.slane %v3945, 1
    %v3977 = vrot.slane %v3948, 1
    %v3978 = vsel %vm2109, %v3976, %v3977
    %s3983 = scalar_lea.vmem %s3, 608
    %v3984 = vld [vmem:[%s3983] sm:$0xff]
    %v3985 = vld [vmem:[%s3983 + $0x8] sm:$0xff]
    %v3986 = vld [vmem:[%s3983 + $0x10] sm:$0xff]
    %v3987 = vld [vmem:[%s3983 + $0x18] sm:$0xff]
    %v3988 = vld [vmem:[%s3983 + $0x20] sm:$0xff]
    %v3989 = vld [vmem:[%s3983 + $0x28] sm:$0xff]
    %v3990 = vld [vmem:[%s3983 + $0x30] sm:$0xff]
    %v3991 = vld [vmem:[%s3983 + $0x38] sm:$0xff]
    %v3992 = vld [vmem:[%s3983 + $0x40] sm:$0xff]
    %v3993 = vld [vmem:[%s3983 + $0x48] sm:$0xff]
    %v3994 = vld [vmem:[%s3983 + $0x50] sm:$0xff]
    %v3995 = vld [vmem:[%s3983 + $0x58] sm:$0xff]
    %v3996 = vld [vmem:[%s3983 + $0x60] sm:$0xff]
    %v3997 = vld [vmem:[%s3983 + $0x68] sm:$0xff]
    %v3998 = vld [vmem:[%s3983 + $0x70] sm:$0xff]
    %v3999 = vld [vmem:[%s3983 + $0x78] sm:$0xff]
    %v4000 = vld [vmem:[%s3983 + $0x80] sm:$0xff]
    %v4001 = vld [vmem:[%s3983 + $0x88] sm:$0xff]
    %v4002 = vld [vmem:[%s3983 + $0x90] sm:$0xff]
    %v4003 = vld [vmem:[%s3983 + $0x98] sm:$0xff]
    %v4004 = vld [vmem:[%s3983 + $0xa0] sm:$0xff]
    %v4005 = vld [vmem:[%s3983 + $0xa8] sm:$0xff]
    %v4006 = vld [vmem:[%s3983 + $0xb0] sm:$0xff]
    %v4007 = vld [vmem:[%s3983 + $0xb8] sm:$0xff]
    %v4008 = vld [vmem:[%s3983 + $0xc0] sm:$0xff]
    %v4009 = vld [vmem:[%s3983 + $0xc8] sm:$0xff]
    %v4010 = vld [vmem:[%s3983 + $0xd0] sm:$0xff]
    %v4011 = vld [vmem:[%s3983 + $0xd8] sm:$0xff]
    %v4012 = vld [vmem:[%s3983 + $0xe0] sm:$0xff]
    %v4013 = vld [vmem:[%s3983 + $0xe8] sm:$0xff]
    %v4014 = vld [vmem:[%s3983 + $0xf0] sm:$0xff]
    %v4015 = vld [vmem:[%s3983 + $0xf8] sm:$0xff]
    %v4016 = vld [vmem:[%s3983 + $0x100] sm:$0xff]
    %v4017 = vld [vmem:[%s3983 + $0x108] sm:$0xff]
    %v4018 = vld [vmem:[%s3983 + $0x110] sm:$0xff]
    %v4019 = vld [vmem:[%s3983 + $0x118] sm:$0xff]
    %v4020 = vld [vmem:[%s3983 + $0x120] sm:$0xff]
    %v4021 = vld [vmem:[%s3983 + $0x128] sm:$0xff]
    %v4022 = vld [vmem:[%s3983 + $0x130] sm:$0xff]
    %v4023 = vld [vmem:[%s3983 + $0x138] sm:$0xff]
    %v4024 = vld [vmem:[%s3983 + $0x140] sm:$0xff]
    %v4025 = vld [vmem:[%s3983 + $0x148] sm:$0xff]
    %v4026 = vld [vmem:[%s3983 + $0x150] sm:$0xff]
    %v4027 = vld [vmem:[%s3983 + $0x158] sm:$0xff]
    %v4028 = vld [vmem:[%s3983 + $0x160] sm:$0xff]
    %v4029 = vld [vmem:[%s3983 + $0x168] sm:$0xff]
    %v4030 = vld [vmem:[%s3983 + $0x170] sm:$0xff]
    %v4031 = vld [vmem:[%s3983 + $0x178] sm:$0xff]
    %v4032 = vld [vmem:[%s3983 + $0x180] sm:$0xff]
    %v4033 = vld [vmem:[%s3983 + $0x188] sm:$0xff]
    %v4034 = vld [vmem:[%s3983 + $0x190] sm:$0xff]
    %v4035 = vld [vmem:[%s3983 + $0x198] sm:$0xff]
    %v4036 = vld [vmem:[%s3983 + $0x1a0] sm:$0xff]
    %v4037 = vld [vmem:[%s3983 + $0x1a8] sm:$0xff]
    %v4038 = vld [vmem:[%s3983 + $0x1b0] sm:$0xff]
    %v4039 = vld [vmem:[%s3983 + $0x1b8] sm:$0xff]
    %v4040 = vld [vmem:[%s3983 + $0x1c0] sm:$0xff]
    %v4041 = vld [vmem:[%s3983 + $0x1c8] sm:$0xff]
    %v4042 = vld [vmem:[%s3983 + $0x1d0] sm:$0xff]
    %v4043 = vld [vmem:[%s3983 + $0x1d8] sm:$0xff]
    %v4044 = vld [vmem:[%s3983 + $0x1e0] sm:$0xff]
    %v4045 = vld [vmem:[%s3983 + $0x1e8] sm:$0xff]
    %v4046 = vld [vmem:[%s3983 + $0x1f0] sm:$0xff]
    %v4047 = vld [vmem:[%s3983 + $0x1f8] sm:$0xff]
    %v4048 = vld [vmem:[%s3983 + $0x200] sm:$0xff]
    %v4049 = vld [vmem:[%s3983 + $0x208] sm:$0xff]
    %v4050 = vld [vmem:[%s3983 + $0x210] sm:$0xff]
    %v4051 = vld [vmem:[%s3983 + $0x218] sm:$0xff]
    %v4052 = vld [vmem:[%s3983 + $0x220] sm:$0xff]
    %v4053 = vld [vmem:[%s3983 + $0x228] sm:$0xff]
    %v4054 = vld [vmem:[%s3983 + $0x230] sm:$0xff]
    %v4055 = vld [vmem:[%s3983 + $0x238] sm:$0xff]
    %v4056 = vld [vmem:[%s3983 + $0x240] sm:$0xff]
    %v4057 = vld [vmem:[%s3983 + $0x248] sm:$0xff]
    %v4058 = vld [vmem:[%s3983 + $0x250] sm:$0xff]
    %v4059 = vld [vmem:[%s3983 + $0x258] sm:$0xff]
    %vm4060 = vcmask 392192
    %v4061 = vsel %vm4060, %v3969, 0
    %v4063 = vsel %vm4060, %v3978, 0
    %4065 = vmatprep.subr.mxu0 %v4015
    %4066 = vmatpush1.msra.mxu0 %v4014
    %4067 = vmatprep.subr.mxu0 %v4013
    %4068 = vmatpush1.msra.mxu0 %v4012
    %4069 = vmatprep.subr.mxu0 %v4011
    %4070 = vmatpush1.msra.mxu0 %v4010
    %4071 = vmatprep.subr.mxu0 %v4009
    %4072 = vmatpush1.msra.mxu0 %v4008
    %4073 = vmatprep.subr.mxu0 %v4007
    %4074 = vmatpush1.msra.mxu0 %v4006
    %4075 = vmatprep.subr.mxu0 %v4005
    %4076 = vmatpush1.msra.mxu0 %v4004
    %4077 = vmatprep.subr.mxu0 %v4003
    %4078 = vmatpush1.msra.mxu0 %v4002
    %4079 = vmatprep.subr.mxu0 %v4001
    %4080 = vmatpush1.msra.mxu0 %v4000
    %4081 = vmatprep.subr.mxu0 %v3999
    %4082 = vmatpush1.msra.mxu0 %v3998
    %4083 = vmatprep.subr.mxu0 %v3997
    %4084 = vmatpush1.msra.mxu0 %v3996
    %4085 = vmatprep.subr.mxu0 %v3995
    %4086 = vmatpush1.msra.mxu0 %v3994
    %4087 = vmatprep.subr.mxu0 %v3993
    %4088 = vmatpush1.msra.mxu0 %v3992
    %4089 = vmatprep.subr.mxu0 %v3991
    %4090 = vmatpush1.msra.mxu0 %v3990
    %4091 = vmatprep.subr.mxu0 %v3989
    %4092 = vmatpush1.msra.mxu0 %v3988
    %4093 = vmatprep.subr.mxu0 %v3987
    %4094 = vmatpush1.msra.mxu0 %v3986
    %4095 = vmatprep.subr.mxu0 %v3985
    %4096 = vmatpush1.msra.mxu0 %v3984
    %4097 = vmatprep.subr.mxu0 %v4047
    %4098 = vmatpush2.msra.mxu0 %v4046
    %4099 = vmatprep.subr.mxu0 %v4045
    %4100 = vmatpush2.msra.mxu0 %v4044
    %4101 = vmatprep.subr.mxu0 %v4043
    %4102 = vmatpush2.msra.mxu0 %v4042
    %4103 = vmatprep.subr.mxu0 %v4041
    %4104 = vmatpush2.msra.mxu0 %v4040
    %4105 = vmatprep.subr.mxu0 %v4039
    %4106 = vmatpush2.msra.mxu0 %v4038
    %4107 = vmatprep.subr.mxu0 %v4037
    %4108 = vmatpush2.msra.mxu0 %v4036
    %4109 = vmatprep.subr.mxu0 %v4035
    %4110 = vmatpush2.msra.mxu0 %v4034
    %4111 = vmatprep.subr.mxu0 %v4033
    %4112 = vmatpush2.msra.mxu0 %v4032
    %4113 = vmatprep.subr.mxu0 %v4031
    %4114 = vmatpush2.msra.mxu0 %v4030
    %4115 = vmatprep.subr.mxu0 %v4029
    %4116 = vmatpush2.msra.mxu0 %v4028
    %4117 = vmatprep.subr.mxu0 %v4027
    %4118 = vmatpush2.msra.mxu0 %v4026
    %4119 = vmatprep.subr.mxu0 %v4025
    %4120 = vmatpush2.msra.mxu0 %v4024
    %4121 = vmatprep.subr.mxu0 %v4023
    %4122 = vmatpush2.msra.mxu0 %v4022
    %4123 = vmatprep.subr.mxu0 %v4021
    %4124 = vmatpush2.msra.mxu0 %v4020
    %4125 = vmatprep.subr.mxu0 %v4019
    %4126 = vmatpush2.msra.mxu0 %v4018
    %4127 = vmatprep.subr.mxu0 %v4017
    %4128 = vmatpush2.msra.mxu0 %v4016
    %4129 = vmatprep.mubr.f32.mxu0 %v3966
    %4130 = vmatmul.mubr.f32.gmra.mxu0 %v3963
    %v4131 = vpop.f32.mrf.mxu0
    %v4132 = vadd.f32 0.0, %v4131
    %v4133 = vpop.f32.mrf.mxu0
    %v4134 = vadd.f32 0.0, %v4133
    %4135 = vmatprep.mubr.f32.mxu0 %v3975
    %4136 = vmatmul.mubr.f32.gmra.mxu0 %v3972
    %v4137 = vpop.f32.mrf.mxu0
    %v4138 = vadd.f32 0.0, %v4137
    %v4139 = vpop.f32.mrf.mxu0
    %v4140 = vadd.f32 0.0, %v4139
    %4141 = vdwg.mxu0
    %4142 = vmatprep.subr.mxu0 0.0
    %4143 = vmatpush1.msra.mxu0 0.0
    %4144 = vmatprep.subr.mxu0 0.0
    %4145 = vmatpush1.msra.mxu0 0.0
    %4146 = vmatprep.subr.mxu0 0.0
    %4147 = vmatpush1.msra.mxu0 0.0
    %4148 = vmatprep.subr.mxu0 0.0
    %4149 = vmatpush1.msra.mxu0 0.0
    %4150 = vmatprep.subr.mxu0 0.0
    %4151 = vmatpush1.msra.mxu0 0.0
    %4152 = vmatprep.subr.mxu0 0.0
    %4153 = vmatpush1.msra.mxu0 0.0
    %4154 = vmatprep.subr.mxu0 0.0
    %4155 = vmatpush1.msra.mxu0 0.0
    %4156 = vmatprep.subr.mxu0 0.0
    %4157 = vmatpush1.msra.mxu0 0.0
    %4158 = vmatprep.subr.mxu0 0.0
    %4159 = vmatpush1.msra.mxu0 0.0
    %4160 = vmatprep.subr.mxu0 0.0
    %4161 = vmatpush1.msra.mxu0 0.0
    %4162 = vmatprep.subr.mxu0 %v4059
    %4163 = vmatpush1.msra.mxu0 %v4058
    %4164 = vmatprep.subr.mxu0 %v4057
    %4165 = vmatpush1.msra.mxu0 %v4056
    %4166 = vmatprep.subr.mxu0 %v4055
    %4167 = vmatpush1.msra.mxu0 %v4054
    %4168 = vmatprep.subr.mxu0 %v4053
    %4169 = vmatpush1.msra.mxu0 %v4052
    %4170 = vmatprep.subr.mxu0 %v4051
    %4171 = vmatpush1.msra.mxu0 %v4050
    %4172 = vmatprep.subr.mxu0 %v4049
    %4173 = vmatpush1.msra.mxu0 %v4048
    %4174 = vmatprep.subr.mxu0 0.0
    %4175 = vmatpush2.msra.mxu0 0.0
    %4176 = vmatprep.subr.mxu0 0.0
    %4177 = vmatpush2.msra.mxu0 0.0
    %4178 = vmatprep.subr.mxu0 0.0
    %4179 = vmatpush2.msra.mxu0 0.0
    %4180 = vmatprep.subr.mxu0 0.0
    %4181 = vmatpush2.msra.mxu0 0.0
    %4182 = vmatprep.subr.mxu0 0.0
    %4183 = vmatpush2.msra.mxu0 0.0
    %4184 = vmatprep.subr.mxu0 0.0
    %4185 = vmatpush2.msra.mxu0 0.0
    %4186 = vmatprep.subr.mxu0 0.0
    %4187 = vmatpush2.msra.mxu0 0.0
    %4188 = vmatprep.subr.mxu0 0.0
    %4189 = vmatpush2.msra.mxu0 0.0
    %4190 = vmatprep.subr.mxu0 0.0
    %4191 = vmatpush2.msra.mxu0 0.0
    %4192 = vmatprep.subr.mxu0 0.0
    %4193 = vmatpush2.msra.mxu0 0.0
    %4194 = vmatprep.subr.mxu0 0.0
    %4195 = vmatpush2.msra.mxu0 0.0
    %4196 = vmatprep.subr.mxu0 0.0
    %4197 = vmatpush2.msra.mxu0 0.0
    %4198 = vmatprep.subr.mxu0 0.0
    %4199 = vmatpush2.msra.mxu0 0.0
    %4200 = vmatprep.subr.mxu0 0.0
    %4201 = vmatpush2.msra.mxu0 0.0
    %4202 = vmatprep.subr.mxu0 0.0
    %4203 = vmatpush2.msra.mxu0 0.0
    %4204 = vmatprep.subr.mxu0 0.0
    %4205 = vmatpush2.msra.mxu0 0.0
    %4206 = vmatprep.mubr.f32.mxu0 0.0
    %4207 = vmatmul.mubr.f32.gmra.mxu0 %v4061
    %v4208 = vpop.f32.mrf.mxu0
    %v4209 = vadd.f32 %v4132, %v4208
    %v4210 = vpop.f32.mrf.mxu0
    %v4211 = vadd.f32 %v4134, %v4210
    %4212 = vmatprep.mubr.f32.mxu0 0.0
    %4213 = vmatmul.mubr.f32.gmra.mxu0 %v4063
    %v4214 = vpop.f32.mrf.mxu0
    %v4215 = vadd.f32 %v4138, %v4214
    %v4216 = vpop.f32.mrf.mxu0
    %v4217 = vadd.f32 %v4140, %v4216
    %4218 = vdwg.mxu0
    %v4220 = vsel %vm4060, %v3857, 0
    %v4223 = vsel %vm4060, %v3860, 0
    %4225 = vmatprep.subr.mxu0 %v3892
    %4226 = vmatpush1.msra.mxu0 %v3891
    %4227 = vmatprep.subr.mxu0 %v3890
    %4228 = vmatpush1.msra.mxu0 %v3889
    %4229 = vmatprep.subr.mxu0 %v3888
    %4230 = vmatpush1.msra.mxu0 %v3887
    %4231 = vmatprep.subr.mxu0 %v3886
    %4232 = vmatpush1.msra.mxu0 %v3885
    %4233 = vmatprep.subr.mxu0 %v3884
    %4234 = vmatpush1.msra.mxu0 %v3883
    %4235 = vmatprep.subr.mxu0 %v3882
    %4236 = vmatpush1.msra.mxu0 %v3881
    %4237 = vmatprep.subr.mxu0 %v3880
    %4238 = vmatpush1.msra.mxu0 %v3879
    %4239 = vmatprep.subr.mxu0 %v3878
    %4240 = vmatpush1.msra.mxu0 %v3877
    %4241 = vmatprep.subr.mxu0 %v3876
    %4242 = vmatpush1.msra.mxu0 %v3875
    %4243 = vmatprep.subr.mxu0 %v3874
    %4244 = vmatpush1.msra.mxu0 %v3873
    %4245 = vmatprep.subr.mxu0 %v3872
    %4246 = vmatpush1.msra.mxu0 %v3871
    %4247 = vmatprep.subr.mxu0 %v3870
    %4248 = vmatpush1.msra.mxu0 %v3869
    %4249 = vmatprep.subr.mxu0 %v3868
    %4250 = vmatpush1.msra.mxu0 %v3867
    %4251 = vmatprep.subr.mxu0 %v3866
    %4252 = vmatpush1.msra.mxu0 %v3865
    %4253 = vmatprep.subr.mxu0 %v3864
    %4254 = vmatpush1.msra.mxu0 %v3863
    %4255 = vmatprep.subr.mxu0 %v3862
    %4256 = vmatpush1.msra.mxu0 %v3861
    %4257 = vmatprep.subr.mxu0 %v3924
    %4258 = vmatpush2.msra.mxu0 %v3923
    %4259 = vmatprep.subr.mxu0 %v3922
    %4260 = vmatpush2.msra.mxu0 %v3921
    %4261 = vmatprep.subr.mxu0 %v3920
    %4262 = vmatpush2.msra.mxu0 %v3919
    %4263 = vmatprep.subr.mxu0 %v3918
    %4264 = vmatpush2.msra.mxu0 %v3917
    %4265 = vmatprep.subr.mxu0 %v3916
    %4266 = vmatpush2.msra.mxu0 %v3915
    %4267 = vmatprep.subr.mxu0 %v3914
    %4268 = vmatpush2.msra.mxu0 %v3913
    %4269 = vmatprep.subr.mxu0 %v3912
    %4270 = vmatpush2.msra.mxu0 %v3911
    %4271 = vmatprep.subr.mxu0 %v3910
    %4272 = vmatpush2.msra.mxu0 %v3909
    %4273 = vmatprep.subr.mxu0 %v3908
    %4274 = vmatpush2.msra.mxu0 %v3907
    %4275 = vmatprep.subr.mxu0 %v3906
    %4276 = vmatpush2.msra.mxu0 %v3905
    %4277 = vmatprep.subr.mxu0 %v3904
    %4278 = vmatpush2.msra.mxu0 %v3903
    %4279 = vmatprep.subr.mxu0 %v3902
    %4280 = vmatpush2.msra.mxu0 %v3901
    %4281 = vmatprep.subr.mxu0 %v3900
    %4282 = vmatpush2.msra.mxu0 %v3899
    %4283 = vmatprep.subr.mxu0 %v3898
    %4284 = vmatpush2.msra.mxu0 %v3897
    %4285 = vmatprep.subr.mxu0 %v3896
    %4286 = vmatpush2.msra.mxu0 %v3895
    %4287 = vmatprep.subr.mxu0 %v3894
    %4288 = vmatpush2.msra.mxu0 %v3893
    %4289 = vmatprep.mubr.f32.mxu0 %v3856
    %4290 = vmatmul.mubr.f32.gmra.mxu0 %v3855
    %v4291 = vpop.f32.mrf.mxu0
    %v4292 = vadd.f32 %v4209, %v4291
    %v4293 = vpop.f32.mrf.mxu0
    %v4294 = vadd.f32 %v4211, %v4293
    %4295 = vmatprep.mubr.f32.mxu0 %v3859
    %4296 = vmatmul.mubr.f32.gmra.mxu0 %v3858
    %v4297 = vpop.f32.mrf.mxu0
    %v4298 = vadd.f32 %v4215, %v4297
    %v4299 = vpop.f32.mrf.mxu0
    %v4300 = vadd.f32 %v4217, %v4299
    %4301 = vdwg.mxu0
    %4302 = vmatprep.subr.mxu0 0.0
    %4303 = vmatpush1.msra.mxu0 0.0
    %4304 = vmatprep.subr.mxu0 0.0
    %4305 = vmatpush1.msra.mxu0 0.0
    %4306 = vmatprep.subr.mxu0 0.0
    %4307 = vmatpush1.msra.mxu0 0.0
    %4308 = vmatprep.subr.mxu0 0.0
    %4309 = vmatpush1.msra.mxu0 0.0
    %4310 = vmatprep.subr.mxu0 0.0
    %4311 = vmatpush1.msra.mxu0 0.0
    %4312 = vmatprep.subr.mxu0 0.0
    %4313 = vmatpush1.msra.mxu0 0.0
    %4314 = vmatprep.subr.mxu0 0.0
    %4315 = vmatpush1.msra.mxu0 0.0
    %4316 = vmatprep.subr.mxu0 0.0
    %4317 = vmatpush1.msra.mxu0 0.0
    %4318 = vmatprep.subr.mxu0 0.0
    %4319 = vmatpush1.msra.mxu0 0.0
    %4320 = vmatprep.subr.mxu0 0.0
    %4321 = vmatpush1.msra.mxu0 0.0
    %4322 = vmatprep.subr.mxu0 %v3936
    %4323 = vmatpush1.msra.mxu0 %v3935
    %4324 = vmatprep.subr.mxu0 %v3934
    %4325 = vmatpush1.msra.mxu0 %v3933
    %4326 = vmatprep.subr.mxu0 %v3932
    %4327 = vmatpush1.msra.mxu0 %v3931
    %4328 = vmatprep.subr.mxu0 %v3930
    %4329 = vmatpush1.msra.mxu0 %v3929
    %4330 = vmatprep.subr.mxu0 %v3928
    %4331 = vmatpush1.msra.mxu0 %v3927
    %4332 = vmatprep.subr.mxu0 %v3926
    %4333 = vmatpush1.msra.mxu0 %v3925
    %4334 = vmatprep.subr.mxu0 0.0
    %4335 = vmatpush2.msra.mxu0 0.0
    %4336 = vmatprep.subr.mxu0 0.0
    %4337 = vmatpush2.msra.mxu0 0.0
    %4338 = vmatprep.subr.mxu0 0.0
    %4339 = vmatpush2.msra.mxu0 0.0
    %4340 = vmatprep.subr.mxu0 0.0
    %4341 = vmatpush2.msra.mxu0 0.0
    %4342 = vmatprep.subr.mxu0 0.0
    %4343 = vmatpush2.msra.mxu0 0.0
    %4344 = vmatprep.subr.mxu0 0.0
    %4345 = vmatpush2.msra.mxu0 0.0
    %4346 = vmatprep.subr.mxu0 0.0
    %4347 = vmatpush2.msra.mxu0 0.0
    %4348 = vmatprep.subr.mxu0 0.0
    %4349 = vmatpush2.msra.mxu0 0.0
    %4350 = vmatprep.subr.mxu0 0.0
    %4351 = vmatpush2.msra.mxu0 0.0
    %4352 = vmatprep.subr.mxu0 0.0
    %4353 = vmatpush2.msra.mxu0 0.0
    %4354 = vmatprep.subr.mxu0 0.0
    %4355 = vmatpush2.msra.mxu0 0.0
    %4356 = vmatprep.subr.mxu0 0.0
    %4357 = vmatpush2.msra.mxu0 0.0
    %4358 = vmatprep.subr.mxu0 0.0
    %4359 = vmatpush2.msra.mxu0 0.0
    %4360 = vmatprep.subr.mxu0 0.0
    %4361 = vmatpush2.msra.mxu0 0.0
    %4362 = vmatprep.subr.mxu0 0.0
    %4363 = vmatpush2.msra.mxu0 0.0
    %4364 = vmatprep.subr.mxu0 0.0
    %4365 = vmatpush2.msra.mxu0 0.0
    %4366 = vmatprep.mubr.f32.mxu0 0.0
    %4367 = vmatmul.mubr.f32.gmra.mxu0 %v4220
    %v4368 = vpop.f32.mrf.mxu0
    %v4369 = vadd.f32 %v4292, %v4368
    %v4370 = vpop.f32.mrf.mxu0
    %v4371 = vadd.f32 %v4294, %v4370
    %4372 = vmatprep.mubr.f32.mxu0 0.0
    %4373 = vmatmul.mubr.f32.gmra.mxu0 %v4223
    %v4374 = vpop.f32.mrf.mxu0
    %v4375 = vadd.f32 %v4298, %v4374
    %v4376 = vpop.f32.mrf.mxu0
    %v4377 = vadd.f32 %v4300, %v4376
    %4378 = vdwg.mxu0
    %v4379 = vld [vmem:[#allocation3] sm:$0xfc]
    %v4380 = vld [vmem:[#allocation3 + $0x8] sm:$0xfc]
    %v4381 = vld [vmem:[#allocation3 + $0x10] sm:$0xfc]
    %v4382 = vld [vmem:[#allocation3 + $0x18] sm:$0x3]
    %v4383 = vld [vmem:[#allocation3 + $0x20] sm:$0x3]
    %v4384 = vld [vmem:[#allocation3 + $0x28] sm:$0x3]
    %v4385 = vld [vmem:[#allocation3 + $0x30] sm:$0xfc]
    %v4386 = vld [vmem:[#allocation3 + $0x38] sm:$0xfc]
    %v4387 = vld [vmem:[#allocation3 + $0x40] sm:$0xfc]
    %v4388 = vld [vmem:[#allocation3 + $0x48] sm:$0x3]
    %v4389 = vld [vmem:[#allocation3 + $0x50] sm:$0x3]
    %v4390 = vld [vmem:[#allocation3 + $0x58] sm:$0x3]
    %v4403 = vrot.slane %v4379, 2
    %v4404 = vrot.slane %v4382, 2
    %v4405 = vsel %vm2618, %v4403, %v4404
    %v4406 = vrot.slane %v4380, 2
    %v4407 = vrot.slane %v4383, 2
    %v4408 = vsel %vm2618, %v4406, %v4407
    %v4409 = vrot.slane %v4381, 2
    %v4410 = vrot.slane %v4384, 2
    %v4411 = vsel %vm2618, %v4409, %v4410
    %v4412 = vrot.slane %v4385, 2
    %v4413 = vrot.slane %v4388, 2
    %v4414 = vsel %vm2618, %v4412, %v4413
    %v4415 = vrot.slane %v4386, 2
    %v4416 = vrot.slane %v4389, 2
    %v4417 = vsel %vm2618, %v4415, %v4416
    %v4418 = vrot.slane %v4387, 2
    %v4419 = vrot.slane %v4390, 2
    %v4420 = vsel %vm2618, %v4418, %v4419
    %s4425 = scalar_lea.vmem %s3, 1216
    %v4426 = vld [vmem:[%s4425] sm:$0xff]
    %v4427 = vld [vmem:[%s4425 + $0x8] sm:$0xff]
    %v4428 = vld [vmem:[%s4425 + $0x10] sm:$0xff]
    %v4429 = vld [vmem:[%s4425 + $0x18] sm:$0xff]
    %v4430 = vld [vmem:[%s4425 + $0x20] sm:$0xff]
    %v4431 = vld [vmem:[%s4425 + $0x28] sm:$0xff]
    %v4432 = vld [vmem:[%s4425 + $0x30] sm:$0xff]
    %v4433 = vld [vmem:[%s4425 + $0x38] sm:$0xff]
    %v4434 = vld [vmem:[%s4425 + $0x40] sm:$0xff]
    %v4435 = vld [vmem:[%s4425 + $0x48] sm:$0xff]
    %v4436 = vld [vmem:[%s4425 + $0x50] sm:$0xff]
    %v4437 = vld [vmem:[%s4425 + $0x58] sm:$0xff]
    %v4438 = vld [vmem:[%s4425 + $0x60] sm:$0xff]
    %v4439 = vld [vmem:[%s4425 + $0x68] sm:$0xff]
    %v4440 = vld [vmem:[%s4425 + $0x70] sm:$0xff]
    %v4441 = vld [vmem:[%s4425 + $0x78] sm:$0xff]
    %v4442 = vld [vmem:[%s4425 + $0x80] sm:$0xff]
    %v4443 = vld [vmem:[%s4425 + $0x88] sm:$0xff]
    %v4444 = vld [vmem:[%s4425 + $0x90] sm:$0xff]
    %v4445 = vld [vmem:[%s4425 + $0x98] sm:$0xff]
    %v4446 = vld [vmem:[%s4425 + $0xa0] sm:$0xff]
    %v4447 = vld [vmem:[%s4425 + $0xa8] sm:$0xff]
    %v4448 = vld [vmem:[%s4425 + $0xb0] sm:$0xff]
    %v4449 = vld [vmem:[%s4425 + $0xb8] sm:$0xff]
    %v4450 = vld [vmem:[%s4425 + $0xc0] sm:$0xff]
    %v4451 = vld [vmem:[%s4425 + $0xc8] sm:$0xff]
    %v4452 = vld [vmem:[%s4425 + $0xd0] sm:$0xff]
    %v4453 = vld [vmem:[%s4425 + $0xd8] sm:$0xff]
    %v4454 = vld [vmem:[%s4425 + $0xe0] sm:$0xff]
    %v4455 = vld [vmem:[%s4425 + $0xe8] sm:$0xff]
    %v4456 = vld [vmem:[%s4425 + $0xf0] sm:$0xff]
    %v4457 = vld [vmem:[%s4425 + $0xf8] sm:$0xff]
    %v4458 = vld [vmem:[%s4425 + $0x100] sm:$0xff]
    %v4459 = vld [vmem:[%s4425 + $0x108] sm:$0xff]
    %v4460 = vld [vmem:[%s4425 + $0x110] sm:$0xff]
    %v4461 = vld [vmem:[%s4425 + $0x118] sm:$0xff]
    %v4462 = vld [vmem:[%s4425 + $0x120] sm:$0xff]
    %v4463 = vld [vmem:[%s4425 + $0x128] sm:$0xff]
    %v4464 = vld [vmem:[%s4425 + $0x130] sm:$0xff]
    %v4465 = vld [vmem:[%s4425 + $0x138] sm:$0xff]
    %v4466 = vld [vmem:[%s4425 + $0x140] sm:$0xff]
    %v4467 = vld [vmem:[%s4425 + $0x148] sm:$0xff]
    %v4468 = vld [vmem:[%s4425 + $0x150] sm:$0xff]
    %v4469 = vld [vmem:[%s4425 + $0x158] sm:$0xff]
    %v4470 = vld [vmem:[%s4425 + $0x160] sm:$0xff]
    %v4471 = vld [vmem:[%s4425 + $0x168] sm:$0xff]
    %v4472 = vld [vmem:[%s4425 + $0x170] sm:$0xff]
    %v4473 = vld [vmem:[%s4425 + $0x178] sm:$0xff]
    %v4474 = vld [vmem:[%s4425 + $0x180] sm:$0xff]
    %v4475 = vld [vmem:[%s4425 + $0x188] sm:$0xff]
    %v4476 = vld [vmem:[%s4425 + $0x190] sm:$0xff]
    %v4477 = vld [vmem:[%s4425 + $0x198] sm:$0xff]
    %v4478 = vld [vmem:[%s4425 + $0x1a0] sm:$0xff]
    %v4479 = vld [vmem:[%s4425 + $0x1a8] sm:$0xff]
    %v4480 = vld [vmem:[%s4425 + $0x1b0] sm:$0xff]
    %v4481 = vld [vmem:[%s4425 + $0x1b8] sm:$0xff]
    %v4482 = vld [vmem:[%s4425 + $0x1c0] sm:$0xff]
    %v4483 = vld [vmem:[%s4425 + $0x1c8] sm:$0xff]
    %v4484 = vld [vmem:[%s4425 + $0x1d0] sm:$0xff]
    %v4485 = vld [vmem:[%s4425 + $0x1d8] sm:$0xff]
    %v4486 = vld [vmem:[%s4425 + $0x1e0] sm:$0xff]
    %v4487 = vld [vmem:[%s4425 + $0x1e8] sm:$0xff]
    %v4488 = vld [vmem:[%s4425 + $0x1f0] sm:$0xff]
    %v4489 = vld [vmem:[%s4425 + $0x1f8] sm:$0xff]
    %v4490 = vld [vmem:[%s4425 + $0x200] sm:$0xff]
    %v4491 = vld [vmem:[%s4425 + $0x208] sm:$0xff]
    %v4492 = vld [vmem:[%s4425 + $0x210] sm:$0xff]
    %v4493 = vld [vmem:[%s4425 + $0x218] sm:$0xff]
    %v4494 = vld [vmem:[%s4425 + $0x220] sm:$0xff]
    %v4495 = vld [vmem:[%s4425 + $0x228] sm:$0xff]
    %v4496 = vld [vmem:[%s4425 + $0x230] sm:$0xff]
    %v4497 = vld [vmem:[%s4425 + $0x238] sm:$0xff]
    %v4498 = vld [vmem:[%s4425 + $0x240] sm:$0xff]
    %v4499 = vld [vmem:[%s4425 + $0x248] sm:$0xff]
    %v4500 = vld [vmem:[%s4425 + $0x250] sm:$0xff]
    %v4501 = vld [vmem:[%s4425 + $0x258] sm:$0xff]
    %v4502 = vsel %vm4060, %v4411, 0
    %v4504 = vsel %vm4060, %v4420, 0
    %4506 = vmatprep.subr.mxu0 %v4457
    %4507 = vmatpush1.msra.mxu0 %v4456
    %4508 = vmatprep.subr.mxu0 %v4455
    %4509 = vmatpush1.msra.mxu0 %v4454
    %4510 = vmatprep.subr.mxu0 %v4453
    %4511 = vmatpush1.msra.mxu0 %v4452
    %4512 = vmatprep.subr.mxu0 %v4451
    %4513 = vmatpush1.msra.mxu0 %v4450
    %4514 = vmatprep.subr.mxu0 %v4449
    %4515 = vmatpush1.msra.mxu0 %v4448
    %4516 = vmatprep.subr.mxu0 %v4447
    %4517 = vmatpush1.msra.mxu0 %v4446
    %4518 = vmatprep.subr.mxu0 %v4445
    %4519 = vmatpush1.msra.mxu0 %v4444
    %4520 = vmatprep.subr.mxu0 %v4443
    %4521 = vmatpush1.msra.mxu0 %v4442
    %4522 = vmatprep.subr.mxu0 %v4441
    %4523 = vmatpush1.msra.mxu0 %v4440
    %4524 = vmatprep.subr.mxu0 %v4439
    %4525 = vmatpush1.msra.mxu0 %v4438
    %4526 = vmatprep.subr.mxu0 %v4437
    %4527 = vmatpush1.msra.mxu0 %v4436
    %4528 = vmatprep.subr.mxu0 %v4435
    %4529 = vmatpush1.msra.mxu0 %v4434
    %4530 = vmatprep.subr.mxu0 %v4433
    %4531 = vmatpush1.msra.mxu0 %v4432
    %4532 = vmatprep.subr.mxu0 %v4431
    %4533 = vmatpush1.msra.mxu0 %v4430
    %4534 = vmatprep.subr.mxu0 %v4429
    %4535 = vmatpush1.msra.mxu0 %v4428
    %4536 = vmatprep.subr.mxu0 %v4427
    %4537 = vmatpush1.msra.mxu0 %v4426
    %4538 = vmatprep.subr.mxu0 %v4489
    %4539 = vmatpush2.msra.mxu0 %v4488
    %4540 = vmatprep.subr.mxu0 %v4487
    %4541 = vmatpush2.msra.mxu0 %v4486
    %4542 = vmatprep.subr.mxu0 %v4485
    %4543 = vmatpush2.msra.mxu0 %v4484
    %4544 = vmatprep.subr.mxu0 %v4483
    %4545 = vmatpush2.msra.mxu0 %v4482
    %4546 = vmatprep.subr.mxu0 %v4481
    %4547 = vmatpush2.msra.mxu0 %v4480
    %4548 = vmatprep.subr.mxu0 %v4479
    %4549 = vmatpush2.msra.mxu0 %v4478
    %4550 = vmatprep.subr.mxu0 %v4477
    %4551 = vmatpush2.msra.mxu0 %v4476
    %4552 = vmatprep.subr.mxu0 %v4475
    %4553 = vmatpush2.msra.mxu0 %v4474
    %4554 = vmatprep.subr.mxu0 %v4473
    %4555 = vmatpush2.msra.mxu0 %v4472
    %4556 = vmatprep.subr.mxu0 %v4471
    %4557 = vmatpush2.msra.mxu0 %v4470
    %4558 = vmatprep.subr.mxu0 %v4469
    %4559 = vmatpush2.msra.mxu0 %v4468
    %4560 = vmatprep.subr.mxu0 %v4467
    %4561 = vmatpush2.msra.mxu0 %v4466
    %4562 = vmatprep.subr.mxu0 %v4465
    %4563 = vmatpush2.msra.mxu0 %v4464
    %4564 = vmatprep.subr.mxu0 %v4463
    %4565 = vmatpush2.msra.mxu0 %v4462
    %4566 = vmatprep.subr.mxu0 %v4461
    %4567 = vmatpush2.msra.mxu0 %v4460
    %4568 = vmatprep.subr.mxu0 %v4459
    %4569 = vmatpush2.msra.mxu0 %v4458
    %4570 = vmatprep.mubr.f32.mxu0 %v4408
    %4571 = vmatmul.mubr.f32.gmra.mxu0 %v4405
    %v4572 = vpop.f32.mrf.mxu0
    %v4573 = vadd.f32 0.0, %v4572
    %v4574 = vpop.f32.mrf.mxu0
    %v4575 = vadd.f32 0.0, %v4574
    %4576 = vmatprep.mubr.f32.mxu0 %v4417
    %4577 = vmatmul.mubr.f32.gmra.mxu0 %v4414
    %v4578 = vpop.f32.mrf.mxu0
    %v4579 = vadd.f32 0.0, %v4578
    %v4580 = vpop.f32.mrf.mxu0
    %v4581 = vadd.f32 0.0, %v4580
    %4582 = vdwg.mxu0
    %4583 = vmatprep.subr.mxu0 0.0
    %4584 = vmatpush1.msra.mxu0 0.0
    %4585 = vmatprep.subr.mxu0 0.0
    %4586 = vmatpush1.msra.mxu0 0.0
    %4587 = vmatprep.subr.mxu0 0.0
    %4588 = vmatpush1.msra.mxu0 0.0
    %4589 = vmatprep.subr.mxu0 0.0
    %4590 = vmatpush1.msra.mxu0 0.0
    %4591 = vmatprep.subr.mxu0 0.0
    %4592 = vmatpush1.msra.mxu0 0.0
    %4593 = vmatprep.subr.mxu0 0.0
    %4594 = vmatpush1.msra.mxu0 0.0
    %4595 = vmatprep.subr.mxu0 0.0
    %4596 = vmatpush1.msra.mxu0 0.0
    %4597 = vmatprep.subr.mxu0 0.0
    %4598 = vmatpush1.msra.mxu0 0.0
    %4599 = vmatprep.subr.mxu0 0.0
    %4600 = vmatpush1.msra.mxu0 0.0
    %4601 = vmatprep.subr.mxu0 0.0
    %4602 = vmatpush1.msra.mxu0 0.0
    %4603 = vmatprep.subr.mxu0 %v4501
    %4604 = vmatpush1.msra.mxu0 %v4500
    %4605 = vmatprep.subr.mxu0 %v4499
    %4606 = vmatpush1.msra.mxu0 %v4498
    %4607 = vmatprep.subr.mxu0 %v4497
    %4608 = vmatpush1.msra.mxu0 %v4496
    %4609 = vmatprep.subr.mxu0 %v4495
    %4610 = vmatpush1.msra.mxu0 %v4494
    %4611 = vmatprep.subr.mxu0 %v4493
    %4612 = vmatpush1.msra.mxu0 %v4492
    %4613 = vmatprep.subr.mxu0 %v4491
    %4614 = vmatpush1.msra.mxu0 %v4490
    %4615 = vmatprep.subr.mxu0 0.0
    %4616 = vmatpush2.msra.mxu0 0.0
    %4617 = vmatprep.subr.mxu0 0.0
    %4618 = vmatpush2.msra.mxu0 0.0
    %4619 = vmatprep.subr.mxu0 0.0
    %4620 = vmatpush2.msra.mxu0 0.0
    %4621 = vmatprep.subr.mxu0 0.0
    %4622 = vmatpush2.msra.mxu0 0.0
    %4623 = vmatprep.subr.mxu0 0.0
    %4624 = vmatpush2.msra.mxu0 0.0
    %4625 = vmatprep.subr.mxu0 0.0
    %4626 = vmatpush2.msra.mxu0 0.0
    %4627 = vmatprep.subr.mxu0 0.0
    %4628 = vmatpush2.msra.mxu0 0.0
    %4629 = vmatprep.subr.mxu0 0.0
    %4630 = vmatpush2.msra.mxu0 0.0
    %4631 = vmatprep.subr.mxu0 0.0
    %4632 = vmatpush2.msra.mxu0 0.0
    %4633 = vmatprep.subr.mxu0 0.0
    %4634 = vmatpush2.msra.mxu0 0.0
    %4635 = vmatprep.subr.mxu0 0.0
    %4636 = vmatpush2.msra.mxu0 0.0
    %4637 = vmatprep.subr.mxu0 0.0
    %4638 = vmatpush2.msra.mxu0 0.0
    %4639 = vmatprep.subr.mxu0 0.0
    %4640 = vmatpush2.msra.mxu0 0.0
    %4641 = vmatprep.subr.mxu0 0.0
    %4642 = vmatpush2.msra.mxu0 0.0
    %4643 = vmatprep.subr.mxu0 0.0
    %4644 = vmatpush2.msra.mxu0 0.0
    %4645 = vmatprep.subr.mxu0 0.0
    %4646 = vmatpush2.msra.mxu0 0.0
    %4647 = vmatprep.mubr.f32.mxu0 0.0
    %4648 = vmatmul.mubr.f32.gmra.mxu0 %v4502
    %v4649 = vpop.f32.mrf.mxu0
    %v4650 = vadd.f32 %v4573, %v4649
    %v4651 = vpop.f32.mrf.mxu0
    %v4652 = vadd.f32 %v4575, %v4651
    %4653 = vmatprep.mubr.f32.mxu0 0.0
    %4654 = vmatmul.mubr.f32.gmra.mxu0 %v4504
    %v4655 = vpop.f32.mrf.mxu0
    %v4656 = vadd.f32 %v4579, %v4655
    %v4657 = vpop.f32.mrf.mxu0
    %v4658 = vadd.f32 %v4581, %v4657
    %4659 = vdwg.mxu0
    %v4660 = vadd.f32 %v4369, %v4650
    %v4661 = vadd.f32 %v4371, %v4652
    %v4662 = vadd.f32 %v4375, %v4656
    %v4663 = vadd.f32 %v4377, %v4658
    %v4664 = vadd.f32 %v4660, %v4662
    %v4665 = vrot.slane %v4664, 4
    %v4666 = vadd.f32 %v4664, %v4665
    %v4667 = vrot.slane %v4666, 2
    %v4668 = vadd.f32 %v4666, %v4667
    %v4669 = vrot.slane %v4668, 1
    %v4670 = vadd.f32 %v4668, %v4669
    %v4671 = vadd.f32 %v4661, %v4663
    %v4672 = vrot.slane %v4671, 4
    %v4673 = vadd.f32 %v4671, %v4672
    %v4674 = vrot.slane %v4673, 2
    %v4675 = vadd.f32 %v4673, %v4674
    %v4676 = vrot.slane %v4675, 1
    %v4677 = vadd.f32 %v4675, %v4676
    %v4678 = vmul.f32 %v4660, %v4660
    %v4679 = vmul.f32 %v4661, %v4661
    %v4680 = vmul.f32 %v4662, %v4662
    %v4681 = vmul.f32 %v4663, %v4663
    %v4682 = vadd.f32 %v4678, %v4680
    %v4683 = vrot.slane %v4682, 4
    %v4684 = vadd.f32 %v4682, %v4683
    %v4685 = vrot.slane %v4684, 2
    %v4686 = vadd.f32 %v4684, %v4685
    %v4687 = vrot.slane %v4686, 1
    %v4688 = vadd.f32 %v4686, %v4687
    %v4689 = vadd.f32 %v4679, %v4681
    %v4690 = vrot.slane %v4689, 4
    %v4691 = vadd.f32 %v4689, %v4690
    %v4692 = vrot.slane %v4691, 2
    %v4693 = vadd.f32 %v4691, %v4692
    %v4694 = vrot.slane %v4693, 1
    %v4695 = vadd.f32 %v4693, %v4694
    %v4696 = vld [vmem:[%s8] sm:$0xff]
    %v4697 = vld [vmem:[%s8 + $0x8] sm:$0xff]
    %v4698 = vld [vmem:[%s8 + $0x10] sm:$0xff]
    %v4699 = vld [vmem:[%s8 + $0x18] sm:$0xff]
    %v4700 = vld [vmem:[%s8 + $0x20] sm:$0xff]
    %v4701 = vld [vmem:[%s8 + $0x28] sm:$0xff]
    %v4702 = vld [vmem:[%s8 + $0x30] sm:$0xff]
    %v4703 = vld [vmem:[%s8 + $0x38] sm:$0xff]
    %v4704 = vld [vmem:[%s8 + $0x40] sm:$0xff]
    %v4705 = vld [vmem:[%s8 + $0x48] sm:$0xff]
    %v4706 = vld [vmem:[%s8 + $0x50] sm:$0xff]
    %v4707 = vld [vmem:[%s8 + $0x58] sm:$0xff]
    %v4708 = vld [vmem:[%s8 + $0x60] sm:$0xff]
    %v4709 = vld [vmem:[%s8 + $0x68] sm:$0xff]
    %v4710 = vld [vmem:[%s8 + $0x70] sm:$0xff]
    %v4711 = vld [vmem:[%s8 + $0x78] sm:$0xff]
    %v4712 = vld [vmem:[%s8 + $0x80] sm:$0xff]
    %v4713 = vld [vmem:[%s8 + $0x88] sm:$0xff]
    %v4714 = vld [vmem:[%s8 + $0x90] sm:$0xff]
    %v4715 = vld [vmem:[%s8 + $0x98] sm:$0xff]
    %v4716 = vld [vmem:[%s8 + $0xa0] sm:$0xff]
    %v4717 = vld [vmem:[%s8 + $0xa8] sm:$0xff]
    %v4718 = vld [vmem:[%s8 + $0xb0] sm:$0xff]
    %v4719 = vld [vmem:[%s8 + $0xb8] sm:$0xff]
    %v4720 = vld [vmem:[%s8 + $0xc0] sm:$0xff]
    %v4721 = vld [vmem:[%s8 + $0xc8] sm:$0xff]
    %v4722 = vld [vmem:[%s8 + $0xd0] sm:$0xff]
    %v4723 = vld [vmem:[%s8 + $0xd8] sm:$0xff]
    %v4724 = vld [vmem:[%s8 + $0xe0] sm:$0xff]
    %v4725 = vld [vmem:[%s8 + $0xe8] sm:$0xff]
    %v4726 = vld [vmem:[%s8 + $0xf0] sm:$0xff]
    %v4727 = vld [vmem:[%s8 + $0xf8] sm:$0xff]
    %4728 = vmatprep.subr.mxu0 0.0
    %4729 = vmatpush1.msra.mxu0 %v4711
    %4730 = vmatprep.subr.mxu0 0.0
    %4731 = vmatpush1.msra.mxu0 %v4710
    %4732 = vmatprep.subr.mxu0 0.0
    %4733 = vmatpush1.msra.mxu0 %v4709
    %4734 = vmatprep.subr.mxu0 0.0
    %4735 = vmatpush1.msra.mxu0 %v4708
    %4736 = vmatprep.subr.mxu0 0.0
    %4737 = vmatpush1.msra.mxu0 %v4707
    %4738 = vmatprep.subr.mxu0 0.0
    %4739 = vmatpush1.msra.mxu0 %v4706
    %4740 = vmatprep.subr.mxu0 0.0
    %4741 = vmatpush1.msra.mxu0 %v4705
    %4742 = vmatprep.subr.mxu0 0.0
    %4743 = vmatpush1.msra.mxu0 %v4704
    %4744 = vmatprep.subr.mxu0 0.0
    %4745 = vmatpush1.msra.mxu0 %v4703
    %4746 = vmatprep.subr.mxu0 0.0
    %4747 = vmatpush1.msra.mxu0 %v4702
    %4748 = vmatprep.subr.mxu0 0.0
    %4749 = vmatpush1.msra.mxu0 %v4701
    %4750 = vmatprep.subr.mxu0 0.0
    %4751 = vmatpush1.msra.mxu0 %v4700
    %4752 = vmatprep.subr.mxu0 0.0
    %4753 = vmatpush1.msra.mxu0 %v4699
    %4754 = vmatprep.subr.mxu0 0.0
    %4755 = vmatpush1.msra.mxu0 %v4698
    %4756 = vmatprep.subr.mxu0 0.0
    %4757 = vmatpush1.msra.mxu0 %v4697
    %4758 = vmatprep.subr.mxu0 0.0
    %4759 = vmatpush1.msra.mxu0 %v4696
    %4760 = vmatprep.subr.mxu0 0.0
    %4761 = vmatpush2.msra.mxu0 %v4727
    %4762 = vmatprep.subr.mxu0 0.0
    %4763 = vmatpush2.msra.mxu0 %v4726
    %4764 = vmatprep.subr.mxu0 0.0
    %4765 = vmatpush2.msra.mxu0 %v4725
    %4766 = vmatprep.subr.mxu0 0.0
    %4767 = vmatpush2.msra.mxu0 %v4724
    %4768 = vmatprep.subr.mxu0 0.0
    %4769 = vmatpush2.msra.mxu0 %v4723
    %4770 = vmatprep.subr.mxu0 0.0
    %4771 = vmatpush2.msra.mxu0 %v4722
    %4772 = vmatprep.subr.mxu0 0.0
    %4773 = vmatpush2.msra.mxu0 %v4721
    %4774 = vmatprep.subr.mxu0 0.0
    %4775 = vmatpush2.msra.mxu0 %v4720
    %4776 = vmatprep.subr.mxu0 0.0
    %4777 = vmatpush2.msra.mxu0 %v4719
    %4778 = vmatprep.subr.mxu0 0.0
    %4779 = vmatpush2.msra.mxu0 %v4718
    %4780 = vmatprep.subr.mxu0 0.0
    %4781 = vmatpush2.msra.mxu0 %v4717
    %4782 = vmatprep.subr.mxu0 0.0
    %4783 = vmatpush2.msra.mxu0 %v4716
    %4784 = vmatprep.subr.mxu0 0.0
    %4785 = vmatpush2.msra.mxu0 %v4715
    %4786 = vmatprep.subr.mxu0 0.0
    %4787 = vmatpush2.msra.mxu0 %v4714
    %4788 = vmatprep.subr.mxu0 0.0
    %4789 = vmatpush2.msra.mxu0 %v4713
    %4790 = vmatprep.subr.mxu0 0.0
    %4791 = vmatpush2.msra.mxu0 %v4712
    %4792 = vmatprep.mubr.f32.mxu0 %v4677
    %4793 = vmatmul.mubr.f32.gmra.mxu0 %v4670
    %v4794 = vpop.f32.mrf.mxu0
    %v4795 = vadd.f32 0.0, %v4794
    %v4796 = vpop.f32.mrf.mxu0
    %4797 = vdwg.mxu0
    %v4798 = vmul.f32 %v4795, 0.0078125
    %4799 = vmatprep.subr.mxu0 0.0
    %4800 = vmatpush1.msra.mxu0 %v4711
    %4801 = vmatprep.subr.mxu0 0.0
    %4802 = vmatpush1.msra.mxu0 %v4710
    %4803 = vmatprep.subr.mxu0 0.0
    %4804 = vmatpush1.msra.mxu0 %v4709
    %4805 = vmatprep.subr.mxu0 0.0
    %4806 = vmatpush1.msra.mxu0 %v4708
    %4807 = vmatprep.subr.mxu0 0.0
    %4808 = vmatpush1.msra.mxu0 %v4707
    %4809 = vmatprep.subr.mxu0 0.0
    %4810 = vmatpush1.msra.mxu0 %v4706
    %4811 = vmatprep.subr.mxu0 0.0
    %4812 = vmatpush1.msra.mxu0 %v4705
    %4813 = vmatprep.subr.mxu0 0.0
    %4814 = vmatpush1.msra.mxu0 %v4704
    %4815 = vmatprep.subr.mxu0 0.0
    %4816 = vmatpush1.msra.mxu0 %v4703
    %4817 = vmatprep.subr.mxu0 0.0
    %4818 = vmatpush1.msra.mxu0 %v4702
    %4819 = vmatprep.subr.mxu0 0.0
    %4820 = vmatpush1.msra.mxu0 %v4701
    %4821 = vmatprep.subr.mxu0 0.0
    %4822 = vmatpush1.msra.mxu0 %v4700
    %4823 = vmatprep.subr.mxu0 0.0
    %4824 = vmatpush1.msra.mxu0 %v4699
    %4825 = vmatprep.subr.mxu0 0.0
    %4826 = vmatpush1.msra.mxu0 %v4698
    %4827 = vmatprep.subr.mxu0 0.0
    %4828 = vmatpush1.msra.mxu0 %v4697
    %4829 = vmatprep.subr.mxu0 0.0
    %4830 = vmatpush1.msra.mxu0 %v4696
    %4831 = vmatprep.subr.mxu0 0.0
    %4832 = vmatpush2.msra.mxu0 %v4727
    %4833 = vmatprep.subr.mxu0 0.0
    %4834 = vmatpush2.msra.mxu0 %v4726
    %4835 = vmatprep.subr.mxu0 0.0
    %4836 = vmatpush2.msra.mxu0 %v4725
    %4837 = vmatprep.subr.mxu0 0.0
    %4838 = vmatpush2.msra.mxu0 %v4724
    %4839 = vmatprep.subr.mxu0 0.0
    %4840 = vmatpush2.msra.mxu0 %v4723
    %4841 = vmatprep.subr.mxu0 0.0
    %4842 = vmatpush2.msra.mxu0 %v4722
    %4843 = vmatprep.subr.mxu0 0.0
    %4844 = vmatpush2.msra.mxu0 %v4721
    %4845 = vmatprep.subr.mxu0 0.0
    %4846 = vmatpush2.msra.mxu0 %v4720
    %4847 = vmatprep.subr.mxu0 0.0
    %4848 = vmatpush2.msra.mxu0 %v4719
    %4849 = vmatprep.subr.mxu0 0.0
    %4850 = vmatpush2.msra.mxu0 %v4718
    %4851 = vmatprep.subr.mxu0 0.0
    %4852 = vmatpush2.msra.mxu0 %v4717
    %4853 = vmatprep.subr.mxu0 0.0
    %4854 = vmatpush2.msra.mxu0 %v4716
    %4855 = vmatprep.subr.mxu0 0.0
    %4856 = vmatpush2.msra.mxu0 %v4715
    %4857 = vmatprep.subr.mxu0 0.0
    %4858 = vmatpush2.msra.mxu0 %v4714
    %4859 = vmatprep.subr.mxu0 0.0
    %4860 = vmatpush2.msra.mxu0 %v4713
    %4861 = vmatprep.subr.mxu0 0.0
    %4862 = vmatpush2.msra.mxu0 %v4712
    %4863 = vmatprep.mubr.f32.mxu0 %v4695
    %4864 = vmatmul.mubr.f32.gmra.mxu0 %v4688
    %v4865 = vpop.f32.mrf.mxu0
    %v4866 = vadd.f32 0.0, %v4865
    %v4867 = vpop.f32.mrf.mxu0
    %4868 = vdwg.mxu0
    %v4869 = vmul.f32 %v4866, 0.0078125
    %v4870 = vmul.f32 %v4798, %v4798
    %v4871 = vsub.f32 %v4869, %v4870
    %v4872 = vld [vmem:[%s14] sm:$0x1]
    %v4873 = vadd.f32 %v4871, 1e-05
    %v4874 = vrsqrt.pop %v4873
    %v4875 = vmul.f32 %v4872, %v4874
    %v4876 = vld [vmem:[%s15] sm:$0x1]
    %v4877 = vmul.f32 %v4798, %v4875
    %v4878 = vsub.f32 %v4876, %v4877
    %v4879 = vld [vmem:[%s9] sm:$0xff]
    %v4880 = vld [vmem:[%s9 + $0x8] sm:$0xff]
    %v4881 = vld [vmem:[%s9 + $0x10] sm:$0xff]
    %v4882 = vld [vmem:[%s9 + $0x18] sm:$0xff]
    %v4883 = vld [vmem:[%s9 + $0x20] sm:$0xff]
    %v4884 = vld [vmem:[%s9 + $0x28] sm:$0xff]
    %v4885 = vld [vmem:[%s9 + $0x30] sm:$0xff]
    %v4886 = vld [vmem:[%s9 + $0x38] sm:$0xff]
    %v4888 = vsel %vm3354, %v4875, 0
    %4890 = vmatprep.subr.mxu0 0.0
    %4891 = vmatpush1.msra.mxu0 0.0
    %4892 = vmatprep.subr.mxu0 0.0
    %4893 = vmatpush1.msra.mxu0 0.0
    %4894 = vmatprep.subr.mxu0 0.0
    %4895 = vmatpush1.msra.mxu0 0.0
    %4896 = vmatprep.subr.mxu0 0.0
    %4897 = vmatpush1.msra.mxu0 0.0
    %4898 = vmatprep.subr.mxu0 0.0
    %4899 = vmatpush1.msra.mxu0 0.0
    %4900 = vmatprep.subr.mxu0 0.0
    %4901 = vmatpush1.msra.mxu0 0.0
    %4902 = vmatprep.subr.mxu0 0.0
    %4903 = vmatpush1.msra.mxu0 0.0
    %4904 = vmatprep.subr.mxu0 0.0
    %4905 = vmatpush1.msra.mxu0 0.0
    %4906 = vmatprep.subr.mxu0 0.0
    %4907 = vmatpush1.msra.mxu0 0.0
    %4908 = vmatprep.subr.mxu0 0.0
    %4909 = vmatpush1.msra.mxu0 0.0
    %4910 = vmatprep.subr.mxu0 0.0
    %4911 = vmatpush1.msra.mxu0 0.0
    %4912 = vmatprep.subr.mxu0 0.0
    %4913 = vmatpush1.msra.mxu0 0.0
    %4914 = vmatprep.subr.mxu0 %v4886
    %4915 = vmatpush1.msra.mxu0 %v4885
    %4916 = vmatprep.subr.mxu0 %v4884
    %4917 = vmatpush1.msra.mxu0 %v4883
    %4918 = vmatprep.subr.mxu0 %v4882
    %4919 = vmatpush1.msra.mxu0 %v4881
    %4920 = vmatprep.subr.mxu0 %v4880
    %4921 = vmatpush1.msra.mxu0 %v4879
    %4922 = vmatprep.subr.mxu0 0.0
    %4923 = vmatpush2.msra.mxu0 0.0
    %4924 = vmatprep.subr.mxu0 0.0
    %4925 = vmatpush2.msra.mxu0 0.0
    %4926 = vmatprep.subr.mxu0 0.0
    %4927 = vmatpush2.msra.mxu0 0.0
    %4928 = vmatprep.subr.mxu0 0.0
    %4929 = vmatpush2.msra.mxu0 0.0
    %4930 = vmatprep.subr.mxu0 0.0
    %4931 = vmatpush2.msra.mxu0 0.0
    %4932 = vmatprep.subr.mxu0 0.0
    %4933 = vmatpush2.msra.mxu0 0.0
    %4934 = vmatprep.subr.mxu0 0.0
    %4935 = vmatpush2.msra.mxu0 0.0
    %4936 = vmatprep.subr.mxu0 0.0
    %4937 = vmatpush2.msra.mxu0 0.0
    %4938 = vmatprep.subr.mxu0 0.0
    %4939 = vmatpush2.msra.mxu0 0.0
    %4940 = vmatprep.subr.mxu0 0.0
    %4941 = vmatpush2.msra.mxu0 0.0
    %4942 = vmatprep.subr.mxu0 0.0
    %4943 = vmatpush2.msra.mxu0 0.0
    %4944 = vmatprep.subr.mxu0 0.0
    %4945 = vmatpush2.msra.mxu0 0.0
    %4946 = vmatprep.subr.mxu0 0.0
    %4947 = vmatpush2.msra.mxu0 0.0
    %4948 = vmatprep.subr.mxu0 0.0
    %4949 = vmatpush2.msra.mxu0 0.0
    %4950 = vmatprep.subr.mxu0 0.0
    %4951 = vmatpush2.msra.mxu0 0.0
    %4952 = vmatprep.subr.mxu0 0.0
    %4953 = vmatpush2.msra.mxu0 0.0
    %4954 = vmatprep.mubr.f32.mxu0 0.0
    %4955 = vmatmul.mubr.f32.gmra.mxu0 %v4888
    %v4956 = vpop.f32.mrf.mxu0
    %v4957 = vadd.f32 0.0, %v4956
    %v4958 = vpop.f32.mrf.mxu0
    %v4959 = vadd.f32 0.0, %v4958
    %4960 = vdwg.mxu0
    %v4962 = vsel %vm3354, %v4878, 0
    %4964 = vmatprep.subr.mxu0 0.0
    %4965 = vmatpush1.msra.mxu0 0.0
    %4966 = vmatprep.subr.mxu0 0.0
    %4967 = vmatpush1.msra.mxu0 0.0
    %4968 = vmatprep.subr.mxu0 0.0
    %4969 = vmatpush1.msra.mxu0 0.0
    %4970 = vmatprep.subr.mxu0 0.0
    %4971 = vmatpush1.msra.mxu0 0.0
    %4972 = vmatprep.subr.mxu0 0.0
    %4973 = vmatpush1.msra.mxu0 0.0
    %4974 = vmatprep.subr.mxu0 0.0
    %4975 = vmatpush1.msra.mxu0 0.0
    %4976 = vmatprep.subr.mxu0 0.0
    %4977 = vmatpush1.msra.mxu0 0.0
    %4978 = vmatprep.subr.mxu0 0.0
    %4979 = vmatpush1.msra.mxu0 0.0
    %4980 = vmatprep.subr.mxu0 0.0
    %4981 = vmatpush1.msra.mxu0 0.0
    %4982 = vmatprep.subr.mxu0 0.0
    %4983 = vmatpush1.msra.mxu0 0.0
    %4984 = vmatprep.subr.mxu0 0.0
    %4985 = vmatpush1.msra.mxu0 0.0
    %4986 = vmatprep.subr.mxu0 0.0
    %4987 = vmatpush1.msra.mxu0 0.0
    %4988 = vmatprep.subr.mxu0 %v4886
    %4989 = vmatpush1.msra.mxu0 %v4885
    %4990 = vmatprep.subr.mxu0 %v4884
    %4991 = vmatpush1.msra.mxu0 %v4883
    %4992 = vmatprep.subr.mxu0 %v4882
    %4993 = vmatpush1.msra.mxu0 %v4881
    %4994 = vmatprep.subr.mxu0 %v4880
    %4995 = vmatpush1.msra.mxu0 %v4879
    %4996 = vmatprep.subr.mxu0 0.0
    %4997 = vmatpush2.msra.mxu0 0.0
    %4998 = vmatprep.subr.mxu0 0.0
    %4999 = vmatpush2.msra.mxu0 0.0
    %5000 = vmatprep.subr.mxu0 0.0
    %5001 = vmatpush2.msra.mxu0 0.0
    %5002 = vmatprep.subr.mxu0 0.0
    %5003 = vmatpush2.msra.mxu0 0.0
    %5004 = vmatprep.subr.mxu0 0.0
    %5005 = vmatpush2.msra.mxu0 0.0
    %5006 = vmatprep.subr.mxu0 0.0
    %5007 = vmatpush2.msra.mxu0 0.0
    %5008 = vmatprep.subr.mxu0 0.0
    %5009 = vmatpush2.msra.mxu0 0.0
    %5010 = vmatprep.subr.mxu0 0.0
    %5011 = vmatpush2.msra.mxu0 0.0
    %5012 = vmatprep.subr.mxu0 0.0
    %5013 = vmatpush2.msra.mxu0 0.0
    %5014 = vmatprep.subr.mxu0 0.0
    %5015 = vmatpush2.msra.mxu0 0.0
    %5016 = vmatprep.subr.mxu0 0.0
    %5017 = vmatpush2.msra.mxu0 0.0
    %5018 = vmatprep.subr.mxu0 0.0
    %5019 = vmatpush2.msra.mxu0 0.0
    %5020 = vmatprep.subr.mxu0 0.0
    %5021 = vmatpush2.msra.mxu0 0.0
    %5022 = vmatprep.subr.mxu0 0.0
    %5023 = vmatpush2.msra.mxu0 0.0
    %5024 = vmatprep.subr.mxu0 0.0
    %5025 = vmatpush2.msra.mxu0 0.0
    %5026 = vmatprep.subr.mxu0 0.0
    %5027 = vmatpush2.msra.mxu0 0.0
    %5028 = vmatprep.mubr.f32.mxu0 0.0
    %5029 = vmatmul.mubr.f32.gmra.mxu0 %v4962
    %v5030 = vpop.f32.mrf.mxu0
    %v5031 = vadd.f32 0.0, %v5030
    %v5032 = vpop.f32.mrf.mxu0
    %v5033 = vadd.f32 0.0, %v5032
    %5034 = vdwg.mxu0
    %v5035 = vlaneseq
    %v5036 = vshrl.u32 %v5035, 7
    %v5037 = vsub.s32 0, %v5036
    %v5038 = vrot.slane %v4957, %v5037
    %v5039 = vlaneseq
    %v5040 = vshrl.u32 %v5039, 7
    %v5041 = vsub.s32 0, %v5040
    %v5042 = vrot.slane %v4959, %v5041
    %v5043 = vmul.f32 %v4660, %v5038
    %v5044 = vmul.f32 %v4661, %v5042
    %v5045 = vmul.f32 %v4662, %v5038
    %v5046 = vmul.f32 %v4663, %v5042
    %v5047 = vlaneseq
    %v5048 = vshrl.u32 %v5047, 7
    %v5049 = vsub.s32 0, %v5048
    %v5050 = vrot.slane %v5031, %v5049
    %v5051 = vlaneseq
    %v5052 = vshrl.u32 %v5051, 7
    %v5053 = vsub.s32 0, %v5052
    %v5054 = vrot.slane %v5033, %v5053
    %v5055 = vadd.f32 %v5043, %v5050
    %v5056 = vadd.f32 %v5044, %v5054
    %v5057 = vadd.f32 %v5045, %v5050
    %v5058 = vadd.f32 %v5046, %v5054
    %v5059 = vmax.f32 %v5055, 0.0
    %v5060 = vmax.f32 %v5056, 0.0
    %v5061 = vmax.f32 %v5057, 0.0
    %v5062 = vmax.f32 %v5058, 0.0
    %v5067 = vrot.slane %v5059, 1
    %v5068 = vrot.slane %v5060, 1
    %v5069 = vrot.slane %v5061, 1
    %v5070 = vrot.slane %v5062, 1
    %v5075 = vadd.f32 %v5059, %v5067
    %v5076 = vadd.f32 %v5060, %v5068
    %v5077 = vadd.f32 %v5061, %v5069
    %v5078 = vadd.f32 %v5062, %v5070
    %v5079 = vrot.slane %v5059, 2
    %v5080 = vrot.slane %v5060, 2
    %v5081 = vrot.slane %v5061, 2
    %v5082 = vrot.slane %v5062, 2
    %v5087 = vadd.f32 %v5075, %v5079
    %v5088 = vadd.f32 %v5076, %v5080
    %v5089 = vadd.f32 %v5077, %v5081
    %v5090 = vadd.f32 %v5078, %v5082
    %v5091 = vrot.slane %v5059, 3
    %v5092 = vrot.slane %v5060, 3
    %v5093 = vrot.slane %v5061, 3
    %v5094 = vrot.slane %v5062, 3
    %v5099 = vadd.f32 %v5087, %v5091
    %v5100 = vadd.f32 %v5088, %v5092
    %v5101 = vadd.f32 %v5089, %v5093
    %v5102 = vadd.f32 %v5090, %v5094
    %v5103 = vrot.slane %v5059, 4
    %v5104 = vrot.slane %v5060, 4
    %v5105 = vrot.slane %v5061, 4
    %v5106 = vrot.slane %v5062, 4
    %v5111 = vadd.f32 %v5099, %v5103
    %v5112 = vadd.f32 %v5100, %v5104
    %v5113 = vadd.f32 %v5101, %v5105
    %v5114 = vadd.f32 %v5102, %v5106
    %v5115 = vrot.slane %v5059, 5
    %v5116 = vrot.slane %v5060, 5
    %v5117 = vrot.slane %v5061, 5
    %v5118 = vrot.slane %v5062, 5
    %v5123 = vadd.f32 %v5111, %v5115
    %v5124 = vadd.f32 %v5112, %v5116
    %v5125 = vadd.f32 %v5113, %v5117
    %v5126 = vadd.f32 %v5114, %v5118
    %v5127 = vrot.slane %v5059, 6
    %v5128 = vrot.slane %v5060, 6
    %v5129 = vrot.slane %v5061, 6
    %v5130 = vrot.slane %v5062, 6
    %v5135 = vadd.f32 %v5123, %v5127
    %v5136 = vadd.f32 %v5124, %v5128
    %v5137 = vadd.f32 %v5125, %v5129
    %v5138 = vadd.f32 %v5126, %v5130
    %v5139 = vrot.slane %v5059, 7
    %v5140 = vrot.slane %v5060, 7
    %v5141 = vrot.slane %v5061, 7
    %v5142 = vrot.slane %v5062, 7
    %v5147 = vadd.f32 %v5135, %v5139
    %v5148 = vadd.f32 %v5136, %v5140
    %v5149 = vadd.f32 %v5137, %v5141
    %v5150 = vadd.f32 %v5138, %v5142
    %v5155 = vrot.slane %v5149, 7
    %v5156 = vsel %vm1885, %v5155, %v5147
    %v5157 = vrot.slane %v5150, 7
    %v5158 = vsel %vm1885, %v5157, %v5148
    %5161 = vmatprep.subr.mxu0 0.0
    %5162 = vmatpush1.msra.mxu0 %v4711
    %5163 = vmatprep.subr.mxu0 0.0
    %5164 = vmatpush1.msra.mxu0 %v4710
    %5165 = vmatprep.subr.mxu0 0.0
    %5166 = vmatpush1.msra.mxu0 %v4709
    %5167 = vmatprep.subr.mxu0 0.0
    %5168 = vmatpush1.msra.mxu0 %v4708
    %5169 = vmatprep.subr.mxu0 0.0
    %5170 = vmatpush1.msra.mxu0 %v4707
    %5171 = vmatprep.subr.mxu0 0.0
    %5172 = vmatpush1.msra.mxu0 %v4706
    %5173 = vmatprep.subr.mxu0 0.0
    %5174 = vmatpush1.msra.mxu0 %v4705
    %5175 = vmatprep.subr.mxu0 0.0
    %5176 = vmatpush1.msra.mxu0 %v4704
    %5177 = vmatprep.subr.mxu0 0.0
    %5178 = vmatpush1.msra.mxu0 %v4703
    %5179 = vmatprep.subr.mxu0 0.0
    %5180 = vmatpush1.msra.mxu0 %v4702
    %5181 = vmatprep.subr.mxu0 0.0
    %5182 = vmatpush1.msra.mxu0 %v4701
    %5183 = vmatprep.subr.mxu0 0.0
    %5184 = vmatpush1.msra.mxu0 %v4700
    %5185 = vmatprep.subr.mxu0 0.0
    %5186 = vmatpush1.msra.mxu0 %v4699
    %5187 = vmatprep.subr.mxu0 0.0
    %5188 = vmatpush1.msra.mxu0 %v4698
    %5189 = vmatprep.subr.mxu0 0.0
    %5190 = vmatpush1.msra.mxu0 %v4697
    %5191 = vmatprep.subr.mxu0 0.0
    %5192 = vmatpush1.msra.mxu0 %v4696
    %5193 = vmatprep.subr.mxu0 0.0
    %5194 = vmatpush2.msra.mxu0 %v4727
    %5195 = vmatprep.subr.mxu0 0.0
    %5196 = vmatpush2.msra.mxu0 %v4726
    %5197 = vmatprep.subr.mxu0 0.0
    %5198 = vmatpush2.msra.mxu0 %v4725
    %5199 = vmatprep.subr.mxu0 0.0
    %5200 = vmatpush2.msra.mxu0 %v4724
    %5201 = vmatprep.subr.mxu0 0.0
    %5202 = vmatpush2.msra.mxu0 %v4723
    %5203 = vmatprep.subr.mxu0 0.0
    %5204 = vmatpush2.msra.mxu0 %v4722
    %5205 = vmatprep.subr.mxu0 0.0
    %5206 = vmatpush2.msra.mxu0 %v4721
    %5207 = vmatprep.subr.mxu0 0.0
    %5208 = vmatpush2.msra.mxu0 %v4720
    %5209 = vmatprep.subr.mxu0 0.0
    %5210 = vmatpush2.msra.mxu0 %v4719
    %5211 = vmatprep.subr.mxu0 0.0
    %5212 = vmatpush2.msra.mxu0 %v4718
    %5213 = vmatprep.subr.mxu0 0.0
    %5214 = vmatpush2.msra.mxu0 %v4717
    %5215 = vmatprep.subr.mxu0 0.0
    %5216 = vmatpush2.msra.mxu0 %v4716
    %5217 = vmatprep.subr.mxu0 0.0
    %5218 = vmatpush2.msra.mxu0 %v4715
    %5219 = vmatprep.subr.mxu0 0.0
    %5220 = vmatpush2.msra.mxu0 %v4714
    %5221 = vmatprep.subr.mxu0 0.0
    %5222 = vmatpush2.msra.mxu0 %v4713
    %5223 = vmatprep.subr.mxu0 0.0
    %5224 = vmatpush2.msra.mxu0 %v4712
    %5225 = vmatprep.mubr.f32.mxu0 %v5158
    %5226 = vmatmul.mubr.f32.gmra.mxu0 %v5156
    %v5227 = vpop.f32.mrf.mxu0
    %v5228 = vadd.f32 0.0, %v5227
    %v5229 = vpop.f32.mrf.mxu0
    %5230 = vdwg.mxu0
    %v5231 = vmul.f32 %v5228, 0.015625
    %v5232 = vld [vmem:[%s16] sm:$0xff]
    %v5233 = vld [vmem:[%s16 + $0x8] sm:$0xff]
    %v5234 = vld [vmem:[%s16 + $0x10] sm:$0xff]
    %v5235 = vld [vmem:[%s16 + $0x18] sm:$0xff]
    %v5236 = vld [vmem:[%s17] sm:$0x1]
    %v5238 = vlaneseq
    %v5239 = vshrl.u32 %v5238, 7
    %v5240 = vsub.s32 0, %v5239
    %v5241 = vrot.slane %v5236, %v5240
    %v5244 = vsel %vm3354, %v5231, 0
    %5246 = vmatprep.subr.mxu0 0.0
    %5247 = vmatpush1.msra.mxu0 0.0
    %5248 = vmatprep.subr.mxu0 0.0
    %5249 = vmatpush1.msra.mxu0 0.0
    %5250 = vmatprep.subr.mxu0 0.0
    %5251 = vmatpush1.msra.mxu0 0.0
    %5252 = vmatprep.subr.mxu0 0.0
    %5253 = vmatpush1.msra.mxu0 0.0
    %5254 = vmatprep.subr.mxu0 0.0
    %5255 = vmatpush1.msra.mxu0 0.0
    %5256 = vmatprep.subr.mxu0 0.0
    %5257 = vmatpush1.msra.mxu0 0.0
    %5258 = vmatprep.subr.mxu0 0.0
    %5259 = vmatpush1.msra.mxu0 0.0
    %5260 = vmatprep.subr.mxu0 0.0
    %5261 = vmatpush1.msra.mxu0 0.0
    %5262 = vmatprep.subr.mxu0 0.0
    %5263 = vmatpush1.msra.mxu0 0.0
    %5264 = vmatprep.subr.mxu0 0.0
    %5265 = vmatpush1.msra.mxu0 0.0
    %5266 = vmatprep.subr.mxu0 0.0
    %5267 = vmatpush1.msra.mxu0 0.0
    %5268 = vmatprep.subr.mxu0 0.0
    %5269 = vmatpush1.msra.mxu0 0.0
    %5270 = vmatprep.subr.mxu0 0.0
    %5271 = vmatpush1.msra.mxu0 %v5235
    %5272 = vmatprep.subr.mxu0 0.0
    %5273 = vmatpush1.msra.mxu0 %v5234
    %5274 = vmatprep.subr.mxu0 0.0
    %5275 = vmatpush1.msra.mxu0 %v5233
    %5276 = vmatprep.subr.mxu0 0.0
    %5277 = vmatpush1.msra.mxu0 %v5232
    %5278 = vmatprep.subr.mxu0 0.0
    %5279 = vmatpush2.msra.mxu0 0.0
    %5280 = vmatprep.subr.mxu0 0.0
    %5281 = vmatpush2.msra.mxu0 0.0
    %5282 = vmatprep.subr.mxu0 0.0
    %5283 = vmatpush2.msra.mxu0 0.0
    %5284 = vmatprep.subr.mxu0 0.0
    %5285 = vmatpush2.msra.mxu0 0.0
    %5286 = vmatprep.subr.mxu0 0.0
    %5287 = vmatpush2.msra.mxu0 0.0
    %5288 = vmatprep.subr.mxu0 0.0
    %5289 = vmatpush2.msra.mxu0 0.0
    %5290 = vmatprep.subr.mxu0 0.0
    %5291 = vmatpush2.msra.mxu0 0.0
    %5292 = vmatprep.subr.mxu0 0.0
    %5293 = vmatpush2.msra.mxu0 0.0
    %5294 = vmatprep.subr.mxu0 0.0
    %5295 = vmatpush2.msra.mxu0 0.0
    %5296 = vmatprep.subr.mxu0 0.0
    %5297 = vmatpush2.msra.mxu0 0.0
    %5298 = vmatprep.subr.mxu0 0.0
    %5299 = vmatpush2.msra.mxu0 0.0
    %5300 = vmatprep.subr.mxu0 0.0
    %5301 = vmatpush2.msra.mxu0 0.0
    %5302 = vmatprep.subr.mxu0 0.0
    %5303 = vmatpush2.msra.mxu0 0.0
    %5304 = vmatprep.subr.mxu0 0.0
    %5305 = vmatpush2.msra.mxu0 0.0
    %5306 = vmatprep.subr.mxu0 0.0
    %5307 = vmatpush2.msra.mxu0 0.0
    %5308 = vmatprep.subr.mxu0 0.0
    %5309 = vmatpush2.msra.mxu0 0.0
    %5310 = vmatprep.mubr.f32.mxu0 0.0
    %5311 = vmatmul.mubr.f32.gmra.mxu0 %v5244
    %v5312 = vpop.f32.mrf.mxu0
    %v5313 = vadd.f32 %v5241, %v5312
    %v5314 = vpop.f32.mrf.mxu0
    %5315 = vdwg.mxu0
    %vm5316 = vcmask 1041408
    %v5317 = vsel %vm5316, %v5313, -inf
    %5318 = vmax.xlane.f32.xlu0 %v5317
    %v5319 = vpop.xlane.xlu0 %5318
    %v5320 = vsub.f32 %v5313, %v5319
    %v5321 = vmul.f32 %v5320, 1.442695
    %v5322 = vpow.pop %v5321
    %v5323 = vsel %vm5316, %v5322, 0.0
    %5324 = vadd.xlane.f32.xlu0 %v5323
    %v5325 = vpop.xlane.xlu0 %5324
    %v5326 = vlog2.pop %v5325
    %v5327 = vmul.f32 %v5326, 0.6931472
    %v5328 = vsub.f32 %v5320, %v5327
    %5329 = vst [vmem:[#allocation4] sm:$0x3] %v5328
    // Predicated region
    $region74: #{mixed_net_forward.1} parent=1 // pred_check
      _
    $region75: #{mixed_net_forward.1} parent=1 // pred_check_branch
      %5331 = sbr.rel (0) target = $region77
    $region76: #{mixed_net_forward.1} parent=1 // pred_region
      %s5333 = ssub.s32 32, 32
      %5334 = vsyncadd [#allocation5], %s5333
      %s5336 = sshll.u32 [#allocation4], 4
      %s5337 = int_to_ptr.vmem [resolvable:$true] %s5336
      %5339 = dma.vmem_to_hbm [thread:$0]  %s5337, 32, %s18, [#allocation5]
    $region77: #{mixed_net_forward.1} parent=1 // pred_fallthru
      _
    // Predicated region
    $region78: #{mixed_net_forward.1} parent=1 // pred_check
      _
    $region79: #{mixed_net_forward.1} parent=1 // pred_check_branch
      %5341 = sbr.rel (0) target = $region81
    $region80: #{mixed_net_forward.1} parent=1 // pred_region
      %5342 = dma.done [#allocation5], 32
    $region81: #{mixed_net_forward.1} parent=1 // pred_fallthru
      _
    %5343 = vsyncpa [#allocation5], 1

</llo_original>
